<compile_context>
chip_gen: v7x
topology: tpu7x:2x2x1
jax: 0.10.0
libtpu: 0.0.40
codegen_flags: <defaults>
</compile_context>

<pallas_src>
import functools

import jax
import jax.numpy as jnp
from jax.experimental import pallas as pl
from jax.experimental.pallas import tpu as pltpu


# ----------------------------------------------------------- pass 1: BN stats --

def _bn_stats_kernel(x_ref, g_ref, b_ref, scale_ref, shift_ref,
                     sum_acc, sq_acc, *, count, eps):
    """Stream x once; accumulate per-channel sum / sum-of-squares (f32).

    x_ref : (1, C, Ht, 2W)  one image / row-tile block (rows 2i,2i+1 are the two
                            contiguous width-W lane slabs of the last axis)
    g_ref, b_ref : (C, 1)   BN gamma / beta
    scale_ref, shift_ref : (C, 1) f32 outputs (written once, at the last step)
    sum_acc, sq_acc : (C, 2W) f32 persistent VMEM accumulators
    """
    first = (pl.program_id(0) == 0) & (pl.program_id(1) == 0)

    @pl.when(first)
    def _():
        sum_acc[...] = jnp.zeros_like(sum_acc)
        sq_acc[...] = jnp.zeros_like(sq_acc)

    ht = x_ref.shape[2]
    for i in range(ht):                                   # static unroll, VPU adds only
        row = x_ref[0, :, i, :].astype(jnp.float32)       # (C, 2W)
        sum_acc[...] += row
        sq_acc[...] += row * row

    last = ((pl.program_id(0) == pl.num_programs(0) - 1)
            & (pl.program_id(1) == pl.num_programs(1) - 1))

    @pl.when(last)
    def _():
        inv_count = 1.0 / count
        mean = jnp.sum(sum_acc[...], axis=-1, keepdims=True) * inv_count   # (C,1)
        ex2 = jnp.sum(sq_acc[...], axis=-1, keepdims=True) * inv_count
        var = jnp.maximum(ex2 - mean * mean, 0.0)         # biased (training-mode BN)
        scale = g_ref[...] * jax.lax.rsqrt(var + eps)
        scale_ref[...] = scale
        shift_ref[...] = b_ref[...] - mean * scale


# -------------------------------------- pass 2: BN + ReLU + 2x2 pool + 1x1 conv --

def _fused_kernel(x_ref, scale_ref, shift_ref, w_ref, sel_ref, o_ref, *, w_in):
    """One (image, pooled-row-tile) block; processes one pooled row at a time.

    x_ref  : (1, C, Ht, 2W)   NCHW block via the free (Ho, 2W) reshape
    scale_ref, shift_ref : (C, 1) f32 BN folded scale / shift
    w_ref  : (Cout, C) f32    1x1 conv weight
    sel_ref: (W, Wo) f32      W-pair selection matrix (0.25 pool scale folded in)
    o_ref  : (1, Cout, Ht, Wo) NCHW output block
    """
    s = scale_ref[...]                                    # (C, 1)
    b = shift_ref[...]
    w = w_ref[...]                                        # (Cout, C)
    sel = sel_ref[...]                                    # (W, Wo)
    ht = o_ref.shape[2]
    for i in range(ht):                                   # static unroll, iters independent
        row = x_ref[0, :, i, :]                           # (C, 2W): rows 2i and 2i+1
        x0 = row[:, :w_in]                                # H-tap 0   (C, W)
        x1 = row[:, w_in:]                                # H-tap 1   (C, W)
        y = (jnp.maximum(x0 * s + b, 0.0)                 # BN + ReLU (f32)
             + jnp.maximum(x1 * s + b, 0.0))              # H-direction pool (slab add)
        p = jnp.dot(y, sel, preferred_element_type=jnp.float32)   # (C, Wo) W-pool
        o = jnp.dot(w, p, preferred_element_type=jnp.float32)     # (Cout, Wo) 1x1 conv
        o_ref[0, :, i, :] = o.astype(o_ref.dtype)


# ------------------------------------------------------------------- wrapper --

def transition_forward(x_nchw, gamma, beta, conv_w, *, eps=1e-5, rows_per_block=8):
    """x_nchw: (N,C,H,W); conv_w: (Cout,C). Returns (N,Cout,H/2,W/2), dtype of x."""
    N, C, H, W = x_nchw.shape
    assert H % 2 == 0 and W % 2 == 0
    Cout = conv_w.shape[0]
    Ho, Wo = H // 2, W // 2

    # pooled-row tile: second-to-last block dim must be 8-aligned or full.
    ht = rows_per_block if (Ho % rows_per_block == 0 and rows_per_block % 8 == 0) else Ho
    grid = (N, Ho // ht)

    # Free (metadata-only) reshape: rows 2i / 2i+1 become two contiguous
    # width-W lane slabs of the last axis.  No transpose, no extra HBM pass.
    x2 = x_nchw.reshape(N, C, Ho, 2 * W)
    gamma2 = gamma.reshape(C, 1).astype(jnp.float32)
    beta2 = beta.reshape(C, 1).astype(jnp.float32)
    w2 = conv_w.reshape(Cout, C).astype(jnp.float32)
    # 2x2 pool: 0.25 scale folded into the W-pair selection matrix (post-ReLU, valid).
    sel = jnp.repeat(jnp.eye(Wo, dtype=jnp.float32), 2, axis=0) * 0.25      # (W, Wo)

    x_spec = pl.BlockSpec((1, C, ht, 2 * W), lambda n, r: (n, 0, r, 0))
    cvec_spec = pl.BlockSpec((C, 1), lambda n, r: (0, 0))

    itemsize = x2.dtype.itemsize
    xbytes = int(x2.size) * itemsize
    vmem_cap = 32 * 1024 * 1024   # plenty for these blocks; tune with block size / gen

    # ---- pass 1: streaming BN batch statistics -> per-channel scale / shift ----
    scale, shift = pl.pallas_call(
        functools.partial(_bn_stats_kernel, count=float(N * H * W), eps=eps),
        grid=grid,
        in_specs=[x_spec, cvec_spec, cvec_spec],
        out_specs=(cvec_spec, cvec_spec),
        out_shape=(jax.ShapeDtypeStruct((C, 1), jnp.float32),
                   jax.ShapeDtypeStruct((C, 1), jnp.float32)),
        scratch_shapes=[pltpu.VMEM((C, 2 * W), jnp.float32),
                        pltpu.VMEM((C, 2 * W), jnp.float32)],
        compiler_params=pltpu.CompilerParams(
            dimension_semantics=("arbitrary", "arbitrary"),   # cross-grid reduction
            vmem_limit_bytes=vmem_cap),
        cost_estimate=pl.CostEstimate(flops=int(3 * N * C * H * W),
                                      transcendentals=int(C),
                                      bytes_accessed=int(xbytes + 16 * C)),
    )(x2, gamma2, beta2)

    # ---- pass 2: fused BN + ReLU + 2x2 avg-pool + 1x1 conv (NCHW in / out) ----
    out = pl.pallas_call(
        functools.partial(_fused_kernel, w_in=W),
        grid=grid,
        in_specs=[x_spec, cvec_spec, cvec_spec,
                  pl.BlockSpec((Cout, C), lambda n, r: (0, 0)),
                  pl.BlockSpec((W, Wo), lambda n, r: (0, 0))],
        out_specs=pl.BlockSpec((1, Cout, ht, Wo), lambda n, r: (n, 0, r, 0)),
        out_shape=jax.ShapeDtypeStruct((N, Cout, Ho, Wo), x_nchw.dtype),
        compiler_params=pltpu.CompilerParams(
            dimension_semantics=("parallel", "parallel"),     # v7x: shards over 2 TCs
            vmem_limit_bytes=vmem_cap),
        cost_estimate=pl.CostEstimate(
            flops=int(6 * N * C * H * W
                      + 2 * N * C * Ho * W * Wo
                      + 2 * N * Cout * C * Ho * Wo),
            transcendentals=0,
            bytes_accessed=int(xbytes + N * Cout * Ho * Wo * itemsize)),
    )(x2, scale, shift, w2, sel)
    return out


# ---------------------------------------------------------------- reference --

def transition_ref(x, gamma, beta, conv_w):
    """Pure-JAX reference: exact PyTorch Transition.forward (training-mode BN)."""
    mean = jnp.mean(x, axis=(0, 2, 3), keepdims=True)
    var = jnp.mean(jnp.square(x - mean), axis=(0, 2, 3), keepdims=True)   # biased
    y = ((x - mean) / jnp.sqrt(var + 1e-5)
         * gamma.reshape(1, -1, 1, 1) + beta.reshape(1, -1, 1, 1))
    y = jnp.maximum(y, 0.0)
    z = jnp.einsum('oc,nchw->nohw', conv_w, y)            # 1x1 conv, no bias
    n, co, h, w = z.shape
    return z.reshape(n, co, h // 2, 2, w // 2, 2).mean(axis=(3, 5))


# --------------------------------------------------------------------- main --

if __name__ == "__main__":
    # Transition(nChannels=16, nOutChannels=8) on a (2, 16, 32, 32) input.
    N, C, H, W = 2, 16, 32, 32
    Cout = 8

    key = jax.random.PRNGKey(0)
    k_x, k_w = jax.random.split(key)
    x = jax.random.normal(k_x, (N, C, H, W), jnp.float32)
    gamma = jnp.ones((C,), jnp.float32)                   # fresh BN params
    beta = jnp.zeros((C,), jnp.float32)
    conv_w = jax.random.normal(k_w, (Cout, C), jnp.float32) * (2.0 / Cout) ** 0.5

    fwd = jax.jit(transition_forward)

    # f32 activation path: exact module semantics.
    out = jax.block_until_ready(fwd(x, gamma, beta, conv_w))
    assert out.shape == (N, Cout, H // 2, W // 2)
    ref = transition_ref(x, gamma, beta, conv_w)
    err = float(jnp.max(jnp.abs(out - ref)))
    assert jnp.allclose(out, ref, rtol=3e-2, atol=3e-2), err

    # bf16 activation I/O path (f32 stats / accumulation inside the kernels).
    x_bf = x.astype(jnp.bfloat16)
    out_bf = jax.block_until_ready(fwd(x_bf, gamma, beta, conv_w))
    assert out_bf.dtype == jnp.bfloat16
    ref_bf = transition_ref(x_bf.astype(jnp.float32), gamma, beta, conv_w)
    err_bf = float(jnp.max(jnp.abs(out_bf.astype(jnp.float32) - ref_bf)))
    assert jnp.allclose(out_bf.astype(jnp.float32), ref_bf, rtol=1e-1, atol=1e-1), err_bf

    print("KERNEL_OK")
</pallas_src>

<mosaic_0001>
module attributes {stable_mosaic.version = 11 : i64} {
  func.func @_bn_stats_kernel(%arg0: i32, %arg1: i32, %arg2: memref<1x16x8x64xf32, #tpu.memory_space<vmem>>, %arg3: memref<16x1xf32, #tpu.memory_space<vmem>>, %arg4: memref<16x1xf32, #tpu.memory_space<vmem>>, %arg5: memref<16x1xf32, #tpu.memory_space<vmem>>, %arg6: memref<16x1xf32, #tpu.memory_space<vmem>>, %arg7: memref<16x64xf32, #tpu.memory_space<vmem>>, %arg8: memref<16x64xf32, #tpu.memory_space<vmem>>) attributes {dimension_semantics = [#tpu.dimension_semantics<arbitrary>, #tpu.dimension_semantics<arbitrary>], iteration_bounds = array<i64: 2, 2>, scalar_prefetch = 0 : i64, scratch_operands = 2 : i64, tpu.core_type = #tpu.core_type<tc>, window_params = [{transform_indices = @transform_0, window_bounds = array<i64: 1, 16, 8, 64>}, {pipeline_mode = #tpu.pipeline_mode<synchronous>, transform_indices = @transform_1, window_bounds = array<i64: 16, 1>}, {pipeline_mode = #tpu.pipeline_mode<synchronous>, transform_indices = @transform_2, window_bounds = array<i64: 16, 1>}, {pipeline_mode = #tpu.pipeline_mode<synchronous>, transform_indices = @transform_3, window_bounds = array<i64: 16, 1>}, {pipeline_mode = #tpu.pipeline_mode<synchronous>, transform_indices = @transform_4, window_bounds = array<i64: 16, 1>}]} {
    %c0_i32 = arith.constant 0 : i32
    %0 = arith.cmpi eq, %arg0, %c0_i32 : i32
    %c0_i32_0 = arith.constant 0 : i32
    %1 = arith.cmpi eq, %arg1, %c0_i32_0 : i32
    %2 = arith.andi %0, %1 : i1
    %3 = arith.extui %2 : i1 to i32
    %c0_i32_1 = arith.constant 0 : i32
    %4 = arith.cmpi ne, %3, %c0_i32_1 : i32
    scf.if %4 {
      %cst = arith.constant 0.000000e+00 : f32
      %82 = vector.broadcast %cst : f32 to vector<16x64xf32>
      %c0_92 = arith.constant 0 : index
      %c0_93 = arith.constant 0 : index
      %83 = vector.load %arg7[%c0_92, %c0_93] : memref<16x64xf32, #tpu.memory_space<vmem>>, vector<16x64xf32>
      tpu.vector_store %arg7[%c0_92, %c0_93], %82 {strides = array<i32>} : memref<16x64xf32, #tpu.memory_space<vmem>>, vector<16x64xf32>,
      %cst_94 = arith.constant 0.000000e+00 : f32
      %84 = vector.broadcast %cst_94 : f32 to vector<16x64xf32>
      %c0_95 = arith.constant 0 : index
      %c0_96 = arith.constant 0 : index
      %85 = vector.load %arg8[%c0_95, %c0_96] : memref<16x64xf32, #tpu.memory_space<vmem>>, vector<16x64xf32>
      tpu.vector_store %arg8[%c0_95, %c0_96], %84 {strides = array<i32>} : memref<16x64xf32, #tpu.memory_space<vmem>>, vector<16x64xf32>,
    } else {
    }
    %c0 = arith.constant 0 : index
    %c0_2 = arith.constant 0 : index
    %c0_3 = arith.constant 0 : index
    %c0_4 = arith.constant 0 : index
    %5 = vector.load %arg2[%c0, %c0_2, %c0_3, %c0_4] : memref<1x16x8x64xf32, #tpu.memory_space<vmem>>, vector<1x16x1x64xf32>
    %6 = vector.shape_cast %5 : vector<1x16x1x64xf32> to vector<16x64xf32>
    %c0_5 = arith.constant 0 : index
    %c0_6 = arith.constant 0 : index
    %7 = vector.load %arg7[%c0_5, %c0_6] : memref<16x64xf32, #tpu.memory_space<vmem>>, vector<16x64xf32>
    %8 = arith.addf %7, %6 : vector<16x64xf32>
    %c0_7 = arith.constant 0 : index
    %c0_8 = arith.constant 0 : index
    %9 = vector.load %arg7[%c0_7, %c0_8] : memref<16x64xf32, #tpu.memory_space<vmem>>, vector<16x64xf32>
    tpu.vector_store %arg7[%c0_7, %c0_8], %8 {strides = array<i32>} : memref<16x64xf32, #tpu.memory_space<vmem>>, vector<16x64xf32>,
    %c0_9 = arith.constant 0 : index
    %c0_10 = arith.constant 0 : index
    %10 = vector.load %arg8[%c0_9, %c0_10] : memref<16x64xf32, #tpu.memory_space<vmem>>, vector<16x64xf32>
    %11 = arith.mulf %6, %6 : vector<16x64xf32>
    %12 = arith.addf %10, %11 : vector<16x64xf32>
    %c0_11 = arith.constant 0 : index
    %c0_12 = arith.constant 0 : index
    %13 = vector.load %arg8[%c0_11, %c0_12] : memref<16x64xf32, #tpu.memory_space<vmem>>, vector<16x64xf32>
    tpu.vector_store %arg8[%c0_11, %c0_12], %12 {strides = array<i32>} : memref<16x64xf32, #tpu.memory_space<vmem>>, vector<16x64xf32>,
    %c0_13 = arith.constant 0 : index
    %c0_14 = arith.constant 0 : index
    %c1 = arith.constant 1 : index
    %c0_15 = arith.constant 0 : index
    %14 = vector.load %arg2[%c0_13, %c0_14, %c1, %c0_15] : memref<1x16x8x64xf32, #tpu.memory_space<vmem>>, vector<1x16x1x64xf32>
    %15 = vector.shape_cast %14 : vector<1x16x1x64xf32> to vector<16x64xf32>
    %c0_16 = arith.constant 0 : index
    %c0_17 = arith.constant 0 : index
    %16 = vector.load %arg7[%c0_16, %c0_17] : memref<16x64xf32, #tpu.memory_space<vmem>>, vector<16x64xf32>
    %17 = arith.addf %16, %15 : vector<16x64xf32>
    %c0_18 = arith.constant 0 : index
    %c0_19 = arith.constant 0 : index
    %18 = vector.load %arg7[%c0_18, %c0_19] : memref<16x64xf32, #tpu.memory_space<vmem>>, vector<16x64xf32>
    tpu.vector_store %arg7[%c0_18, %c0_19], %17 {strides = array<i32>} : memref<16x64xf32, #tpu.memory_space<vmem>>, vector<16x64xf32>,
    %c0_20 = arith.constant 0 : index
    %c0_21 = arith.constant 0 : index
    %19 = vector.load %arg8[%c0_20, %c0_21] : memref<16x64xf32, #tpu.memory_space<vmem>>, vector<16x64xf32>
    %20 = arith.mulf %15, %15 : vector<16x64xf32>
    %21 = arith.addf %19, %20 : vector<16x64xf32>
    %c0_22 = arith.constant 0 : index
    %c0_23 = arith.constant 0 : index
    %22 = vector.load %arg8[%c0_22, %c0_23] : memref<16x64xf32, #tpu.memory_space<vmem>>, vector<16x64xf32>
    tpu.vector_store %arg8[%c0_22, %c0_23], %21 {strides = array<i32>} : memref<16x64xf32, #tpu.memory_space<vmem>>, vector<16x64xf32>,
    %c0_24 = arith.constant 0 : index
    %c0_25 = arith.constant 0 : index
    %c2 = arith.constant 2 : index
    %c0_26 = arith.constant 0 : index
    %23 = vector.load %arg2[%c0_24, %c0_25, %c2, %c0_26] : memref<1x16x8x64xf32, #tpu.memory_space<vmem>>, vector<1x16x1x64xf32>
    %24 = vector.shape_cast %23 : vector<1x16x1x64xf32> to vector<16x64xf32>
    %c0_27 = arith.constant 0 : index
    %c0_28 = arith.constant 0 : index
    %25 = vector.load %arg7[%c0_27, %c0_28] : memref<16x64xf32, #tpu.memory_space<vmem>>, vector<16x64xf32>
    %26 = arith.addf %25, %24 : vector<16x64xf32>
    %c0_29 = arith.constant 0 : index
    %c0_30 = arith.constant 0 : index
    %27 = vector.load %arg7[%c0_29, %c0_30] : memref<16x64xf32, #tpu.memory_space<vmem>>, vector<16x64xf32>
    tpu.vector_store %arg7[%c0_29, %c0_30], %26 {strides = array<i32>} : memref<16x64xf32, #tpu.memory_space<vmem>>, vector<16x64xf32>,
    %c0_31 = arith.constant 0 : index
    %c0_32 = arith.constant 0 : index
    %28 = vector.load %arg8[%c0_31, %c0_32] : memref<16x64xf32, #tpu.memory_space<vmem>>, vector<16x64xf32>
    %29 = arith.mulf %24, %24 : vector<16x64xf32>
    %30 = arith.addf %28, %29 : vector<16x64xf32>
    %c0_33 = arith.constant 0 : index
    %c0_34 = arith.constant 0 : index
    %31 = vector.load %arg8[%c0_33, %c0_34] : memref<16x64xf32, #tpu.memory_space<vmem>>, vector<16x64xf32>
    tpu.vector_store %arg8[%c0_33, %c0_34], %30 {strides = array<i32>} : memref<16x64xf32, #tpu.memory_space<vmem>>, vector<16x64xf32>,
    %c0_35 = arith.constant 0 : index
    %c0_36 = arith.constant 0 : index
    %c3 = arith.constant 3 : index
    %c0_37 = arith.constant 0 : index
    %32 = vector.load %arg2[%c0_35, %c0_36, %c3, %c0_37] : memref<1x16x8x64xf32, #tpu.memory_space<vmem>>, vector<1x16x1x64xf32>
    %33 = vector.shape_cast %32 : vector<1x16x1x64xf32> to vector<16x64xf32>
    %c0_38 = arith.constant 0 : index
    %c0_39 = arith.constant 0 : index
    %34 = vector.load %arg7[%c0_38, %c0_39] : memref<16x64xf32, #tpu.memory_space<vmem>>, vector<16x64xf32>
    %35 = arith.addf %34, %33 : vector<16x64xf32>
    %c0_40 = arith.constant 0 : index
    %c0_41 = arith.constant 0 : index
    %36 = vector.load %arg7[%c0_40, %c0_41] : memref<16x64xf32, #tpu.memory_space<vmem>>, vector<16x64xf32>
    tpu.vector_store %arg7[%c0_40, %c0_41], %35 {strides = array<i32>} : memref<16x64xf32, #tpu.memory_space<vmem>>, vector<16x64xf32>,
    %c0_42 = arith.constant 0 : index
    %c0_43 = arith.constant 0 : index
    %37 = vector.load %arg8[%c0_42, %c0_43] : memref<16x64xf32, #tpu.memory_space<vmem>>, vector<16x64xf32>
    %38 = arith.mulf %33, %33 : vector<16x64xf32>
    %39 = arith.addf %37, %38 : vector<16x64xf32>
    %c0_44 = arith.constant 0 : index
    %c0_45 = arith.constant 0 : index
    %40 = vector.load %arg8[%c0_44, %c0_45] : memref<16x64xf32, #tpu.memory_space<vmem>>, vector<16x64xf32>
    tpu.vector_store %arg8[%c0_44, %c0_45], %39 {strides = array<i32>} : memref<16x64xf32, #tpu.memory_space<vmem>>, vector<16x64xf32>,
    %c0_46 = arith.constant 0 : index
    %c0_47 = arith.constant 0 : index
    %c4 = arith.constant 4 : index
    %c0_48 = arith.constant 0 : index
    %41 = vector.load %arg2[%c0_46, %c0_47, %c4, %c0_48] : memref<1x16x8x64xf32, #tpu.memory_space<vmem>>, vector<1x16x1x64xf32>
    %42 = vector.shape_cast %41 : vector<1x16x1x64xf32> to vector<16x64xf32>
    %c0_49 = arith.constant 0 : index
    %c0_50 = arith.constant 0 : index
    %43 = vector.load %arg7[%c0_49, %c0_50] : memref<16x64xf32, #tpu.memory_space<vmem>>, vector<16x64xf32>
    %44 = arith.addf %43, %42 : vector<16x64xf32>
    %c0_51 = arith.constant 0 : index
    %c0_52 = arith.constant 0 : index
    %45 = vector.load %arg7[%c0_51, %c0_52] : memref<16x64xf32, #tpu.memory_space<vmem>>, vector<16x64xf32>
    tpu.vector_store %arg7[%c0_51, %c0_52], %44 {strides = array<i32>} : memref<16x64xf32, #tpu.memory_space<vmem>>, vector<16x64xf32>,
    %c0_53 = arith.constant 0 : index
    %c0_54 = arith.constant 0 : index
    %46 = vector.load %arg8[%c0_53, %c0_54] : memref<16x64xf32, #tpu.memory_space<vmem>>, vector<16x64xf32>
    %47 = arith.mulf %42, %42 : vector<16x64xf32>
    %48 = arith.addf %46, %47 : vector<16x64xf32>
    %c0_55 = arith.constant 0 : index
    %c0_56 = arith.constant 0 : index
    %49 = vector.load %arg8[%c0_55, %c0_56] : memref<16x64xf32, #tpu.memory_space<vmem>>, vector<16x64xf32>
    tpu.vector_store %arg8[%c0_55, %c0_56], %48 {strides = array<i32>} : memref<16x64xf32, #tpu.memory_space<vmem>>, vector<16x64xf32>,
    %c0_57 = arith.constant 0 : index
    %c0_58 = arith.constant 0 : index
    %c5 = arith.constant 5 : index
    %c0_59 = arith.constant 0 : index
    %50 = vector.load %arg2[%c0_57, %c0_58, %c5, %c0_59] : memref<1x16x8x64xf32, #tpu.memory_space<vmem>>, vector<1x16x1x64xf32>
    %51 = vector.shape_cast %50 : vector<1x16x1x64xf32> to vector<16x64xf32>
    %c0_60 = arith.constant 0 : index
    %c0_61 = arith.constant 0 : index
    %52 = vector.load %arg7[%c0_60, %c0_61] : memref<16x64xf32, #tpu.memory_space<vmem>>, vector<16x64xf32>
    %53 = arith.addf %52, %51 : vector<16x64xf32>
    %c0_62 = arith.constant 0 : index
    %c0_63 = arith.constant 0 : index
    %54 = vector.load %arg7[%c0_62, %c0_63] : memref<16x64xf32, #tpu.memory_space<vmem>>, vector<16x64xf32>
    tpu.vector_store %arg7[%c0_62, %c0_63], %53 {strides = array<i32>} : memref<16x64xf32, #tpu.memory_space<vmem>>, vector<16x64xf32>,
    %c0_64 = arith.constant 0 : index
    %c0_65 = arith.constant 0 : index
    %55 = vector.load %arg8[%c0_64, %c0_65] : memref<16x64xf32, #tpu.memory_space<vmem>>, vector<16x64xf32>
    %56 = arith.mulf %51, %51 : vector<16x64xf32>
    %57 = arith.addf %55, %56 : vector<16x64xf32>
    %c0_66 = arith.constant 0 : index
    %c0_67 = arith.constant 0 : index
    %58 = vector.load %arg8[%c0_66, %c0_67] : memref<16x64xf32, #tpu.memory_space<vmem>>, vector<16x64xf32>
    tpu.vector_store %arg8[%c0_66, %c0_67], %57 {strides = array<i32>} : memref<16x64xf32, #tpu.memory_space<vmem>>, vector<16x64xf32>,
    %c0_68 = arith.constant 0 : index
    %c0_69 = arith.constant 0 : index
    %c6 = arith.constant 6 : index
    %c0_70 = arith.constant 0 : index
    %59 = vector.load %arg2[%c0_68, %c0_69, %c6, %c0_70] : memref<1x16x8x64xf32, #tpu.memory_space<vmem>>, vector<1x16x1x64xf32>
    %60 = vector.shape_cast %59 : vector<1x16x1x64xf32> to vector<16x64xf32>
    %c0_71 = arith.constant 0 : index
    %c0_72 = arith.constant 0 : index
    %61 = vector.load %arg7[%c0_71, %c0_72] : memref<16x64xf32, #tpu.memory_space<vmem>>, vector<16x64xf32>
    %62 = arith.addf %61, %60 : vector<16x64xf32>
    %c0_73 = arith.constant 0 : index
    %c0_74 = arith.constant 0 : index
    %63 = vector.load %arg7[%c0_73, %c0_74] : memref<16x64xf32, #tpu.memory_space<vmem>>, vector<16x64xf32>
    tpu.vector_store %arg7[%c0_73, %c0_74], %62 {strides = array<i32>} : memref<16x64xf32, #tpu.memory_space<vmem>>, vector<16x64xf32>,
    %c0_75 = arith.constant 0 : index
    %c0_76 = arith.constant 0 : index
    %64 = vector.load %arg8[%c0_75, %c0_76] : memref<16x64xf32, #tpu.memory_space<vmem>>, vector<16x64xf32>
    %65 = arith.mulf %60, %60 : vector<16x64xf32>
    %66 = arith.addf %64, %65 : vector<16x64xf32>
    %c0_77 = arith.constant 0 : index
    %c0_78 = arith.constant 0 : index
    %67 = vector.load %arg8[%c0_77, %c0_78] : memref<16x64xf32, #tpu.memory_space<vmem>>, vector<16x64xf32>
    tpu.vector_store %arg8[%c0_77, %c0_78], %66 {strides = array<i32>} : memref<16x64xf32, #tpu.memory_space<vmem>>, vector<16x64xf32>,
    %c0_79 = arith.constant 0 : index
    %c0_80 = arith.constant 0 : index
    %c7 = arith.constant 7 : index
    %c0_81 = arith.constant 0 : index
    %68 = vector.load %arg2[%c0_79, %c0_80, %c7, %c0_81] : memref<1x16x8x64xf32, #tpu.memory_space<vmem>>, vector<1x16x1x64xf32>
    %69 = vector.shape_cast %68 : vector<1x16x1x64xf32> to vector<16x64xf32>
    %c0_82 = arith.constant 0 : index
    %c0_83 = arith.constant 0 : index
    %70 = vector.load %arg7[%c0_82, %c0_83] : memref<16x64xf32, #tpu.memory_space<vmem>>, vector<16x64xf32>
    %71 = arith.addf %70, %69 : vector<16x64xf32>
    %c0_84 = arith.constant 0 : index
    %c0_85 = arith.constant 0 : index
    %72 = vector.load %arg7[%c0_84, %c0_85] : memref<16x64xf32, #tpu.memory_space<vmem>>, vector<16x64xf32>
    tpu.vector_store %arg7[%c0_84, %c0_85], %71 {strides = array<i32>} : memref<16x64xf32, #tpu.memory_space<vmem>>, vector<16x64xf32>,
    %c0_86 = arith.constant 0 : index
    %c0_87 = arith.constant 0 : index
    %73 = vector.load %arg8[%c0_86, %c0_87] : memref<16x64xf32, #tpu.memory_space<vmem>>, vector<16x64xf32>
    %74 = arith.mulf %69, %69 : vector<16x64xf32>
    %75 = arith.addf %73, %74 : vector<16x64xf32>
    %c0_88 = arith.constant 0 : index
    %c0_89 = arith.constant 0 : index
    %76 = vector.load %arg8[%c0_88, %c0_89] : memref<16x64xf32, #tpu.memory_space<vmem>>, vector<16x64xf32>
    tpu.vector_store %arg8[%c0_88, %c0_89], %75 {strides = array<i32>} : memref<16x64xf32, #tpu.memory_space<vmem>>, vector<16x64xf32>,
    %c1_i32 = arith.constant 1 : i32
    %77 = arith.cmpi eq, %arg0, %c1_i32 : i32
    %c1_i32_90 = arith.constant 1 : i32
    %78 = arith.cmpi eq, %arg1, %c1_i32_90 : i32
    %79 = arith.andi %77, %78 : i1
    %80 = arith.extui %79 : i1 to i32
    %c0_i32_91 = arith.constant 0 : i32
    %81 = arith.cmpi ne, %80, %c0_i32_91 : i32
    scf.if %81 {
      %c0_92 = arith.constant 0 : index
      %c0_93 = arith.constant 0 : index
      %82 = vector.load %arg7[%c0_92, %c0_93] : memref<16x64xf32, #tpu.memory_space<vmem>>, vector<16x64xf32>
      %cst = arith.constant dense<0.000000e+00> : vector<16xf32>
      %83 = vector.multi_reduction <add>, %82, %cst [1] : vector<16x64xf32> to vector<16xf32>
      %84 = vector.shape_cast %83 : vector<16xf32> to vector<16x1xf32>
      %cst_94 = arith.constant 4.8828125E-4 : f32
      %85 = vector.broadcast %cst_94 : f32 to vector<16x1xf32>
      %86 = arith.mulf %84, %85 : vector<16x1xf32>
      %c0_95 = arith.constant 0 : index
      %c0_96 = arith.constant 0 : index
      %87 = vector.load %arg8[%c0_95, %c0_96] : memref<16x64xf32, #tpu.memory_space<vmem>>, vector<16x64xf32>
      %cst_97 = arith.constant dense<0.000000e+00> : vector<16xf32>
      %88 = vector.multi_reduction <add>, %87, %cst_97 [1] : vector<16x64xf32> to vector<16xf32>
      %89 = vector.shape_cast %88 : vector<16xf32> to vector<16x1xf32>
      %cst_98 = arith.constant 4.8828125E-4 : f32
      %90 = vector.broadcast %cst_98 : f32 to vector<16x1xf32>
      %91 = arith.mulf %89, %90 : vector<16x1xf32>
      %92 = arith.mulf %86, %86 : vector<16x1xf32>
      %93 = arith.subf %91, %92 : vector<16x1xf32>
      %cst_99 = arith.constant 0.000000e+00 : f32
      %94 = vector.broadcast %cst_99 : f32 to vector<16x1xf32>
      %95 = arith.maximumf %93, %94 : vector<16x1xf32>
      %c0_100 = arith.constant 0 : index
      %c0_101 = arith.constant 0 : index
      %96 = vector.load %arg3[%c0_100, %c0_101] : memref<16x1xf32, #tpu.memory_space<vmem>>, vector<16x1xf32>
      %cst_102 = arith.constant 9.99999974E-6 : f32
      %97 = vector.broadcast %cst_102 : f32 to vector<16x1xf32>
      %98 = arith.addf %95, %97 : vector<16x1xf32>
      %99 = math.rsqrt %98 : vector<16x1xf32>
      %100 = arith.mulf %96, %99 : vector<16x1xf32>
      %c0_103 = arith.constant 0 : index
      %c0_104 = arith.constant 0 : index
      %101 = vector.load %arg5[%c0_103, %c0_104] : memref<16x1xf32, #tpu.memory_space<vmem>>, vector<16x1xf32>
      tpu.vector_store %arg5[%c0_103, %c0_104], %100 {strides = array<i32>} : memref<16x1xf32, #tpu.memory_space<vmem>>, vector<16x1xf32>,
      %c0_105 = arith.constant 0 : index
      %c0_106 = arith.constant 0 : index
      %102 = vector.load %arg4[%c0_105, %c0_106] : memref<16x1xf32, #tpu.memory_space<vmem>>, vector<16x1xf32>
      %103 = arith.mulf %86, %100 : vector<16x1xf32>
      %104 = arith.subf %102, %103 : vector<16x1xf32>
      %c0_107 = arith.constant 0 : index
      %c0_108 = arith.constant 0 : index
      %105 = vector.load %arg6[%c0_107, %c0_108] : memref<16x1xf32, #tpu.memory_space<vmem>>, vector<16x1xf32>
      tpu.vector_store %arg6[%c0_107, %c0_108], %104 {strides = array<i32>} : memref<16x1xf32, #tpu.memory_space<vmem>>, vector<16x1xf32>,
    } else {
    }
    return
  }
  func.func @transform_0(%arg0: i32, %arg1: i32) -> (i32, i32, i32, i32) {
    %c0_i32 = arith.constant 0 : i32
    %c0_i32_0 = arith.constant 0 : i32
    %c0_i32_1 = arith.constant 0 : i32
    return %arg0, %c0_i32, %arg1, %c0_i32_0 : i32, i32, i32, i32
  }
  func.func @transform_1(%arg0: i32, %arg1: i32) -> (i32, i32) {
    %c0_i32 = arith.constant 0 : i32
    %c0_i32_0 = arith.constant 0 : i32
    %c0_i32_1 = arith.constant 0 : i32
    return %c0_i32, %c0_i32_0 : i32, i32
  }
  func.func @transform_2(%arg0: i32, %arg1: i32) -> (i32, i32) {
    %c0_i32 = arith.constant 0 : i32
    %c0_i32_0 = arith.constant 0 : i32
    %c0_i32_1 = arith.constant 0 : i32
    return %c0_i32, %c0_i32_0 : i32, i32
  }
  func.func @transform_3(%arg0: i32, %arg1: i32) -> (i32, i32) {
    %c0_i32 = arith.constant 0 : i32
    %c0_i32_0 = arith.constant 0 : i32
    %c0_i32_1 = arith.constant 0 : i32
    return %c0_i32, %c0_i32_0 : i32, i32
  }
  func.func @transform_4(%arg0: i32, %arg1: i32) -> (i32, i32) {
    %c0_i32 = arith.constant 0 : i32
    %c0_i32_0 = arith.constant 0 : i32
    %c0_i32_1 = arith.constant 0 : i32
    return %c0_i32, %c0_i32_0 : i32, i32
  }
}

module attributes {stable_mosaic.version = 11 : i64} {
  func.func @_fused_kernel(%arg0: i32, %arg1: i32, %arg2: memref<1x16x8x64xf32, #tpu.memory_space<vmem>>, %arg3: memref<16x1xf32, #tpu.memory_space<vmem>>, %arg4: memref<16x1xf32, #tpu.memory_space<vmem>>, %arg5: memref<8x16xf32, #tpu.memory_space<vmem>>, %arg6: memref<32x16xf32, #tpu.memory_space<vmem>>, %arg7: memref<1x8x8x16xf32, #tpu.memory_space<vmem>>) attributes {dimension_semantics = [#tpu.dimension_semantics<parallel>, #tpu.dimension_semantics<parallel>], iteration_bounds = array<i64: 2, 2>, scalar_prefetch = 0 : i64, scratch_operands = 0 : i64, tpu.core_type = #tpu.core_type<tc>, window_params = [{transform_indices = @transform_0, window_bounds = array<i64: 1, 16, 8, 64>}, {pipeline_mode = #tpu.pipeline_mode<synchronous>, transform_indices = @transform_1, window_bounds = array<i64: 16, 1>}, {pipeline_mode = #tpu.pipeline_mode<synchronous>, transform_indices = @transform_2, window_bounds = array<i64: 16, 1>}, {pipeline_mode = #tpu.pipeline_mode<synchronous>, transform_indices = @transform_3, window_bounds = array<i64: 8, 16>}, {pipeline_mode = #tpu.pipeline_mode<synchronous>, transform_indices = @transform_4, window_bounds = array<i64: 32, 16>}, {transform_indices = @transform_5, window_bounds = array<i64: 1, 8, 8, 16>}]} {
    %c0 = arith.constant 0 : index
    %c0_0 = arith.constant 0 : index
    %0 = vector.load %arg3[%c0, %c0_0] : memref<16x1xf32, #tpu.memory_space<vmem>>, vector<16x1xf32>
    %c0_1 = arith.constant 0 : index
    %c0_2 = arith.constant 0 : index
    %1 = vector.load %arg4[%c0_1, %c0_2] : memref<16x1xf32, #tpu.memory_space<vmem>>, vector<16x1xf32>
    %c0_3 = arith.constant 0 : index
    %c0_4 = arith.constant 0 : index
    %2 = vector.load %arg5[%c0_3, %c0_4] : memref<8x16xf32, #tpu.memory_space<vmem>>, vector<8x16xf32>
    %c0_5 = arith.constant 0 : index
    %c0_6 = arith.constant 0 : index
    %3 = vector.load %arg6[%c0_5, %c0_6] : memref<32x16xf32, #tpu.memory_space<vmem>>, vector<32x16xf32>
    %c0_7 = arith.constant 0 : index
    %c0_8 = arith.constant 0 : index
    %c0_9 = arith.constant 0 : index
    %c0_10 = arith.constant 0 : index
    %4 = vector.load %arg2[%c0_7, %c0_8, %c0_9, %c0_10] : memref<1x16x8x64xf32, #tpu.memory_space<vmem>>, vector<1x16x1x64xf32>
    %5 = vector.shape_cast %4 : vector<1x16x1x64xf32> to vector<16x64xf32>
    %6 = vector.extract_strided_slice %5 {offsets = [0, 0], sizes = [16, 32], strides = [1, 1]} : vector<16x64xf32> to vector<16x32xf32>
    %7 = vector.extract_strided_slice %5 {offsets = [0, 32], sizes = [16, 32], strides = [1, 1]} : vector<16x64xf32> to vector<16x32xf32>
    %8 = vector.broadcast %0 : vector<16x1xf32> to vector<16x32xf32>
    %9 = arith.mulf %6, %8 : vector<16x32xf32>
    %10 = vector.broadcast %1 : vector<16x1xf32> to vector<16x32xf32>
    %11 = arith.addf %9, %10 : vector<16x32xf32>
    %cst = arith.constant 0.000000e+00 : f32
    %12 = vector.broadcast %cst : f32 to vector<16x32xf32>
    %13 = arith.maximumf %11, %12 : vector<16x32xf32>
    %14 = vector.broadcast %0 : vector<16x1xf32> to vector<16x32xf32>
    %15 = arith.mulf %7, %14 : vector<16x32xf32>
    %16 = vector.broadcast %1 : vector<16x1xf32> to vector<16x32xf32>
    %17 = arith.addf %15, %16 : vector<16x32xf32>
    %cst_11 = arith.constant 0.000000e+00 : f32
    %18 = vector.broadcast %cst_11 : f32 to vector<16x32xf32>
    %19 = arith.maximumf %17, %18 : vector<16x32xf32>
    %20 = arith.addf %13, %19 : vector<16x32xf32>
    %cst_12 = arith.constant dense<0.000000e+00> : vector<16x16xf32>
    %21 = tpu.matmul %20, %3, %cst_12 {dimension_numbers = #tpu.dot_dimension_numbers<[1], [0], [0], [1], [0, 0, 1, 1], [], []>} : vector<16x32xf32>, vector<32x16xf32>, vector<16x16xf32> -> vector<16x16xf32>
    %cst_13 = arith.constant dense<0.000000e+00> : vector<8x16xf32>
    %22 = tpu.matmul %2, %21, %cst_13 {dimension_numbers = #tpu.dot_dimension_numbers<[1], [0], [0], [1], [0, 0, 1, 1], [], []>} : vector<8x16xf32>, vector<16x16xf32>, vector<8x16xf32> -> vector<8x16xf32>
    %c0_14 = arith.constant 0 : index
    %c0_15 = arith.constant 0 : index
    %c0_16 = arith.constant 0 : index
    %c0_17 = arith.constant 0 : index
    %23 = vector.load %arg7[%c0_14, %c0_15, %c0_16, %c0_17] : memref<1x8x8x16xf32, #tpu.memory_space<vmem>>, vector<1x8x1x16xf32>
    %24 = vector.shape_cast %23 : vector<1x8x1x16xf32> to vector<8x16xf32>
    %25 = vector.shape_cast %22 : vector<8x16xf32> to vector<1x8x1x16xf32>
    tpu.vector_store %arg7[%c0_14, %c0_15, %c0_16, %c0_17], %25 {strides = array<i32>} : memref<1x8x8x16xf32, #tpu.memory_space<vmem>>, vector<1x8x1x16xf32>,
    %c0_18 = arith.constant 0 : index
    %c0_19 = arith.constant 0 : index
    %c1 = arith.constant 1 : index
    %c0_20 = arith.constant 0 : index
    %26 = vector.load %arg2[%c0_18, %c0_19, %c1, %c0_20] : memref<1x16x8x64xf32, #tpu.memory_space<vmem>>, vector<1x16x1x64xf32>
    %27 = vector.shape_cast %26 : vector<1x16x1x64xf32> to vector<16x64xf32>
    %28 = vector.extract_strided_slice %27 {offsets = [0, 0], sizes = [16, 32], strides = [1, 1]} : vector<16x64xf32> to vector<16x32xf32>
    %29 = vector.extract_strided_slice %27 {offsets = [0, 32], sizes = [16, 32], strides = [1, 1]} : vector<16x64xf32> to vector<16x32xf32>
    %30 = vector.broadcast %0 : vector<16x1xf32> to vector<16x32xf32>
    %31 = arith.mulf %28, %30 : vector<16x32xf32>
    %32 = vector.broadcast %1 : vector<16x1xf32> to vector<16x32xf32>
    %33 = arith.addf %31, %32 : vector<16x32xf32>
    %cst_21 = arith.constant 0.000000e+00 : f32
    %34 = vector.broadcast %cst_21 : f32 to vector<16x32xf32>
    %35 = arith.maximumf %33, %34 : vector<16x32xf32>
    %36 = vector.broadcast %0 : vector<16x1xf32> to vector<16x32xf32>
    %37 = arith.mulf %29, %36 : vector<16x32xf32>
    %38 = vector.broadcast %1 : vector<16x1xf32> to vector<16x32xf32>
    %39 = arith.addf %37, %38 : vector<16x32xf32>
    %cst_22 = arith.constant 0.000000e+00 : f32
    %40 = vector.broadcast %cst_22 : f32 to vector<16x32xf32>
    %41 = arith.maximumf %39, %40 : vector<16x32xf32>
    %42 = arith.addf %35, %41 : vector<16x32xf32>
    %cst_23 = arith.constant dense<0.000000e+00> : vector<16x16xf32>
    %43 = tpu.matmul %42, %3, %cst_23 {dimension_numbers = #tpu.dot_dimension_numbers<[1], [0], [0], [1], [0, 0, 1, 1], [], []>} : vector<16x32xf32>, vector<32x16xf32>, vector<16x16xf32> -> vector<16x16xf32>
    %cst_24 = arith.constant dense<0.000000e+00> : vector<8x16xf32>
    %44 = tpu.matmul %2, %43, %cst_24 {dimension_numbers = #tpu.dot_dimension_numbers<[1], [0], [0], [1], [0, 0, 1, 1], [], []>} : vector<8x16xf32>, vector<16x16xf32>, vector<8x16xf32> -> vector<8x16xf32>
    %c0_25 = arith.constant 0 : index
    %c0_26 = arith.constant 0 : index
    %c1_27 = arith.constant 1 : index
    %c0_28 = arith.constant 0 : index
    %45 = vector.load %arg7[%c0_25, %c0_26, %c1_27, %c0_28] : memref<1x8x8x16xf32, #tpu.memory_space<vmem>>, vector<1x8x1x16xf32>
    %46 = vector.shape_cast %45 : vector<1x8x1x16xf32> to vector<8x16xf32>
    %47 = vector.shape_cast %44 : vector<8x16xf32> to vector<1x8x1x16xf32>
    tpu.vector_store %arg7[%c0_25, %c0_26, %c1_27, %c0_28], %47 {strides = array<i32>} : memref<1x8x8x16xf32, #tpu.memory_space<vmem>>, vector<1x8x1x16xf32>,
    %c0_29 = arith.constant 0 : index
    %c0_30 = arith.constant 0 : index
    %c2 = arith.constant 2 : index
    %c0_31 = arith.constant 0 : index
    %48 = vector.load %arg2[%c0_29, %c0_30, %c2, %c0_31] : memref<1x16x8x64xf32, #tpu.memory_space<vmem>>, vector<1x16x1x64xf32>
    %49 = vector.shape_cast %48 : vector<1x16x1x64xf32> to vector<16x64xf32>
    %50 = vector.extract_strided_slice %49 {offsets = [0, 0], sizes = [16, 32], strides = [1, 1]} : vector<16x64xf32> to vector<16x32xf32>
    %51 = vector.extract_strided_slice %49 {offsets = [0, 32], sizes = [16, 32], strides = [1, 1]} : vector<16x64xf32> to vector<16x32xf32>
    %52 = vector.broadcast %0 : vector<16x1xf32> to vector<16x32xf32>
    %53 = arith.mulf %50, %52 : vector<16x32xf32>
    %54 = vector.broadcast %1 : vector<16x1xf32> to vector<16x32xf32>
    %55 = arith.addf %53, %54 : vector<16x32xf32>
    %cst_32 = arith.constant 0.000000e+00 : f32
    %56 = vector.broadcast %cst_32 : f32 to vector<16x32xf32>
    %57 = arith.maximumf %55, %56 : vector<16x32xf32>
    %58 = vector.broadcast %0 : vector<16x1xf32> to vector<16x32xf32>
    %59 = arith.mulf %51, %58 : vector<16x32xf32>
    %60 = vector.broadcast %1 : vector<16x1xf32> to vector<16x32xf32>
    %61 = arith.addf %59, %60 : vector<16x32xf32>
    %cst_33 = arith.constant 0.000000e+00 : f32
    %62 = vector.broadcast %cst_33 : f32 to vector<16x32xf32>
    %63 = arith.maximumf %61, %62 : vector<16x32xf32>
    %64 = arith.addf %57, %63 : vector<16x32xf32>
    %cst_34 = arith.constant dense<0.000000e+00> : vector<16x16xf32>
    %65 = tpu.matmul %64, %3, %cst_34 {dimension_numbers = #tpu.dot_dimension_numbers<[1], [0], [0], [1], [0, 0, 1, 1], [], []>} : vector<16x32xf32>, vector<32x16xf32>, vector<16x16xf32> -> vector<16x16xf32>
    %cst_35 = arith.constant dense<0.000000e+00> : vector<8x16xf32>
    %66 = tpu.matmul %2, %65, %cst_35 {dimension_numbers = #tpu.dot_dimension_numbers<[1], [0], [0], [1], [0, 0, 1, 1], [], []>} : vector<8x16xf32>, vector<16x16xf32>, vector<8x16xf32> -> vector<8x16xf32>
    %c0_36 = arith.constant 0 : index
    %c0_37 = arith.constant 0 : index
    %c2_38 = arith.constant 2 : index
    %c0_39 = arith.constant 0 : index
    %67 = vector.load %arg7[%c0_36, %c0_37, %c2_38, %c0_39] : memref<1x8x8x16xf32, #tpu.memory_space<vmem>>, vector<1x8x1x16xf32>
    %68 = vector.shape_cast %67 : vector<1x8x1x16xf32> to vector<8x16xf32>
    %69 = vector.shape_cast %66 : vector<8x16xf32> to vector<1x8x1x16xf32>
    tpu.vector_store %arg7[%c0_36, %c0_37, %c2_38, %c0_39], %69 {strides = array<i32>} : memref<1x8x8x16xf32, #tpu.memory_space<vmem>>, vector<1x8x1x16xf32>,
    %c0_40 = arith.constant 0 : index
    %c0_41 = arith.constant 0 : index
    %c3 = arith.constant 3 : index
    %c0_42 = arith.constant 0 : index
    %70 = vector.load %arg2[%c0_40, %c0_41, %c3, %c0_42] : memref<1x16x8x64xf32, #tpu.memory_space<vmem>>, vector<1x16x1x64xf32>
    %71 = vector.shape_cast %70 : vector<1x16x1x64xf32> to vector<16x64xf32>
    %72 = vector.extract_strided_slice %71 {offsets = [0, 0], sizes = [16, 32], strides = [1, 1]} : vector<16x64xf32> to vector<16x32xf32>
    %73 = vector.extract_strided_slice %71 {offsets = [0, 32], sizes = [16, 32], strides = [1, 1]} : vector<16x64xf32> to vector<16x32xf32>
    %74 = vector.broadcast %0 : vector<16x1xf32> to vector<16x32xf32>
    %75 = arith.mulf %72, %74 : vector<16x32xf32>
    %76 = vector.broadcast %1 : vector<16x1xf32> to vector<16x32xf32>
    %77 = arith.addf %75, %76 : vector<16x32xf32>
    %cst_43 = arith.constant 0.000000e+00 : f32
    %78 = vector.broadcast %cst_43 : f32 to vector<16x32xf32>
    %79 = arith.maximumf %77, %78 : vector<16x32xf32>
    %80 = vector.broadcast %0 : vector<16x1xf32> to vector<16x32xf32>
    %81 = arith.mulf %73, %80 : vector<16x32xf32>
    %82 = vector.broadcast %1 : vector<16x1xf32> to vector<16x32xf32>
    %83 = arith.addf %81, %82 : vector<16x32xf32>
    %cst_44 = arith.constant 0.000000e+00 : f32
    %84 = vector.broadcast %cst_44 : f32 to vector<16x32xf32>
    %85 = arith.maximumf %83, %84 : vector<16x32xf32>
    %86 = arith.addf %79, %85 : vector<16x32xf32>
    %cst_45 = arith.constant dense<0.000000e+00> : vector<16x16xf32>
    %87 = tpu.matmul %86, %3, %cst_45 {dimension_numbers = #tpu.dot_dimension_numbers<[1], [0], [0], [1], [0, 0, 1, 1], [], []>} : vector<16x32xf32>, vector<32x16xf32>, vector<16x16xf32> -> vector<16x16xf32>
    %cst_46 = arith.constant dense<0.000000e+00> : vector<8x16xf32>
    %88 = tpu.matmul %2, %87, %cst_46 {dimension_numbers = #tpu.dot_dimension_numbers<[1], [0], [0], [1], [0, 0, 1, 1], [], []>} : vector<8x16xf32>, vector<16x16xf32>, vector<8x16xf32> -> vector<8x16xf32>
    %c0_47 = arith.constant 0 : index
    %c0_48 = arith.constant 0 : index
    %c3_49 = arith.constant 3 : index
    %c0_50 = arith.constant 0 : index
    %89 = vector.load %arg7[%c0_47, %c0_48, %c3_49, %c0_50] : memref<1x8x8x16xf32, #tpu.memory_space<vmem>>, vector<1x8x1x16xf32>
    %90 = vector.shape_cast %89 : vector<1x8x1x16xf32> to vector<8x16xf32>
    %91 = vector.shape_cast %88 : vector<8x16xf32> to vector<1x8x1x16xf32>
    tpu.vector_store %arg7[%c0_47, %c0_48, %c3_49, %c0_50], %91 {strides = array<i32>} : memref<1x8x8x16xf32, #tpu.memory_space<vmem>>, vector<1x8x1x16xf32>,
    %c0_51 = arith.constant 0 : index
    %c0_52 = arith.constant 0 : index
    %c4 = arith.constant 4 : index
    %c0_53 = arith.constant 0 : index
    %92 = vector.load %arg2[%c0_51, %c0_52, %c4, %c0_53] : memref<1x16x8x64xf32, #tpu.memory_space<vmem>>, vector<1x16x1x64xf32>
    %93 = vector.shape_cast %92 : vector<1x16x1x64xf32> to vector<16x64xf32>
    %94 = vector.extract_strided_slice %93 {offsets = [0, 0], sizes = [16, 32], strides = [1, 1]} : vector<16x64xf32> to vector<16x32xf32>
    %95 = vector.extract_strided_slice %93 {offsets = [0, 32], sizes = [16, 32], strides = [1, 1]} : vector<16x64xf32> to vector<16x32xf32>
    %96 = vector.broadcast %0 : vector<16x1xf32> to vector<16x32xf32>
    %97 = arith.mulf %94, %96 : vector<16x32xf32>
    %98 = vector.broadcast %1 : vector<16x1xf32> to vector<16x32xf32>
    %99 = arith.addf %97, %98 : vector<16x32xf32>
    %cst_54 = arith.constant 0.000000e+00 : f32
    %100 = vector.broadcast %cst_54 : f32 to vector<16x32xf32>
    %101 = arith.maximumf %99, %100 : vector<16x32xf32>
    %102 = vector.broadcast %0 : vector<16x1xf32> to vector<16x32xf32>
    %103 = arith.mulf %95, %102 : vector<16x32xf32>
    %104 = vector.broadcast %1 : vector<16x1xf32> to vector<16x32xf32>
    %105 = arith.addf %103, %104 : vector<16x32xf32>
    %cst_55 = arith.constant 0.000000e+00 : f32
    %106 = vector.broadcast %cst_55 : f32 to vector<16x32xf32>
    %107 = arith.maximumf %105, %106 : vector<16x32xf32>
    %108 = arith.addf %101, %107 : vector<16x32xf32>
    %cst_56 = arith.constant dense<0.000000e+00> : vector<16x16xf32>
    %109 = tpu.matmul %108, %3, %cst_56 {dimension_numbers = #tpu.dot_dimension_numbers<[1], [0], [0], [1], [0, 0, 1, 1], [], []>} : vector<16x32xf32>, vector<32x16xf32>, vector<16x16xf32> -> vector<16x16xf32>
    %cst_57 = arith.constant dense<0.000000e+00> : vector<8x16xf32>
    %110 = tpu.matmul %2, %109, %cst_57 {dimension_numbers = #tpu.dot_dimension_numbers<[1], [0], [0], [1], [0, 0, 1, 1], [], []>} : vector<8x16xf32>, vector<16x16xf32>, vector<8x16xf32> -> vector<8x16xf32>
    %c0_58 = arith.constant 0 : index
    %c0_59 = arith.constant 0 : index
    %c4_60 = arith.constant 4 : index
    %c0_61 = arith.constant 0 : index
    %111 = vector.load %arg7[%c0_58, %c0_59, %c4_60, %c0_61] : memref<1x8x8x16xf32, #tpu.memory_space<vmem>>, vector<1x8x1x16xf32>
    %112 = vector.shape_cast %111 : vector<1x8x1x16xf32> to vector<8x16xf32>
    %113 = vector.shape_cast %110 : vector<8x16xf32> to vector<1x8x1x16xf32>
    tpu.vector_store %arg7[%c0_58, %c0_59, %c4_60, %c0_61], %113 {strides = array<i32>} : memref<1x8x8x16xf32, #tpu.memory_space<vmem>>, vector<1x8x1x16xf32>,
    %c0_62 = arith.constant 0 : index
    %c0_63 = arith.constant 0 : index
    %c5 = arith.constant 5 : index
    %c0_64 = arith.constant 0 : index
    %114 = vector.load %arg2[%c0_62, %c0_63, %c5, %c0_64] : memref<1x16x8x64xf32, #tpu.memory_space<vmem>>, vector<1x16x1x64xf32>
    %115 = vector.shape_cast %114 : vector<1x16x1x64xf32> to vector<16x64xf32>
    %116 = vector.extract_strided_slice %115 {offsets = [0, 0], sizes = [16, 32], strides = [1, 1]} : vector<16x64xf32> to vector<16x32xf32>
    %117 = vector.extract_strided_slice %115 {offsets = [0, 32], sizes = [16, 32], strides = [1, 1]} : vector<16x64xf32> to vector<16x32xf32>
    %118 = vector.broadcast %0 : vector<16x1xf32> to vector<16x32xf32>
    %119 = arith.mulf %116, %118 : vector<16x32xf32>
    %120 = vector.broadcast %1 : vector<16x1xf32> to vector<16x32xf32>
    %121 = arith.addf %119, %120 : vector<16x32xf32>
    %cst_65 = arith.constant 0.000000e+00 : f32
    %122 = vector.broadcast %cst_65 : f32 to vector<16x32xf32>
    %123 = arith.maximumf %121, %122 : vector<16x32xf32>
    %124 = vector.broadcast %0 : vector<16x1xf32> to vector<16x32xf32>
    %125 = arith.mulf %117, %124 : vector<16x32xf32>
    %126 = vector.broadcast %1 : vector<16x1xf32> to vector<16x32xf32>
    %127 = arith.addf %125, %126 : vector<16x32xf32>
    %cst_66 = arith.constant 0.000000e+00 : f32
    %128 = vector.broadcast %cst_66 : f32 to vector<16x32xf32>
    %129 = arith.maximumf %127, %128 : vector<16x32xf32>
    %130 = arith.addf %123, %129 : vector<16x32xf32>
    %cst_67 = arith.constant dense<0.000000e+00> : vector<16x16xf32>
    %131 = tpu.matmul %130, %3, %cst_67 {dimension_numbers = #tpu.dot_dimension_numbers<[1], [0], [0], [1], [0, 0, 1, 1], [], []>} : vector<16x32xf32>, vector<32x16xf32>, vector<16x16xf32> -> vector<16x16xf32>
    %cst_68 = arith.constant dense<0.000000e+00> : vector<8x16xf32>
    %132 = tpu.matmul %2, %131, %cst_68 {dimension_numbers = #tpu.dot_dimension_numbers<[1], [0], [0], [1], [0, 0, 1, 1], [], []>} : vector<8x16xf32>, vector<16x16xf32>, vector<8x16xf32> -> vector<8x16xf32>
    %c0_69 = arith.constant 0 : index
    %c0_70 = arith.constant 0 : index
    %c5_71 = arith.constant 5 : index
    %c0_72 = arith.constant 0 : index
    %133 = vector.load %arg7[%c0_69, %c0_70, %c5_71, %c0_72] : memref<1x8x8x16xf32, #tpu.memory_space<vmem>>, vector<1x8x1x16xf32>
    %134 = vector.shape_cast %133 : vector<1x8x1x16xf32> to vector<8x16xf32>
    %135 = vector.shape_cast %132 : vector<8x16xf32> to vector<1x8x1x16xf32>
    tpu.vector_store %arg7[%c0_69, %c0_70, %c5_71, %c0_72], %135 {strides = array<i32>} : memref<1x8x8x16xf32, #tpu.memory_space<vmem>>, vector<1x8x1x16xf32>,
    %c0_73 = arith.constant 0 : index
    %c0_74 = arith.constant 0 : index
    %c6 = arith.constant 6 : index
    %c0_75 = arith.constant 0 : index
    %136 = vector.load %arg2[%c0_73, %c0_74, %c6, %c0_75] : memref<1x16x8x64xf32, #tpu.memory_space<vmem>>, vector<1x16x1x64xf32>
    %137 = vector.shape_cast %136 : vector<1x16x1x64xf32> to vector<16x64xf32>
    %138 = vector.extract_strided_slice %137 {offsets = [0, 0], sizes = [16, 32], strides = [1, 1]} : vector<16x64xf32> to vector<16x32xf32>
    %139 = vector.extract_strided_slice %137 {offsets = [0, 32], sizes = [16, 32], strides = [1, 1]} : vector<16x64xf32> to vector<16x32xf32>
    %140 = vector.broadcast %0 : vector<16x1xf32> to vector<16x32xf32>
    %141 = arith.mulf %138, %140 : vector<16x32xf32>
    %142 = vector.broadcast %1 : vector<16x1xf32> to vector<16x32xf32>
    %143 = arith.addf %141, %142 : vector<16x32xf32>
    %cst_76 = arith.constant 0.000000e+00 : f32
    %144 = vector.broadcast %cst_76 : f32 to vector<16x32xf32>
    %145 = arith.maximumf %143, %144 : vector<16x32xf32>
    %146 = vector.broadcast %0 : vector<16x1xf32> to vector<16x32xf32>
    %147 = arith.mulf %139, %146 : vector<16x32xf32>
    %148 = vector.broadcast %1 : vector<16x1xf32> to vector<16x32xf32>
    %149 = arith.addf %147, %148 : vector<16x32xf32>
    %cst_77 = arith.constant 0.000000e+00 : f32
    %150 = vector.broadcast %cst_77 : f32 to vector<16x32xf32>
    %151 = arith.maximumf %149, %150 : vector<16x32xf32>
    %152 = arith.addf %145, %151 : vector<16x32xf32>
    %cst_78 = arith.constant dense<0.000000e+00> : vector<16x16xf32>
    %153 = tpu.matmul %152, %3, %cst_78 {dimension_numbers = #tpu.dot_dimension_numbers<[1], [0], [0], [1], [0, 0, 1, 1], [], []>} : vector<16x32xf32>, vector<32x16xf32>, vector<16x16xf32> -> vector<16x16xf32>
    %cst_79 = arith.constant dense<0.000000e+00> : vector<8x16xf32>
    %154 = tpu.matmul %2, %153, %cst_79 {dimension_numbers = #tpu.dot_dimension_numbers<[1], [0], [0], [1], [0, 0, 1, 1], [], []>} : vector<8x16xf32>, vector<16x16xf32>, vector<8x16xf32> -> vector<8x16xf32>
    %c0_80 = arith.constant 0 : index
    %c0_81 = arith.constant 0 : index
    %c6_82 = arith.constant 6 : index
    %c0_83 = arith.constant 0 : index
    %155 = vector.load %arg7[%c0_80, %c0_81, %c6_82, %c0_83] : memref<1x8x8x16xf32, #tpu.memory_space<vmem>>, vector<1x8x1x16xf32>
    %156 = vector.shape_cast %155 : vector<1x8x1x16xf32> to vector<8x16xf32>
    %157 = vector.shape_cast %154 : vector<8x16xf32> to vector<1x8x1x16xf32>
    tpu.vector_store %arg7[%c0_80, %c0_81, %c6_82, %c0_83], %157 {strides = array<i32>} : memref<1x8x8x16xf32, #tpu.memory_space<vmem>>, vector<1x8x1x16xf32>,
    %c0_84 = arith.constant 0 : index
    %c0_85 = arith.constant 0 : index
    %c7 = arith.constant 7 : index
    %c0_86 = arith.constant 0 : index
    %158 = vector.load %arg2[%c0_84, %c0_85, %c7, %c0_86] : memref<1x16x8x64xf32, #tpu.memory_space<vmem>>, vector<1x16x1x64xf32>
    %159 = vector.shape_cast %158 : vector<1x16x1x64xf32> to vector<16x64xf32>
    %160 = vector.extract_strided_slice %159 {offsets = [0, 0], sizes = [16, 32], strides = [1, 1]} : vector<16x64xf32> to vector<16x32xf32>
    %161 = vector.extract_strided_slice %159 {offsets = [0, 32], sizes = [16, 32], strides = [1, 1]} : vector<16x64xf32> to vector<16x32xf32>
    %162 = vector.broadcast %0 : vector<16x1xf32> to vector<16x32xf32>
    %163 = arith.mulf %160, %162 : vector<16x32xf32>
    %164 = vector.broadcast %1 : vector<16x1xf32> to vector<16x32xf32>
    %165 = arith.addf %163, %164 : vector<16x32xf32>
    %cst_87 = arith.constant 0.000000e+00 : f32
    %166 = vector.broadcast %cst_87 : f32 to vector<16x32xf32>
    %167 = arith.maximumf %165, %166 : vector<16x32xf32>
    %168 = vector.broadcast %0 : vector<16x1xf32> to vector<16x32xf32>
    %169 = arith.mulf %161, %168 : vector<16x32xf32>
    %170 = vector.broadcast %1 : vector<16x1xf32> to vector<16x32xf32>
    %171 = arith.addf %169, %170 : vector<16x32xf32>
    %cst_88 = arith.constant 0.000000e+00 : f32
    %172 = vector.broadcast %cst_88 : f32 to vector<16x32xf32>
    %173 = arith.maximumf %171, %172 : vector<16x32xf32>
    %174 = arith.addf %167, %173 : vector<16x32xf32>
    %cst_89 = arith.constant dense<0.000000e+00> : vector<16x16xf32>
    %175 = tpu.matmul %174, %3, %cst_89 {dimension_numbers = #tpu.dot_dimension_numbers<[1], [0], [0], [1], [0, 0, 1, 1], [], []>} : vector<16x32xf32>, vector<32x16xf32>, vector<16x16xf32> -> vector<16x16xf32>
    %cst_90 = arith.constant dense<0.000000e+00> : vector<8x16xf32>
    %176 = tpu.matmul %2, %175, %cst_90 {dimension_numbers = #tpu.dot_dimension_numbers<[1], [0], [0], [1], [0, 0, 1, 1], [], []>} : vector<8x16xf32>, vector<16x16xf32>, vector<8x16xf32> -> vector<8x16xf32>
    %c0_91 = arith.constant 0 : index
    %c0_92 = arith.constant 0 : index
    %c7_93 = arith.constant 7 : index
    %c0_94 = arith.constant 0 : index
    %177 = vector.load %arg7[%c0_91, %c0_92, %c7_93, %c0_94] : memref<1x8x8x16xf32, #tpu.memory_space<vmem>>, vector<1x8x1x16xf32>
    %178 = vector.shape_cast %177 : vector<1x8x1x16xf32> to vector<8x16xf32>
    %179 = vector.shape_cast %176 : vector<8x16xf32> to vector<1x8x1x16xf32>
    tpu.vector_store %arg7[%c0_91, %c0_92, %c7_93, %c0_94], %179 {strides = array<i32>} : memref<1x8x8x16xf32, #tpu.memory_space<vmem>>, vector<1x8x1x16xf32>,
    return
  }
  func.func @transform_0(%arg0: i32, %arg1: i32) -> (i32, i32, i32, i32) {
    %c0_i32 = arith.constant 0 : i32
    %c0_i32_0 = arith.constant 0 : i32
    %c0_i32_1 = arith.constant 0 : i32
    return %arg0, %c0_i32, %arg1, %c0_i32_0 : i32, i32, i32, i32
  }
  func.func @transform_1(%arg0: i32, %arg1: i32) -> (i32, i32) {
    %c0_i32 = arith.constant 0 : i32
    %c0_i32_0 = arith.constant 0 : i32
    %c0_i32_1 = arith.constant 0 : i32
    return %c0_i32, %c0_i32_0 : i32, i32
  }
  func.func @transform_2(%arg0: i32, %arg1: i32) -> (i32, i32) {
    %c0_i32 = arith.constant 0 : i32
    %c0_i32_0 = arith.constant 0 : i32
    %c0_i32_1 = arith.constant 0 : i32
    return %c0_i32, %c0_i32_0 : i32, i32
  }
  func.func @transform_3(%arg0: i32, %arg1: i32) -> (i32, i32) {
    %c0_i32 = arith.constant 0 : i32
    %c0_i32_0 = arith.constant 0 : i32
    %c0_i32_1 = arith.constant 0 : i32
    return %c0_i32, %c0_i32_0 : i32, i32
  }
  func.func @transform_4(%arg0: i32, %arg1: i32) -> (i32, i32) {
    %c0_i32 = arith.constant 0 : i32
    %c0_i32_0 = arith.constant 0 : i32
    %c0_i32_1 = arith.constant 0 : i32
    return %c0_i32, %c0_i32_0 : i32, i32
  }
  func.func @transform_5(%arg0: i32, %arg1: i32) -> (i32, i32, i32, i32) {
    %c0_i32 = arith.constant 0 : i32
    %c0_i32_0 = arith.constant 0 : i32
    %c0_i32_1 = arith.constant 0 : i32
    return %arg0, %c0_i32, %arg1, %c0_i32_0 : i32, i32, i32, i32
  }
}

</mosaic_0001>

<llo_original>
// kernel: transition_forward.2
$region0: #{transition_forward.2}
  #allocation0 [shape = 'u32[]', space=smem, size = 0x4, offset = 0x4, fixed_abs, tag = 'smem constant byte address 0x4 - core index']
  #allocation1 [shape = 'u32[144,128]{1,0:T(1,128)}', space=vmem, size = 0x12000, scoped, tag = 'internal scratch']
  #allocation2 [shape = 'f32[16,64]{1,0:T(8,128)}', space=vmem, size = 0x2000, scoped, tag = 'scratch operand']
  #allocation3 [shape = 'f32[16,64]{1,0:T(8,128)}', space=vmem, size = 0x2000, scoped, tag = 'scratch operand']
  %s0 = inlined_call_operand.vmem [shape: f32[2,16,16,64], index: 0, kind: input, shape index: {}]
  %s1 = inlined_call_operand.vmem [shape: f32[16,1], index: 1, kind: input, shape index: {}]
  %s2 = inlined_call_operand.vmem [shape: f32[16,1], index: 2, kind: input, shape index: {}]
  %s3 = inlined_call_operand.vmem [shape: f32[16,1], index: 3, kind: output, shape index: {0}]
  %s4 = inlined_call_operand.vmem [shape: f32[16,1], index: 4, kind: output, shape index: {1}]
  %5 = xla_tuple %s3, %s4
  %s6 = sld [smem:[#allocation0]]
  $region99: #{transition_forward.2} parent=0
    _
  %s8 = ssub.s32 1, %s6
  %s9 = scalar_select 0, %s8, %s6
  $region1: #{transition_forward.2} parent=0
    #allocation4 [shape = 'u8[131072]{0}', space=vmem, size = 0x20000, scoped, tag = 'input window, operand 0']
    loop: start=0, step=1, limit=6
    $region2: #{transition_forward.2} parent=1 // loop_pre_header
      _
    $region3: #{transition_forward.2} parent=1 // loop_header
      %s11 = sphi 0, %s15
      %p12 = scmp.ge.s32.totalorder %s11, 6
      %s18 = sphi 0, %s30
      %s19 = sphi 0, %s26
      %s20 = sphi 0, %s18
      %s21 = sphi 0, %s19
      %s22 = sphi 0, %s20
      %s23 = sphi 0, %s21
      %s35 = sphi 0, %s37
      %s38 = sphi 0, %s35
      %s39 = sphi 0, %s38
      %s55 = sphi 0, %s39
      %s59 = sphi 0, %s59
      %s61 = sphi 0, %s59
      %s62 = sphi 0, %s61
      %s76 = sphi 0, %s62
      %s80 = sphi 0, %s80
      %s82 = sphi 0, %s80
      %s83 = sphi 0, %s82
      %s97 = sphi 0, %s83
      %s101 = sphi 0, %s101
      %s103 = sphi 0, %s101
      %s104 = sphi 0, %s103
      %s118 = sphi 0, %s104
      %s122 = sphi 0, %s122
      %s124 = sphi 0, %s122
      %s125 = sphi 0, %s124
      %s139 = sphi 0, %s125
    $region4: #{transition_forward.2} parent=1 // loop_header_branch
      %14 = sbr.rel (%p12) target = $region8
    $region5: #{transition_forward.2} parent=1 // loop_body
      %s16 = ssub.s32 %s11, 1
      %s17 = ssub.s32 %s11, 2
      %s24 = sadd.s32 1, %s19
      %p25 = scmp.ge.s32.totalorder %s24, 2
      %s26 = scalar_select %p25, 0, %s24
      %s27 = sadd.s32 1, %s18
      %s28 = scalar_select %p25, %s27, %s18
      %p29 = scmp.ge.s32.totalorder %s28, 2
      %s30 = scalar_select %p29, 0, %s28
      %s31 = ssub.s32 %s18, %s30
      %s32 = ssub.s32 %s19, %s26
      %s33 = sor.u32 %s31, %s32
      %p34 = scmp.eq.s32.totalorder %s33, 0
      %s36 = sadd.s32 %s35, 1
      %s37 = scalar_select %p34, %s35, %s36
      %p40 = pneg %p34
      %p41 = scmp.eq.s32.totalorder %s11, 3
      %p42 = por %p40, %p41
      %p43 = scmp.ne.s32.totalorder %s35, %s38
      %p44 = scmp.eq.s32.totalorder %s11, 0
      %p45 = por %p43, %p44
      %p46 = scmp.ne.s32.totalorder %s35, %s38
      %p47 = scmp.eq.s32.totalorder %s16, 3
      %p48 = por %p46, %p47
      %p49 = scmp.ne.s32.totalorder %s38, %s39
      %p50 = scmp.eq.s32.totalorder %s16, 0
      %p51 = por %p49, %p50
      %p52 = scmp.ne.s32.totalorder %s38, %s39
      %p53 = scmp.eq.s32.totalorder %s17, 3
      %p54 = por %p52, %p53
      %p56 = scmp.ne.s32.totalorder %s39, %s55
      %p57 = scmp.eq.s32.totalorder %s17, 0
      %p58 = por %p56, %p57
      %s60 = sadd.s32 %s59, 1
      %p63 = scmp.eq.s32.totalorder %s11, 3
      %p64 = scmp.ne.s32.totalorder %s59, %s61
      %p65 = scmp.eq.s32.totalorder %s11, 0
      %p66 = por %p64, %p65
      %p67 = scmp.ne.s32.totalorder %s59, %s61
      %p68 = scmp.eq.s32.totalorder %s16, 3
      %p69 = por %p67, %p68
      %p70 = scmp.ne.s32.totalorder %s61, %s62
      %p71 = scmp.eq.s32.totalorder %s16, 0
      %p72 = por %p70, %p71
      %p73 = scmp.ne.s32.totalorder %s61, %s62
      %p74 = scmp.eq.s32.totalorder %s17, 3
      %p75 = por %p73, %p74
      %p77 = scmp.ne.s32.totalorder %s62, %s76
      %p78 = scmp.eq.s32.totalorder %s17, 0
      %p79 = por %p77, %p78
      %s81 = sadd.s32 %s80, 1
      %p84 = scmp.eq.s32.totalorder %s11, 3
      %p85 = scmp.ne.s32.totalorder %s80, %s82
      %p86 = scmp.eq.s32.totalorder %s11, 0
      %p87 = por %p85, %p86
      %p88 = scmp.ne.s32.totalorder %s80, %s82
      %p89 = scmp.eq.s32.totalorder %s16, 3
      %p90 = por %p88, %p89
      %p91 = scmp.ne.s32.totalorder %s82, %s83
      %p92 = scmp.eq.s32.totalorder %s16, 0
      %p93 = por %p91, %p92
      %p94 = scmp.ne.s32.totalorder %s82, %s83
      %p95 = scmp.eq.s32.totalorder %s17, 3
      %p96 = por %p94, %p95
      %p98 = scmp.ne.s32.totalorder %s83, %s97
      %p99 = scmp.eq.s32.totalorder %s17, 0
      %p100 = por %p98, %p99
      %s102 = sadd.s32 %s101, 1
      %p105 = scmp.eq.s32.totalorder %s11, 3
      %p106 = scmp.ne.s32.totalorder %s101, %s103
      %p107 = scmp.eq.s32.totalorder %s11, 0
      %p108 = por %p106, %p107
      %p109 = scmp.ne.s32.totalorder %s101, %s103
      %p110 = scmp.eq.s32.totalorder %s16, 3
      %p111 = por %p109, %p110
      %p112 = scmp.ne.s32.totalorder %s103, %s104
      %p113 = scmp.eq.s32.totalorder %s16, 0
      %p114 = por %p112, %p113
      %p115 = scmp.ne.s32.totalorder %s103, %s104
      %p116 = scmp.eq.s32.totalorder %s17, 3
      %p117 = por %p115, %p116
      %p119 = scmp.ne.s32.totalorder %s104, %s118
      %p120 = scmp.eq.s32.totalorder %s17, 0
      %p121 = por %p119, %p120
      %s123 = sadd.s32 %s122, 1
      %p126 = scmp.eq.s32.totalorder %s11, 3
      %p127 = scmp.ne.s32.totalorder %s122, %s124
      %p128 = scmp.eq.s32.totalorder %s11, 0
      %p129 = por %p127, %p128
      %p130 = scmp.ne.s32.totalorder %s122, %s124
      %p131 = scmp.eq.s32.totalorder %s16, 3
      %p132 = por %p130, %p131
      %p133 = scmp.ne.s32.totalorder %s124, %s125
      %p134 = scmp.eq.s32.totalorder %s16, 0
      %p135 = por %p133, %p134
      %p136 = scmp.ne.s32.totalorder %s124, %s125
      %p137 = scmp.eq.s32.totalorder %s17, 3
      %p138 = por %p136, %p137
      %p140 = scmp.ne.s32.totalorder %s125, %s139
      %p141 = scmp.eq.s32.totalorder %s17, 0
      %p142 = por %p140, %p141
      %p143 = scmp.le.s32.totalorder 1, %s11
      %p144 = scmp.lt.s32.totalorder %s11, 5
      %p145 = pnand %p143, %p144
      %p146 = pneg %p145
      // Predicated region
      $region9: #{transition_forward.2} parent=5 // pred_check
        _
      $region10: #{transition_forward.2} parent=5 // pred_check_branch
        %148 = sbr.rel (%p145) target = $region12
      $region11: #{transition_forward.2} parent=5 // pred_region
        %s149 = ssub.s32 %s11, 1
        // Predicated region
        $region13: #{transition_forward.2} parent=11 // pred_check
          %p150 = pneg %p72
        $region14: #{transition_forward.2} parent=11 // pred_check_branch
          %152 = sbr.rel (%p150) target = $region16
        $region15: #{transition_forward.2} parent=11 // pred_region
          _
        $region16: #{transition_forward.2} parent=11 // pred_fallthru
          _
        // Predicated region
        $region17: #{transition_forward.2} parent=11 // pred_check
          %p153 = pneg %p93
        $region18: #{transition_forward.2} parent=11 // pred_check_branch
          %155 = sbr.rel (%p153) target = $region20
        $region19: #{transition_forward.2} parent=11 // pred_region
          _
        $region20: #{transition_forward.2} parent=11 // pred_fallthru
          _
      $region12: #{transition_forward.2} parent=5 // pred_fallthru
        _
      %p156 = scmp.lt.s32.totalorder %s11, 4
      // Predicated region
      $region21: #{transition_forward.2} parent=5 // pred_check
        %p157 = pneg %p156
      $region22: #{transition_forward.2} parent=5 // pred_check_branch
        %159 = sbr.rel (%p157) target = $region24
      $region23: #{transition_forward.2} parent=5 // pred_region
        // Predicated region
        $region25: #{transition_forward.2} parent=23 // pred_check
          %p160 = pneg %p45
        $region26: #{transition_forward.2} parent=23 // pred_check_branch
          %162 = sbr.rel (%p160) target = $region28
        $region27: #{transition_forward.2} parent=23 // pred_region
          %s163 = sand.u32 %s35, 1
          %s164 = sand.u32 %s35, 1
          %s165 = smul.addr %s164, 128
          %s166 = scalar_lea.vmem [#allocation4], %s165
          %s167 = smul.addr %s18, 32
          %s168 = sadd.s32 %s19, %s167
          %s169 = smul.addr %s168, 8
          %s170 = scalar_lea.vmem %s0, %s169
          // Predicated region
          $region29: #{transition_forward.2} parent=27 // pred_check
            _
          $region30: #{transition_forward.2} parent=27 // pred_check_branch
            %172 = sbr.rel (0) target = $region32
          $region31: #{transition_forward.2} parent=27 // pred_region
            // Predicated region
            $region33: #{transition_forward.2} parent=31 // pred_check
              _
            $region34: #{transition_forward.2} parent=31 // pred_check_branch
              %174 = sbr.rel (0) target = $region36
            $region35: #{transition_forward.2} parent=31 // pred_region
              // Predicated region
              $region48: #{transition_forward.2} parent=35 // pred_check
                _
              $region49: #{transition_forward.2} parent=35 // pred_check_branch
                %219 = sbr.rel (0) target = $region51
              $region50: #{transition_forward.2} parent=35 // pred_region
                loop: start=0, step=1, limit=1
                $region52: #{transition_forward.2} parent=50 // loop_pre_header
                  _
                $region53: #{transition_forward.2} parent=50 // loop_header
                  %s221 = sphi 0, %s225
                  %p222 = scmp.ge.s32.totalorder %s221, 1
                  %s226 = sphi %s170, %s170
                  %s227 = sphi %s166, %s166
                $region54: #{transition_forward.2} parent=50 // loop_header_branch
                  %224 = sbr.rel (%p222) target = $region58
                $region55: #{transition_forward.2} parent=50 // loop_body
                  %v228 = vld [vmem:[%s226] sm:$0xff]
                  %229 = vst [vmem:[%s227] sm:$0xff] %v228
                  %v230 = vld [vmem:[%s226 + $0x10] sm:$0xff]
                  %231 = vst [vmem:[%s227 + $0x8] sm:$0xff] %v230
                  %v232 = vld [vmem:[%s226 + $0x20] sm:$0xff]
                  %233 = vst [vmem:[%s227 + $0x10] sm:$0xff] %v232
                  %v234 = vld [vmem:[%s226 + $0x30] sm:$0xff]
                  %235 = vst [vmem:[%s227 + $0x18] sm:$0xff] %v234
                  %v236 = vld [vmem:[%s226 + $0x40] sm:$0xff]
                  %237 = vst [vmem:[%s227 + $0x20] sm:$0xff] %v236
                  %v238 = vld [vmem:[%s226 + $0x50] sm:$0xff]
                  %239 = vst [vmem:[%s227 + $0x28] sm:$0xff] %v238
                  %v240 = vld [vmem:[%s226 + $0x60] sm:$0xff]
                  %241 = vst [vmem:[%s227 + $0x30] sm:$0xff] %v240
                  %v242 = vld [vmem:[%s226 + $0x70] sm:$0xff]
                  %243 = vst [vmem:[%s227 + $0x38] sm:$0xff] %v242
                  %v244 = vld [vmem:[%s226 + $0x80] sm:$0xff]
                  %245 = vst [vmem:[%s227 + $0x40] sm:$0xff] %v244
                  %v246 = vld [vmem:[%s226 + $0x90] sm:$0xff]
                  %247 = vst [vmem:[%s227 + $0x48] sm:$0xff] %v246
                  %v248 = vld [vmem:[%s226 + $0xa0] sm:$0xff]
                  %249 = vst [vmem:[%s227 + $0x50] sm:$0xff] %v248
                  %v250 = vld [vmem:[%s226 + $0xb0] sm:$0xff]
                  %251 = vst [vmem:[%s227 + $0x58] sm:$0xff] %v250
                  %v252 = vld [vmem:[%s226 + $0xc0] sm:$0xff]
                  %253 = vst [vmem:[%s227 + $0x60] sm:$0xff] %v252
                  %v254 = vld [vmem:[%s226 + $0xd0] sm:$0xff]
                  %255 = vst [vmem:[%s227 + $0x68] sm:$0xff] %v254
                  %v256 = vld [vmem:[%s226 + $0xe0] sm:$0xff]
                  %257 = vst [vmem:[%s227 + $0x70] sm:$0xff] %v256
                  %v258 = vld [vmem:[%s226 + $0xf0] sm:$0xff]
                  %259 = vst [vmem:[%s227 + $0x78] sm:$0xff] %v258
                $region56: #{transition_forward.2} parent=50 // loop_footer
                  %s225 = sadd.s32 1, %s221
                $region57: #{transition_forward.2} parent=50 // loop_footer_branch
                  %220 = sbr.rel target = $region53
                $region58: #{transition_forward.2} parent=50 // loop_exit
                  _
              $region51: #{transition_forward.2} parent=35 // pred_fallthru
                _
              // Predicated region
              $region59: #{transition_forward.2} parent=35 // pred_check
                _
              $region60: #{transition_forward.2} parent=35 // pred_check_branch
                %261 = sbr.rel target = $region62
              $region61: #{transition_forward.2} parent=35 // pred_region
                _
              $region62: #{transition_forward.2} parent=35 // pred_fallthru
                _
            $region36: #{transition_forward.2} parent=31 // pred_fallthru
              _
            // Predicated region
            $region37: #{transition_forward.2} parent=31 // pred_check
              _
            $region38: #{transition_forward.2} parent=31 // pred_check_branch
              %176 = sbr.rel target = $region40
            $region39: #{transition_forward.2} parent=31 // pred_region
              loop: start=0, step=1, limit=1
              $region41: #{transition_forward.2} parent=39 // loop_pre_header
                _
              $region42: #{transition_forward.2} parent=39 // loop_header
                %s179 = sphi 0, %s183
                %p180 = scmp.ge.s32.totalorder %s179, 1
                %s184 = sphi %s170, %s170
                %s185 = sphi %s166, %s166
              $region43: #{transition_forward.2} parent=39 // loop_header_branch
                %182 = sbr.rel (%p180) target = $region47
              $region44: #{transition_forward.2} parent=39 // loop_body
                %v186 = vld [vmem:[%s184] sm:$0xff]
                %187 = vst [vmem:[%s185] sm:$0xff] %v186
                %v188 = vld [vmem:[%s184 + $0x10] sm:$0xff]
                %189 = vst [vmem:[%s185 + $0x8] sm:$0xff] %v188
                %v190 = vld [vmem:[%s184 + $0x20] sm:$0xff]
                %191 = vst [vmem:[%s185 + $0x10] sm:$0xff] %v190
                %v192 = vld [vmem:[%s184 + $0x30] sm:$0xff]
                %193 = vst [vmem:[%s185 + $0x18] sm:$0xff] %v192
                %v194 = vld [vmem:[%s184 + $0x40] sm:$0xff]
                %195 = vst [vmem:[%s185 + $0x20] sm:$0xff] %v194
                %v196 = vld [vmem:[%s184 + $0x50] sm:$0xff]
                %197 = vst [vmem:[%s185 + $0x28] sm:$0xff] %v196
                %v198 = vld [vmem:[%s184 + $0x60] sm:$0xff]
                %199 = vst [vmem:[%s185 + $0x30] sm:$0xff] %v198
                %v200 = vld [vmem:[%s184 + $0x70] sm:$0xff]
                %201 = vst [vmem:[%s185 + $0x38] sm:$0xff] %v200
                %v202 = vld [vmem:[%s184 + $0x80] sm:$0xff]
                %203 = vst [vmem:[%s185 + $0x40] sm:$0xff] %v202
                %v204 = vld [vmem:[%s184 + $0x90] sm:$0xff]
                %205 = vst [vmem:[%s185 + $0x48] sm:$0xff] %v204
                %v206 = vld [vmem:[%s184 + $0xa0] sm:$0xff]
                %207 = vst [vmem:[%s185 + $0x50] sm:$0xff] %v206
                %v208 = vld [vmem:[%s184 + $0xb0] sm:$0xff]
                %209 = vst [vmem:[%s185 + $0x58] sm:$0xff] %v208
                %v210 = vld [vmem:[%s184 + $0xc0] sm:$0xff]
                %211 = vst [vmem:[%s185 + $0x60] sm:$0xff] %v210
                %v212 = vld [vmem:[%s184 + $0xd0] sm:$0xff]
                %213 = vst [vmem:[%s185 + $0x68] sm:$0xff] %v212
                %v214 = vld [vmem:[%s184 + $0xe0] sm:$0xff]
                %215 = vst [vmem:[%s185 + $0x70] sm:$0xff] %v214
                %v216 = vld [vmem:[%s184 + $0xf0] sm:$0xff]
                %217 = vst [vmem:[%s185 + $0x78] sm:$0xff] %v216
              $region45: #{transition_forward.2} parent=39 // loop_footer
                %s183 = sadd.s32 1, %s179
              $region46: #{transition_forward.2} parent=39 // loop_footer_branch
                %178 = sbr.rel target = $region42
              $region47: #{transition_forward.2} parent=39 // loop_exit
                _
            $region40: #{transition_forward.2} parent=31 // pred_fallthru
              _
          $region32: #{transition_forward.2} parent=27 // pred_fallthru
            _
          %262 = vnop
        $region28: #{transition_forward.2} parent=23 // pred_fallthru
          _
      $region24: #{transition_forward.2} parent=5 // pred_fallthru
        _
      %p263 = scmp.le.s32.totalorder 1, %s11
      %p264 = scmp.lt.s32.totalorder %s11, 5
      %p265 = pnand %p263, %p264
      %p266 = pneg %p265
      // Predicated region
      $region63: #{transition_forward.2} parent=5 // pred_check
        _
      $region64: #{transition_forward.2} parent=5 // pred_check_branch
        %268 = sbr.rel (%p265) target = $region66
      $region65: #{transition_forward.2} parent=5 // pred_region
        %s269 = ssub.s32 %s11, 1
        %s270 = sand.u32 %s38, 1
        %s271 = sand.u32 %s38, 1
        %s272 = smul.addr %s271, 128
        %s273 = scalar_lea.vmem [#allocation4], %s272
        // Predicated region
        $region67: #{transition_forward.2} parent=65 // pred_check
          %p274 = pneg %p51
        $region68: #{transition_forward.2} parent=65 // pred_check_branch
          %276 = sbr.rel (%p274) target = $region70
        $region69: #{transition_forward.2} parent=65 // pred_region
          _
        $region70: #{transition_forward.2} parent=65 // pred_fallthru
          _
        %s277 = sand.u32 %s38, 1
        %s278 = sand.u32 %s38, 1
        %s279 = smul.addr %s278, 128
        %s280 = scalar_lea.vmem [#allocation4], %s279
        %p281 = pneg %p51
        %p282 = pneg %p48
        %p283 = pneg %p72
        %p284 = pneg %p69
        %p285 = pneg %p93
        %p286 = pneg %p90
        %p287 = pneg %p114
        %p288 = pneg %p111
        %p289 = pneg %p135
        %p290 = pneg %p132
        %p291 = scmp.eq.s32.totalorder %s20, 0
        %p292 = scmp.eq.s32.totalorder %s21, 0
        %p293 = pnand %p291, %p292
        %p294 = pneg %p293
        // Predicated region
        $region71: #{transition_forward.2} parent=65 // pred_check
          _
        $region72: #{transition_forward.2} parent=65 // pred_check_branch
          %296 = sbr.rel (%p293) target = $region74
        $region73: #{transition_forward.2} parent=65 // pred_region
          %vm297 = vcmask 523264
          %298 = vst.msk [vmem:[#allocation2] sm:$0xff] %vm297, 0.0
          %299 = vst.msk [vmem:[#allocation2 + $0x8] sm:$0xff] %vm297, 0.0
          %300 = vst.msk [vmem:[#allocation3] sm:$0xff] %vm297, 0.0
          %301 = vst.msk [vmem:[#allocation3 + $0x8] sm:$0xff] %vm297, 0.0
        $region74: #{transition_forward.2} parent=65 // pred_fallthru
          _
        %v302 = vld [vmem:[%s273] sm:$0x1]
        %v303 = vld [vmem:[%s273 + $0x8] sm:$0x1]
        %v304 = vld [vmem:[%s273 + $0x10] sm:$0x1]
        %v305 = vld [vmem:[%s273 + $0x18] sm:$0x1]
        %v306 = vld [vmem:[%s273 + $0x20] sm:$0x1]
        %v307 = vld [vmem:[%s273 + $0x28] sm:$0x1]
        %v308 = vld [vmem:[%s273 + $0x30] sm:$0x1]
        %v309 = vld [vmem:[%s273 + $0x38] sm:$0x1]
        %v310 = vld [vmem:[%s273 + $0x40] sm:$0x1]
        %v311 = vld [vmem:[%s273 + $0x48] sm:$0x1]
        %v312 = vld [vmem:[%s273 + $0x50] sm:$0x1]
        %v313 = vld [vmem:[%s273 + $0x58] sm:$0x1]
        %v314 = vld [vmem:[%s273 + $0x60] sm:$0x1]
        %v315 = vld [vmem:[%s273 + $0x68] sm:$0x1]
        %v316 = vld [vmem:[%s273 + $0x70] sm:$0x1]
        %v317 = vld [vmem:[%s273 + $0x78] sm:$0x1]
        %v318 = vld [vmem:[#allocation2] sm:$0xff]
        %v319 = vld [vmem:[#allocation2 + $0x8] sm:$0xff]
        %v336 = vrot.slane %v303, 7
        %vm337 = vcmask 1041409
        %v338 = vsel %vm337, %v336, %v302
        %v339 = vrot.slane %v304, 6
        %vm340 = vcmask 1042434
        %v341 = vsel %vm340, %v339, %v338
        %v342 = vrot.slane %v305, 5
        %vm343 = vcmask 1043459
        %v344 = vsel %vm343, %v342, %v341
        %v345 = vrot.slane %v306, 4
        %vm346 = vcmask 1044484
        %v347 = vsel %vm346, %v345, %v344
        %v348 = vrot.slane %v307, 3
        %vm349 = vcmask 1045509
        %v350 = vsel %vm349, %v348, %v347
        %v351 = vrot.slane %v308, 2
        %vm352 = vcmask 1046534
        %v353 = vsel %vm352, %v351, %v350
        %v354 = vrot.slane %v309, 1
        %vm355 = vcmask 1047559
        %v356 = vsel %vm355, %v354, %v353
        %v357 = vrot.slane %v311, 7
        %v358 = vsel %vm337, %v357, %v310
        %v359 = vrot.slane %v312, 6
        %v360 = vsel %vm340, %v359, %v358
        %v361 = vrot.slane %v313, 5
        %v362 = vsel %vm343, %v361, %v360
        %v363 = vrot.slane %v314, 4
        %v364 = vsel %vm346, %v363, %v362
        %v365 = vrot.slane %v315, 3
        %v366 = vsel %vm349, %v365, %v364
        %v367 = vrot.slane %v316, 2
        %v368 = vsel %vm352, %v367, %v366
        %v369 = vrot.slane %v317, 1
        %v370 = vsel %vm355, %v369, %v368
        %v373 = vadd.f32 %v318, %v356
        %v374 = vadd.f32 %v319, %v370
        %vm375 = vcmask 523264
        %376 = vst.msk [vmem:[#allocation2] sm:$0xff] %vm375, %v373
        %377 = vst.msk [vmem:[#allocation2 + $0x8] sm:$0xff] %vm375, %v374
        %v378 = vld [vmem:[#allocation3] sm:$0xff]
        %v379 = vld [vmem:[#allocation3 + $0x8] sm:$0xff]
        %v380 = vmul.f32 %v302, %v302
        %v381 = vmul.f32 %v303, %v303
        %v382 = vmul.f32 %v304, %v304
        %v383 = vmul.f32 %v305, %v305
        %v384 = vmul.f32 %v306, %v306
        %v385 = vmul.f32 %v307, %v307
        %v386 = vmul.f32 %v308, %v308
        %v387 = vmul.f32 %v309, %v309
        %v388 = vmul.f32 %v310, %v310
        %v389 = vmul.f32 %v311, %v311
        %v390 = vmul.f32 %v312, %v312
        %v391 = vmul.f32 %v313, %v313
        %v392 = vmul.f32 %v314, %v314
        %v393 = vmul.f32 %v315, %v315
        %v394 = vmul.f32 %v316, %v316
        %v395 = vmul.f32 %v317, %v317
        %v412 = vrot.slane %v381, 7
        %v413 = vsel %vm337, %v412, %v380
        %v414 = vrot.slane %v382, 6
        %v415 = vsel %vm340, %v414, %v413
        %v416 = vrot.slane %v383, 5
        %v417 = vsel %vm343, %v416, %v415
        %v418 = vrot.slane %v384, 4
        %v419 = vsel %vm346, %v418, %v417
        %v420 = vrot.slane %v385, 3
        %v421 = vsel %vm349, %v420, %v419
        %v422 = vrot.slane %v386, 2
        %v423 = vsel %vm352, %v422, %v421
        %v424 = vrot.slane %v387, 1
        %v425 = vsel %vm355, %v424, %v423
        %v426 = vrot.slane %v389, 7
        %v427 = vsel %vm337, %v426, %v388
        %v428 = vrot.slane %v390, 6
        %v429 = vsel %vm340, %v428, %v427
        %v430 = vrot.slane %v391, 5
        %v431 = vsel %vm343, %v430, %v429
        %v432 = vrot.slane %v392, 4
        %v433 = vsel %vm346, %v432, %v431
        %v434 = vrot.slane %v393, 3
        %v435 = vsel %vm349, %v434, %v433
        %v436 = vrot.slane %v394, 2
        %v437 = vsel %vm352, %v436, %v435
        %v438 = vrot.slane %v395, 1
        %v439 = vsel %vm355, %v438, %v437
        %v442 = vadd.f32 %v378, %v425
        %v443 = vadd.f32 %v379, %v439
        %444 = vst.msk [vmem:[#allocation3] sm:$0xff] %vm375, %v442
        %445 = vst.msk [vmem:[#allocation3 + $0x8] sm:$0xff] %vm375, %v443
        %v446 = vld [vmem:[%s273 + $0x1] sm:$0x1]
        %v447 = vld [vmem:[%s273 + $0x9] sm:$0x1]
        %v448 = vld [vmem:[%s273 + $0x11] sm:$0x1]
        %v449 = vld [vmem:[%s273 + $0x19] sm:$0x1]
        %v450 = vld [vmem:[%s273 + $0x21] sm:$0x1]
        %v451 = vld [vmem:[%s273 + $0x29] sm:$0x1]
        %v452 = vld [vmem:[%s273 + $0x31] sm:$0x1]
        %v453 = vld [vmem:[%s273 + $0x39] sm:$0x1]
        %v454 = vld [vmem:[%s273 + $0x41] sm:$0x1]
        %v455 = vld [vmem:[%s273 + $0x49] sm:$0x1]
        %v456 = vld [vmem:[%s273 + $0x51] sm:$0x1]
        %v457 = vld [vmem:[%s273 + $0x59] sm:$0x1]
        %v458 = vld [vmem:[%s273 + $0x61] sm:$0x1]
        %v459 = vld [vmem:[%s273 + $0x69] sm:$0x1]
        %v460 = vld [vmem:[%s273 + $0x71] sm:$0x1]
        %v461 = vld [vmem:[%s273 + $0x79] sm:$0x1]
        %v462 = vld [vmem:[#allocation2] sm:$0xff]
        %v463 = vld [vmem:[#allocation2 + $0x8] sm:$0xff]
        %v480 = vrot.slane %v447, 7
        %v481 = vsel %vm337, %v480, %v446
        %v482 = vrot.slane %v448, 6
        %v483 = vsel %vm340, %v482, %v481
        %v484 = vrot.slane %v449, 5
        %v485 = vsel %vm343, %v484, %v483
        %v486 = vrot.slane %v450, 4
        %v487 = vsel %vm346, %v486, %v485
        %v488 = vrot.slane %v451, 3
        %v489 = vsel %vm349, %v488, %v487
        %v490 = vrot.slane %v452, 2
        %v491 = vsel %vm352, %v490, %v489
        %v492 = vrot.slane %v453, 1
        %v493 = vsel %vm355, %v492, %v491
        %v494 = vrot.slane %v455, 7
        %v495 = vsel %vm337, %v494, %v454
        %v496 = vrot.slane %v456, 6
        %v497 = vsel %vm340, %v496, %v495
        %v498 = vrot.slane %v457, 5
        %v499 = vsel %vm343, %v498, %v497
        %v500 = vrot.slane %v458, 4
        %v501 = vsel %vm346, %v500, %v499
        %v502 = vrot.slane %v459, 3
        %v503 = vsel %vm349, %v502, %v501
        %v504 = vrot.slane %v460, 2
        %v505 = vsel %vm352, %v504, %v503
        %v506 = vrot.slane %v461, 1
        %v507 = vsel %vm355, %v506, %v505
        %v510 = vadd.f32 %v462, %v493
        %v511 = vadd.f32 %v463, %v507
        %512 = vst.msk [vmem:[#allocation2] sm:$0xff] %vm375, %v510
        %513 = vst.msk [vmem:[#allocation2 + $0x8] sm:$0xff] %vm375, %v511
        %v514 = vld [vmem:[#allocation3] sm:$0xff]
        %v515 = vld [vmem:[#allocation3 + $0x8] sm:$0xff]
        %v516 = vmul.f32 %v446, %v446
        %v517 = vmul.f32 %v447, %v447
        %v518 = vmul.f32 %v448, %v448
        %v519 = vmul.f32 %v449, %v449
        %v520 = vmul.f32 %v450, %v450
        %v521 = vmul.f32 %v451, %v451
        %v522 = vmul.f32 %v452, %v452
        %v523 = vmul.f32 %v453, %v453
        %v524 = vmul.f32 %v454, %v454
        %v525 = vmul.f32 %v455, %v455
        %v526 = vmul.f32 %v456, %v456
        %v527 = vmul.f32 %v457, %v457
        %v528 = vmul.f32 %v458, %v458
        %v529 = vmul.f32 %v459, %v459
        %v530 = vmul.f32 %v460, %v460
        %v531 = vmul.f32 %v461, %v461
        %v548 = vrot.slane %v517, 7
        %v549 = vsel %vm337, %v548, %v516
        %v550 = vrot.slane %v518, 6
        %v551 = vsel %vm340, %v550, %v549
        %v552 = vrot.slane %v519, 5
        %v553 = vsel %vm343, %v552, %v551
        %v554 = vrot.slane %v520, 4
        %v555 = vsel %vm346, %v554, %v553
        %v556 = vrot.slane %v521, 3
        %v557 = vsel %vm349, %v556, %v555
        %v558 = vrot.slane %v522, 2
        %v559 = vsel %vm352, %v558, %v557
        %v560 = vrot.slane %v523, 1
        %v561 = vsel %vm355, %v560, %v559
        %v562 = vrot.slane %v525, 7
        %v563 = vsel %vm337, %v562, %v524
        %v564 = vrot.slane %v526, 6
        %v565 = vsel %vm340, %v564, %v563
        %v566 = vrot.slane %v527, 5
        %v567 = vsel %vm343, %v566, %v565
        %v568 = vrot.slane %v528, 4
        %v569 = vsel %vm346, %v568, %v567
        %v570 = vrot.slane %v529, 3
        %v571 = vsel %vm349, %v570, %v569
        %v572 = vrot.slane %v530, 2
        %v573 = vsel %vm352, %v572, %v571
        %v574 = vrot.slane %v531, 1
        %v575 = vsel %vm355, %v574, %v573
        %v578 = vadd.f32 %v514, %v561
        %v579 = vadd.f32 %v515, %v575
        %580 = vst.msk [vmem:[#allocation3] sm:$0xff] %vm375, %v578
        %581 = vst.msk [vmem:[#allocation3 + $0x8] sm:$0xff] %vm375, %v579
        %v582 = vld [vmem:[%s273 + $0x2] sm:$0x1]
        %v583 = vld [vmem:[%s273 + $0xa] sm:$0x1]
        %v584 = vld [vmem:[%s273 + $0x12] sm:$0x1]
        %v585 = vld [vmem:[%s273 + $0x1a] sm:$0x1]
        %v586 = vld [vmem:[%s273 + $0x22] sm:$0x1]
        %v587 = vld [vmem:[%s273 + $0x2a] sm:$0x1]
        %v588 = vld [vmem:[%s273 + $0x32] sm:$0x1]
        %v589 = vld [vmem:[%s273 + $0x3a] sm:$0x1]
        %v590 = vld [vmem:[%s273 + $0x42] sm:$0x1]
        %v591 = vld [vmem:[%s273 + $0x4a] sm:$0x1]
        %v592 = vld [vmem:[%s273 + $0x52] sm:$0x1]
        %v593 = vld [vmem:[%s273 + $0x5a] sm:$0x1]
        %v594 = vld [vmem:[%s273 + $0x62] sm:$0x1]
        %v595 = vld [vmem:[%s273 + $0x6a] sm:$0x1]
        %v596 = vld [vmem:[%s273 + $0x72] sm:$0x1]
        %v597 = vld [vmem:[%s273 + $0x7a] sm:$0x1]
        %v598 = vld [vmem:[#allocation2] sm:$0xff]
        %v599 = vld [vmem:[#allocation2 + $0x8] sm:$0xff]
        %v616 = vrot.slane %v583, 7
        %v617 = vsel %vm337, %v616, %v582
        %v618 = vrot.slane %v584, 6
        %v619 = vsel %vm340, %v618, %v617
        %v620 = vrot.slane %v585, 5
        %v621 = vsel %vm343, %v620, %v619
        %v622 = vrot.slane %v586, 4
        %v623 = vsel %vm346, %v622, %v621
        %v624 = vrot.slane %v587, 3
        %v625 = vsel %vm349, %v624, %v623
        %v626 = vrot.slane %v588, 2
        %v627 = vsel %vm352, %v626, %v625
        %v628 = vrot.slane %v589, 1
        %v629 = vsel %vm355, %v628, %v627
        %v630 = vrot.slane %v591, 7
        %v631 = vsel %vm337, %v630, %v590
        %v632 = vrot.slane %v592, 6
        %v633 = vsel %vm340, %v632, %v631
        %v634 = vrot.slane %v593, 5
        %v635 = vsel %vm343, %v634, %v633
        %v636 = vrot.slane %v594, 4
        %v637 = vsel %vm346, %v636, %v635
        %v638 = vrot.slane %v595, 3
        %v639 = vsel %vm349, %v638, %v637
        %v640 = vrot.slane %v596, 2
        %v641 = vsel %vm352, %v640, %v639
        %v642 = vrot.slane %v597, 1
        %v643 = vsel %vm355, %v642, %v641
        %v646 = vadd.f32 %v598, %v629
        %v647 = vadd.f32 %v599, %v643
        %648 = vst.msk [vmem:[#allocation2] sm:$0xff] %vm375, %v646
        %649 = vst.msk [vmem:[#allocation2 + $0x8] sm:$0xff] %vm375, %v647
        %v650 = vld [vmem:[#allocation3] sm:$0xff]
        %v651 = vld [vmem:[#allocation3 + $0x8] sm:$0xff]
        %v652 = vmul.f32 %v582, %v582
        %v653 = vmul.f32 %v583, %v583
        %v654 = vmul.f32 %v584, %v584
        %v655 = vmul.f32 %v585, %v585
        %v656 = vmul.f32 %v586, %v586
        %v657 = vmul.f32 %v587, %v587
        %v658 = vmul.f32 %v588, %v588
        %v659 = vmul.f32 %v589, %v589
        %v660 = vmul.f32 %v590, %v590
        %v661 = vmul.f32 %v591, %v591
        %v662 = vmul.f32 %v592, %v592
        %v663 = vmul.f32 %v593, %v593
        %v664 = vmul.f32 %v594, %v594
        %v665 = vmul.f32 %v595, %v595
        %v666 = vmul.f32 %v596, %v596
        %v667 = vmul.f32 %v597, %v597
        %v684 = vrot.slane %v653, 7
        %v685 = vsel %vm337, %v684, %v652
        %v686 = vrot.slane %v654, 6
        %v687 = vsel %vm340, %v686, %v685
        %v688 = vrot.slane %v655, 5
        %v689 = vsel %vm343, %v688, %v687
        %v690 = vrot.slane %v656, 4
        %v691 = vsel %vm346, %v690, %v689
        %v692 = vrot.slane %v657, 3
        %v693 = vsel %vm349, %v692, %v691
        %v694 = vrot.slane %v658, 2
        %v695 = vsel %vm352, %v694, %v693
        %v696 = vrot.slane %v659, 1
        %v697 = vsel %vm355, %v696, %v695
        %v698 = vrot.slane %v661, 7
        %v699 = vsel %vm337, %v698, %v660
        %v700 = vrot.slane %v662, 6
        %v701 = vsel %vm340, %v700, %v699
        %v702 = vrot.slane %v663, 5
        %v703 = vsel %vm343, %v702, %v701
        %v704 = vrot.slane %v664, 4
        %v705 = vsel %vm346, %v704, %v703
        %v706 = vrot.slane %v665, 3
        %v707 = vsel %vm349, %v706, %v705
        %v708 = vrot.slane %v666, 2
        %v709 = vsel %vm352, %v708, %v707
        %v710 = vrot.slane %v667, 1
        %v711 = vsel %vm355, %v710, %v709
        %v714 = vadd.f32 %v650, %v697
        %v715 = vadd.f32 %v651, %v711
        %716 = vst.msk [vmem:[#allocation3] sm:$0xff] %vm375, %v714
        %717 = vst.msk [vmem:[#allocation3 + $0x8] sm:$0xff] %vm375, %v715
        %v718 = vld [vmem:[%s273 + $0x3] sm:$0x1]
        %v719 = vld [vmem:[%s273 + $0xb] sm:$0x1]
        %v720 = vld [vmem:[%s273 + $0x13] sm:$0x1]
        %v721 = vld [vmem:[%s273 + $0x1b] sm:$0x1]
        %v722 = vld [vmem:[%s273 + $0x23] sm:$0x1]
        %v723 = vld [vmem:[%s273 + $0x2b] sm:$0x1]
        %v724 = vld [vmem:[%s273 + $0x33] sm:$0x1]
        %v725 = vld [vmem:[%s273 + $0x3b] sm:$0x1]
        %v726 = vld [vmem:[%s273 + $0x43] sm:$0x1]
        %v727 = vld [vmem:[%s273 + $0x4b] sm:$0x1]
        %v728 = vld [vmem:[%s273 + $0x53] sm:$0x1]
        %v729 = vld [vmem:[%s273 + $0x5b] sm:$0x1]
        %v730 = vld [vmem:[%s273 + $0x63] sm:$0x1]
        %v731 = vld [vmem:[%s273 + $0x6b] sm:$0x1]
        %v732 = vld [vmem:[%s273 + $0x73] sm:$0x1]
        %v733 = vld [vmem:[%s273 + $0x7b] sm:$0x1]
        %v734 = vld [vmem:[#allocation2] sm:$0xff]
        %v735 = vld [vmem:[#allocation2 + $0x8] sm:$0xff]
        %v752 = vrot.slane %v719, 7
        %v753 = vsel %vm337, %v752, %v718
        %v754 = vrot.slane %v720, 6
        %v755 = vsel %vm340, %v754, %v753
        %v756 = vrot.slane %v721, 5
        %v757 = vsel %vm343, %v756, %v755
        %v758 = vrot.slane %v722, 4
        %v759 = vsel %vm346, %v758, %v757
        %v760 = vrot.slane %v723, 3
        %v761 = vsel %vm349, %v760, %v759
        %v762 = vrot.slane %v724, 2
        %v763 = vsel %vm352, %v762, %v761
        %v764 = vrot.slane %v725, 1
        %v765 = vsel %vm355, %v764, %v763
        %v766 = vrot.slane %v727, 7
        %v767 = vsel %vm337, %v766, %v726
        %v768 = vrot.slane %v728, 6
        %v769 = vsel %vm340, %v768, %v767
        %v770 = vrot.slane %v729, 5
        %v771 = vsel %vm343, %v770, %v769
        %v772 = vrot.slane %v730, 4
        %v773 = vsel %vm346, %v772, %v771
        %v774 = vrot.slane %v731, 3
        %v775 = vsel %vm349, %v774, %v773
        %v776 = vrot.slane %v732, 2
        %v777 = vsel %vm352, %v776, %v775
        %v778 = vrot.slane %v733, 1
        %v779 = vsel %vm355, %v778, %v777
        %v782 = vadd.f32 %v734, %v765
        %v783 = vadd.f32 %v735, %v779
        %784 = vst.msk [vmem:[#allocation2] sm:$0xff] %vm375, %v782
        %785 = vst.msk [vmem:[#allocation2 + $0x8] sm:$0xff] %vm375, %v783
        %v786 = vld [vmem:[#allocation3] sm:$0xff]
        %v787 = vld [vmem:[#allocation3 + $0x8] sm:$0xff]
        %v788 = vmul.f32 %v718, %v718
        %v789 = vmul.f32 %v719, %v719
        %v790 = vmul.f32 %v720, %v720
        %v791 = vmul.f32 %v721, %v721
        %v792 = vmul.f32 %v722, %v722
        %v793 = vmul.f32 %v723, %v723
        %v794 = vmul.f32 %v724, %v724
        %v795 = vmul.f32 %v725, %v725
        %v796 = vmul.f32 %v726, %v726
        %v797 = vmul.f32 %v727, %v727
        %v798 = vmul.f32 %v728, %v728
        %v799 = vmul.f32 %v729, %v729
        %v800 = vmul.f32 %v730, %v730
        %v801 = vmul.f32 %v731, %v731
        %v802 = vmul.f32 %v732, %v732
        %v803 = vmul.f32 %v733, %v733
        %v820 = vrot.slane %v789, 7
        %v821 = vsel %vm337, %v820, %v788
        %v822 = vrot.slane %v790, 6
        %v823 = vsel %vm340, %v822, %v821
        %v824 = vrot.slane %v791, 5
        %v825 = vsel %vm343, %v824, %v823
        %v826 = vrot.slane %v792, 4
        %v827 = vsel %vm346, %v826, %v825
        %v828 = vrot.slane %v793, 3
        %v829 = vsel %vm349, %v828, %v827
        %v830 = vrot.slane %v794, 2
        %v831 = vsel %vm352, %v830, %v829
        %v832 = vrot.slane %v795, 1
        %v833 = vsel %vm355, %v832, %v831
        %v834 = vrot.slane %v797, 7
        %v835 = vsel %vm337, %v834, %v796
        %v836 = vrot.slane %v798, 6
        %v837 = vsel %vm340, %v836, %v835
        %v838 = vrot.slane %v799, 5
        %v839 = vsel %vm343, %v838, %v837
        %v840 = vrot.slane %v800, 4
        %v841 = vsel %vm346, %v840, %v839
        %v842 = vrot.slane %v801, 3
        %v843 = vsel %vm349, %v842, %v841
        %v844 = vrot.slane %v802, 2
        %v845 = vsel %vm352, %v844, %v843
        %v846 = vrot.slane %v803, 1
        %v847 = vsel %vm355, %v846, %v845
        %v850 = vadd.f32 %v786, %v833
        %v851 = vadd.f32 %v787, %v847
        %852 = vst.msk [vmem:[#allocation3] sm:$0xff] %vm375, %v850
        %853 = vst.msk [vmem:[#allocation3 + $0x8] sm:$0xff] %vm375, %v851
        %v854 = vld [vmem:[%s273 + $0x4] sm:$0x1]
        %v855 = vld [vmem:[%s273 + $0xc] sm:$0x1]
        %v856 = vld [vmem:[%s273 + $0x14] sm:$0x1]
        %v857 = vld [vmem:[%s273 + $0x1c] sm:$0x1]
        %v858 = vld [vmem:[%s273 + $0x24] sm:$0x1]
        %v859 = vld [vmem:[%s273 + $0x2c] sm:$0x1]
        %v860 = vld [vmem:[%s273 + $0x34] sm:$0x1]
        %v861 = vld [vmem:[%s273 + $0x3c] sm:$0x1]
        %v862 = vld [vmem:[%s273 + $0x44] sm:$0x1]
        %v863 = vld [vmem:[%s273 + $0x4c] sm:$0x1]
        %v864 = vld [vmem:[%s273 + $0x54] sm:$0x1]
        %v865 = vld [vmem:[%s273 + $0x5c] sm:$0x1]
        %v866 = vld [vmem:[%s273 + $0x64] sm:$0x1]
        %v867 = vld [vmem:[%s273 + $0x6c] sm:$0x1]
        %v868 = vld [vmem:[%s273 + $0x74] sm:$0x1]
        %v869 = vld [vmem:[%s273 + $0x7c] sm:$0x1]
        %v870 = vld [vmem:[#allocation2] sm:$0xff]
        %v871 = vld [vmem:[#allocation2 + $0x8] sm:$0xff]
        %v888 = vrot.slane %v855, 7
        %v889 = vsel %vm337, %v888, %v854
        %v890 = vrot.slane %v856, 6
        %v891 = vsel %vm340, %v890, %v889
        %v892 = vrot.slane %v857, 5
        %v893 = vsel %vm343, %v892, %v891
        %v894 = vrot.slane %v858, 4
        %v895 = vsel %vm346, %v894, %v893
        %v896 = vrot.slane %v859, 3
        %v897 = vsel %vm349, %v896, %v895
        %v898 = vrot.slane %v860, 2
        %v899 = vsel %vm352, %v898, %v897
        %v900 = vrot.slane %v861, 1
        %v901 = vsel %vm355, %v900, %v899
        %v902 = vrot.slane %v863, 7
        %v903 = vsel %vm337, %v902, %v862
        %v904 = vrot.slane %v864, 6
        %v905 = vsel %vm340, %v904, %v903
        %v906 = vrot.slane %v865, 5
        %v907 = vsel %vm343, %v906, %v905
        %v908 = vrot.slane %v866, 4
        %v909 = vsel %vm346, %v908, %v907
        %v910 = vrot.slane %v867, 3
        %v911 = vsel %vm349, %v910, %v909
        %v912 = vrot.slane %v868, 2
        %v913 = vsel %vm352, %v912, %v911
        %v914 = vrot.slane %v869, 1
        %v915 = vsel %vm355, %v914, %v913
        %v918 = vadd.f32 %v870, %v901
        %v919 = vadd.f32 %v871, %v915
        %920 = vst.msk [vmem:[#allocation2] sm:$0xff] %vm375, %v918
        %921 = vst.msk [vmem:[#allocation2 + $0x8] sm:$0xff] %vm375, %v919
        %v922 = vld [vmem:[#allocation3] sm:$0xff]
        %v923 = vld [vmem:[#allocation3 + $0x8] sm:$0xff]
        %v924 = vmul.f32 %v854, %v854
        %v925 = vmul.f32 %v855, %v855
        %v926 = vmul.f32 %v856, %v856
        %v927 = vmul.f32 %v857, %v857
        %v928 = vmul.f32 %v858, %v858
        %v929 = vmul.f32 %v859, %v859
        %v930 = vmul.f32 %v860, %v860
        %v931 = vmul.f32 %v861, %v861
        %v932 = vmul.f32 %v862, %v862
        %v933 = vmul.f32 %v863, %v863
        %v934 = vmul.f32 %v864, %v864
        %v935 = vmul.f32 %v865, %v865
        %v936 = vmul.f32 %v866, %v866
        %v937 = vmul.f32 %v867, %v867
        %v938 = vmul.f32 %v868, %v868
        %v939 = vmul.f32 %v869, %v869
        %v956 = vrot.slane %v925, 7
        %v957 = vsel %vm337, %v956, %v924
        %v958 = vrot.slane %v926, 6
        %v959 = vsel %vm340, %v958, %v957
        %v960 = vrot.slane %v927, 5
        %v961 = vsel %vm343, %v960, %v959
        %v962 = vrot.slane %v928, 4
        %v963 = vsel %vm346, %v962, %v961
        %v964 = vrot.slane %v929, 3
        %v965 = vsel %vm349, %v964, %v963
        %v966 = vrot.slane %v930, 2
        %v967 = vsel %vm352, %v966, %v965
        %v968 = vrot.slane %v931, 1
        %v969 = vsel %vm355, %v968, %v967
        %v970 = vrot.slane %v933, 7
        %v971 = vsel %vm337, %v970, %v932
        %v972 = vrot.slane %v934, 6
        %v973 = vsel %vm340, %v972, %v971
        %v974 = vrot.slane %v935, 5
        %v975 = vsel %vm343, %v974, %v973
        %v976 = vrot.slane %v936, 4
        %v977 = vsel %vm346, %v976, %v975
        %v978 = vrot.slane %v937, 3
        %v979 = vsel %vm349, %v978, %v977
        %v980 = vrot.slane %v938, 2
        %v981 = vsel %vm352, %v980, %v979
        %v982 = vrot.slane %v939, 1
        %v983 = vsel %vm355, %v982, %v981
        %v986 = vadd.f32 %v922, %v969
        %v987 = vadd.f32 %v923, %v983
        %988 = vst.msk [vmem:[#allocation3] sm:$0xff] %vm375, %v986
        %989 = vst.msk [vmem:[#allocation3 + $0x8] sm:$0xff] %vm375, %v987
        %v990 = vld [vmem:[%s273 + $0x5] sm:$0x1]
        %v991 = vld [vmem:[%s273 + $0xd] sm:$0x1]
        %v992 = vld [vmem:[%s273 + $0x15] sm:$0x1]
        %v993 = vld [vmem:[%s273 + $0x1d] sm:$0x1]
        %v994 = vld [vmem:[%s273 + $0x25] sm:$0x1]
        %v995 = vld [vmem:[%s273 + $0x2d] sm:$0x1]
        %v996 = vld [vmem:[%s273 + $0x35] sm:$0x1]
        %v997 = vld [vmem:[%s273 + $0x3d] sm:$0x1]
        %v998 = vld [vmem:[%s273 + $0x45] sm:$0x1]
        %v999 = vld [vmem:[%s273 + $0x4d] sm:$0x1]
        %v1000 = vld [vmem:[%s273 + $0x55] sm:$0x1]
        %v1001 = vld [vmem:[%s273 + $0x5d] sm:$0x1]
        %v1002 = vld [vmem:[%s273 + $0x65] sm:$0x1]
        %v1003 = vld [vmem:[%s273 + $0x6d] sm:$0x1]
        %v1004 = vld [vmem:[%s273 + $0x75] sm:$0x1]
        %v1005 = vld [vmem:[%s273 + $0x7d] sm:$0x1]
        %v1006 = vld [vmem:[#allocation2] sm:$0xff]
        %v1007 = vld [vmem:[#allocation2 + $0x8] sm:$0xff]
        %v1024 = vrot.slane %v991, 7
        %v1025 = vsel %vm337, %v1024, %v990
        %v1026 = vrot.slane %v992, 6
        %v1027 = vsel %vm340, %v1026, %v1025
        %v1028 = vrot.slane %v993, 5
        %v1029 = vsel %vm343, %v1028, %v1027
        %v1030 = vrot.slane %v994, 4
        %v1031 = vsel %vm346, %v1030, %v1029
        %v1032 = vrot.slane %v995, 3
        %v1033 = vsel %vm349, %v1032, %v1031
        %v1034 = vrot.slane %v996, 2
        %v1035 = vsel %vm352, %v1034, %v1033
        %v1036 = vrot.slane %v997, 1
        %v1037 = vsel %vm355, %v1036, %v1035
        %v1038 = vrot.slane %v999, 7
        %v1039 = vsel %vm337, %v1038, %v998
        %v1040 = vrot.slane %v1000, 6
        %v1041 = vsel %vm340, %v1040, %v1039
        %v1042 = vrot.slane %v1001, 5
        %v1043 = vsel %vm343, %v1042, %v1041
        %v1044 = vrot.slane %v1002, 4
        %v1045 = vsel %vm346, %v1044, %v1043
        %v1046 = vrot.slane %v1003, 3
        %v1047 = vsel %vm349, %v1046, %v1045
        %v1048 = vrot.slane %v1004, 2
        %v1049 = vsel %vm352, %v1048, %v1047
        %v1050 = vrot.slane %v1005, 1
        %v1051 = vsel %vm355, %v1050, %v1049
        %v1054 = vadd.f32 %v1006, %v1037
        %v1055 = vadd.f32 %v1007, %v1051
        %1056 = vst.msk [vmem:[#allocation2] sm:$0xff] %vm375, %v1054
        %1057 = vst.msk [vmem:[#allocation2 + $0x8] sm:$0xff] %vm375, %v1055
        %v1058 = vld [vmem:[#allocation3] sm:$0xff]
        %v1059 = vld [vmem:[#allocation3 + $0x8] sm:$0xff]
        %v1060 = vmul.f32 %v990, %v990
        %v1061 = vmul.f32 %v991, %v991
        %v1062 = vmul.f32 %v992, %v992
        %v1063 = vmul.f32 %v993, %v993
        %v1064 = vmul.f32 %v994, %v994
        %v1065 = vmul.f32 %v995, %v995
        %v1066 = vmul.f32 %v996, %v996
        %v1067 = vmul.f32 %v997, %v997
        %v1068 = vmul.f32 %v998, %v998
        %v1069 = vmul.f32 %v999, %v999
        %v1070 = vmul.f32 %v1000, %v1000
        %v1071 = vmul.f32 %v1001, %v1001
        %v1072 = vmul.f32 %v1002, %v1002
        %v1073 = vmul.f32 %v1003, %v1003
        %v1074 = vmul.f32 %v1004, %v1004
        %v1075 = vmul.f32 %v1005, %v1005
        %v1092 = vrot.slane %v1061, 7
        %v1093 = vsel %vm337, %v1092, %v1060
        %v1094 = vrot.slane %v1062, 6
        %v1095 = vsel %vm340, %v1094, %v1093
        %v1096 = vrot.slane %v1063, 5
        %v1097 = vsel %vm343, %v1096, %v1095
        %v1098 = vrot.slane %v1064, 4
        %v1099 = vsel %vm346, %v1098, %v1097
        %v1100 = vrot.slane %v1065, 3
        %v1101 = vsel %vm349, %v1100, %v1099
        %v1102 = vrot.slane %v1066, 2
        %v1103 = vsel %vm352, %v1102, %v1101
        %v1104 = vrot.slane %v1067, 1
        %v1105 = vsel %vm355, %v1104, %v1103
        %v1106 = vrot.slane %v1069, 7
        %v1107 = vsel %vm337, %v1106, %v1068
        %v1108 = vrot.slane %v1070, 6
        %v1109 = vsel %vm340, %v1108, %v1107
        %v1110 = vrot.slane %v1071, 5
        %v1111 = vsel %vm343, %v1110, %v1109
        %v1112 = vrot.slane %v1072, 4
        %v1113 = vsel %vm346, %v1112, %v1111
        %v1114 = vrot.slane %v1073, 3
        %v1115 = vsel %vm349, %v1114, %v1113
        %v1116 = vrot.slane %v1074, 2
        %v1117 = vsel %vm352, %v1116, %v1115
        %v1118 = vrot.slane %v1075, 1
        %v1119 = vsel %vm355, %v1118, %v1117
        %v1122 = vadd.f32 %v1058, %v1105
        %v1123 = vadd.f32 %v1059, %v1119
        %1124 = vst.msk [vmem:[#allocation3] sm:$0xff] %vm375, %v1122
        %1125 = vst.msk [vmem:[#allocation3 + $0x8] sm:$0xff] %vm375, %v1123
        %v1126 = vld [vmem:[%s273 + $0x6] sm:$0x1]
        %v1127 = vld [vmem:[%s273 + $0xe] sm:$0x1]
        %v1128 = vld [vmem:[%s273 + $0x16] sm:$0x1]
        %v1129 = vld [vmem:[%s273 + $0x1e] sm:$0x1]
        %v1130 = vld [vmem:[%s273 + $0x26] sm:$0x1]
        %v1131 = vld [vmem:[%s273 + $0x2e] sm:$0x1]
        %v1132 = vld [vmem:[%s273 + $0x36] sm:$0x1]
        %v1133 = vld [vmem:[%s273 + $0x3e] sm:$0x1]
        %v1134 = vld [vmem:[%s273 + $0x46] sm:$0x1]
        %v1135 = vld [vmem:[%s273 + $0x4e] sm:$0x1]
        %v1136 = vld [vmem:[%s273 + $0x56] sm:$0x1]
        %v1137 = vld [vmem:[%s273 + $0x5e] sm:$0x1]
        %v1138 = vld [vmem:[%s273 + $0x66] sm:$0x1]
        %v1139 = vld [vmem:[%s273 + $0x6e] sm:$0x1]
        %v1140 = vld [vmem:[%s273 + $0x76] sm:$0x1]
        %v1141 = vld [vmem:[%s273 + $0x7e] sm:$0x1]
        %v1142 = vld [vmem:[#allocation2] sm:$0xff]
        %v1143 = vld [vmem:[#allocation2 + $0x8] sm:$0xff]
        %v1160 = vrot.slane %v1127, 7
        %v1161 = vsel %vm337, %v1160, %v1126
        %v1162 = vrot.slane %v1128, 6
        %v1163 = vsel %vm340, %v1162, %v1161
        %v1164 = vrot.slane %v1129, 5
        %v1165 = vsel %vm343, %v1164, %v1163
        %v1166 = vrot.slane %v1130, 4
        %v1167 = vsel %vm346, %v1166, %v1165
        %v1168 = vrot.slane %v1131, 3
        %v1169 = vsel %vm349, %v1168, %v1167
        %v1170 = vrot.slane %v1132, 2
        %v1171 = vsel %vm352, %v1170, %v1169
        %v1172 = vrot.slane %v1133, 1
        %v1173 = vsel %vm355, %v1172, %v1171
        %v1174 = vrot.slane %v1135, 7
        %v1175 = vsel %vm337, %v1174, %v1134
        %v1176 = vrot.slane %v1136, 6
        %v1177 = vsel %vm340, %v1176, %v1175
        %v1178 = vrot.slane %v1137, 5
        %v1179 = vsel %vm343, %v1178, %v1177
        %v1180 = vrot.slane %v1138, 4
        %v1181 = vsel %vm346, %v1180, %v1179
        %v1182 = vrot.slane %v1139, 3
        %v1183 = vsel %vm349, %v1182, %v1181
        %v1184 = vrot.slane %v1140, 2
        %v1185 = vsel %vm352, %v1184, %v1183
        %v1186 = vrot.slane %v1141, 1
        %v1187 = vsel %vm355, %v1186, %v1185
        %v1190 = vadd.f32 %v1142, %v1173
        %v1191 = vadd.f32 %v1143, %v1187
        %1192 = vst.msk [vmem:[#allocation2] sm:$0xff] %vm375, %v1190
        %1193 = vst.msk [vmem:[#allocation2 + $0x8] sm:$0xff] %vm375, %v1191
        %v1194 = vld [vmem:[#allocation3] sm:$0xff]
        %v1195 = vld [vmem:[#allocation3 + $0x8] sm:$0xff]
        %v1196 = vmul.f32 %v1126, %v1126
        %v1197 = vmul.f32 %v1127, %v1127
        %v1198 = vmul.f32 %v1128, %v1128
        %v1199 = vmul.f32 %v1129, %v1129
        %v1200 = vmul.f32 %v1130, %v1130
        %v1201 = vmul.f32 %v1131, %v1131
        %v1202 = vmul.f32 %v1132, %v1132
        %v1203 = vmul.f32 %v1133, %v1133
        %v1204 = vmul.f32 %v1134, %v1134
        %v1205 = vmul.f32 %v1135, %v1135
        %v1206 = vmul.f32 %v1136, %v1136
        %v1207 = vmul.f32 %v1137, %v1137
        %v1208 = vmul.f32 %v1138, %v1138
        %v1209 = vmul.f32 %v1139, %v1139
        %v1210 = vmul.f32 %v1140, %v1140
        %v1211 = vmul.f32 %v1141, %v1141
        %v1228 = vrot.slane %v1197, 7
        %v1229 = vsel %vm337, %v1228, %v1196
        %v1230 = vrot.slane %v1198, 6
        %v1231 = vsel %vm340, %v1230, %v1229
        %v1232 = vrot.slane %v1199, 5
        %v1233 = vsel %vm343, %v1232, %v1231
        %v1234 = vrot.slane %v1200, 4
        %v1235 = vsel %vm346, %v1234, %v1233
        %v1236 = vrot.slane %v1201, 3
        %v1237 = vsel %vm349, %v1236, %v1235
        %v1238 = vrot.slane %v1202, 2
        %v1239 = vsel %vm352, %v1238, %v1237
        %v1240 = vrot.slane %v1203, 1
        %v1241 = vsel %vm355, %v1240, %v1239
        %v1242 = vrot.slane %v1205, 7
        %v1243 = vsel %vm337, %v1242, %v1204
        %v1244 = vrot.slane %v1206, 6
        %v1245 = vsel %vm340, %v1244, %v1243
        %v1246 = vrot.slane %v1207, 5
        %v1247 = vsel %vm343, %v1246, %v1245
        %v1248 = vrot.slane %v1208, 4
        %v1249 = vsel %vm346, %v1248, %v1247
        %v1250 = vrot.slane %v1209, 3
        %v1251 = vsel %vm349, %v1250, %v1249
        %v1252 = vrot.slane %v1210, 2
        %v1253 = vsel %vm352, %v1252, %v1251
        %v1254 = vrot.slane %v1211, 1
        %v1255 = vsel %vm355, %v1254, %v1253
        %v1258 = vadd.f32 %v1194, %v1241
        %v1259 = vadd.f32 %v1195, %v1255
        %1260 = vst.msk [vmem:[#allocation3] sm:$0xff] %vm375, %v1258
        %1261 = vst.msk [vmem:[#allocation3 + $0x8] sm:$0xff] %vm375, %v1259
        %v1262 = vld [vmem:[%s273 + $0x7] sm:$0x1]
        %v1263 = vld [vmem:[%s273 + $0xf] sm:$0x1]
        %v1264 = vld [vmem:[%s273 + $0x17] sm:$0x1]
        %v1265 = vld [vmem:[%s273 + $0x1f] sm:$0x1]
        %v1266 = vld [vmem:[%s273 + $0x27] sm:$0x1]
        %v1267 = vld [vmem:[%s273 + $0x2f] sm:$0x1]
        %v1268 = vld [vmem:[%s273 + $0x37] sm:$0x1]
        %v1269 = vld [vmem:[%s273 + $0x3f] sm:$0x1]
        %v1270 = vld [vmem:[%s273 + $0x47] sm:$0x1]
        %v1271 = vld [vmem:[%s273 + $0x4f] sm:$0x1]
        %v1272 = vld [vmem:[%s273 + $0x57] sm:$0x1]
        %v1273 = vld [vmem:[%s273 + $0x5f] sm:$0x1]
        %v1274 = vld [vmem:[%s273 + $0x67] sm:$0x1]
        %v1275 = vld [vmem:[%s273 + $0x6f] sm:$0x1]
        %v1276 = vld [vmem:[%s273 + $0x77] sm:$0x1]
        %v1277 = vld [vmem:[%s273 + $0x7f] sm:$0x1]
        %v1278 = vld [vmem:[#allocation2] sm:$0xff]
        %v1279 = vld [vmem:[#allocation2 + $0x8] sm:$0xff]
        %v1296 = vrot.slane %v1263, 7
        %v1297 = vsel %vm337, %v1296, %v1262
        %v1298 = vrot.slane %v1264, 6
        %v1299 = vsel %vm340, %v1298, %v1297
        %v1300 = vrot.slane %v1265, 5
        %v1301 = vsel %vm343, %v1300, %v1299
        %v1302 = vrot.slane %v1266, 4
        %v1303 = vsel %vm346, %v1302, %v1301
        %v1304 = vrot.slane %v1267, 3
        %v1305 = vsel %vm349, %v1304, %v1303
        %v1306 = vrot.slane %v1268, 2
        %v1307 = vsel %vm352, %v1306, %v1305
        %v1308 = vrot.slane %v1269, 1
        %v1309 = vsel %vm355, %v1308, %v1307
        %v1310 = vrot.slane %v1271, 7
        %v1311 = vsel %vm337, %v1310, %v1270
        %v1312 = vrot.slane %v1272, 6
        %v1313 = vsel %vm340, %v1312, %v1311
        %v1314 = vrot.slane %v1273, 5
        %v1315 = vsel %vm343, %v1314, %v1313
        %v1316 = vrot.slane %v1274, 4
        %v1317 = vsel %vm346, %v1316, %v1315
        %v1318 = vrot.slane %v1275, 3
        %v1319 = vsel %vm349, %v1318, %v1317
        %v1320 = vrot.slane %v1276, 2
        %v1321 = vsel %vm352, %v1320, %v1319
        %v1322 = vrot.slane %v1277, 1
        %v1323 = vsel %vm355, %v1322, %v1321
        %v1326 = vadd.f32 %v1278, %v1309
        %v1327 = vadd.f32 %v1279, %v1323
        %1328 = vst.msk [vmem:[#allocation2] sm:$0xff] %vm375, %v1326
        %1329 = vst.msk [vmem:[#allocation2 + $0x8] sm:$0xff] %vm375, %v1327
        %v1330 = vld [vmem:[#allocation3] sm:$0xff]
        %v1331 = vld [vmem:[#allocation3 + $0x8] sm:$0xff]
        %v1332 = vmul.f32 %v1262, %v1262
        %v1333 = vmul.f32 %v1263, %v1263
        %v1334 = vmul.f32 %v1264, %v1264
        %v1335 = vmul.f32 %v1265, %v1265
        %v1336 = vmul.f32 %v1266, %v1266
        %v1337 = vmul.f32 %v1267, %v1267
        %v1338 = vmul.f32 %v1268, %v1268
        %v1339 = vmul.f32 %v1269, %v1269
        %v1340 = vmul.f32 %v1270, %v1270
        %v1341 = vmul.f32 %v1271, %v1271
        %v1342 = vmul.f32 %v1272, %v1272
        %v1343 = vmul.f32 %v1273, %v1273
        %v1344 = vmul.f32 %v1274, %v1274
        %v1345 = vmul.f32 %v1275, %v1275
        %v1346 = vmul.f32 %v1276, %v1276
        %v1347 = vmul.f32 %v1277, %v1277
        %v1364 = vrot.slane %v1333, 7
        %v1365 = vsel %vm337, %v1364, %v1332
        %v1366 = vrot.slane %v1334, 6
        %v1367 = vsel %vm340, %v1366, %v1365
        %v1368 = vrot.slane %v1335, 5
        %v1369 = vsel %vm343, %v1368, %v1367
        %v1370 = vrot.slane %v1336, 4
        %v1371 = vsel %vm346, %v1370, %v1369
        %v1372 = vrot.slane %v1337, 3
        %v1373 = vsel %vm349, %v1372, %v1371
        %v1374 = vrot.slane %v1338, 2
        %v1375 = vsel %vm352, %v1374, %v1373
        %v1376 = vrot.slane %v1339, 1
        %v1377 = vsel %vm355, %v1376, %v1375
        %v1378 = vrot.slane %v1341, 7
        %v1379 = vsel %vm337, %v1378, %v1340
        %v1380 = vrot.slane %v1342, 6
        %v1381 = vsel %vm340, %v1380, %v1379
        %v1382 = vrot.slane %v1343, 5
        %v1383 = vsel %vm343, %v1382, %v1381
        %v1384 = vrot.slane %v1344, 4
        %v1385 = vsel %vm346, %v1384, %v1383
        %v1386 = vrot.slane %v1345, 3
        %v1387 = vsel %vm349, %v1386, %v1385
        %v1388 = vrot.slane %v1346, 2
        %v1389 = vsel %vm352, %v1388, %v1387
        %v1390 = vrot.slane %v1347, 1
        %v1391 = vsel %vm355, %v1390, %v1389
        %v1394 = vadd.f32 %v1330, %v1377
        %v1395 = vadd.f32 %v1331, %v1391
        %1396 = vst.msk [vmem:[#allocation3] sm:$0xff] %vm375, %v1394
        %1397 = vst.msk [vmem:[#allocation3 + $0x8] sm:$0xff] %vm375, %v1395
        %p1398 = scmp.eq.s32.totalorder %s20, 1
        %p1399 = scmp.eq.s32.totalorder %s21, 1
        %p1400 = pnand %p1398, %p1399
        %p1401 = pneg %p1400
        // Predicated region
        $region75: #{transition_forward.2} parent=65 // pred_check
          _
        $region76: #{transition_forward.2} parent=65 // pred_check_branch
          %1403 = sbr.rel (%p1400) target = $region78
        $region77: #{transition_forward.2} parent=65 // pred_region
          %v1404 = vld [vmem:[#allocation2] sm:$0xff]
          %v1405 = vld [vmem:[#allocation2 + $0x8] sm:$0xff]
          %v1406 = vsel %vm375, %v1404, 0.0
          %1407 = vadd.xlane.f32.xlu0 %v1406
          %v1408 = vpop.xlane.xlu0 %1407
          %v1409 = vsel %vm375, %v1405, 0.0
          %1410 = vadd.xlane.f32.xlu0 %v1409
          %v1411 = vpop.xlane.xlu0 %1410
          %v1412 = vmul.f32 %v1408, 0.00048828125
          %v1413 = vmul.f32 %v1411, 0.00048828125
          %v1414 = vld [vmem:[#allocation3] sm:$0xff]
          %v1415 = vld [vmem:[#allocation3 + $0x8] sm:$0xff]
          %v1416 = vsel %vm375, %v1414, 0.0
          %1417 = vadd.xlane.f32.xlu0 %v1416
          %v1418 = vpop.xlane.xlu0 %1417
          %v1419 = vsel %vm375, %v1415, 0.0
          %1420 = vadd.xlane.f32.xlu0 %v1419
          %v1421 = vpop.xlane.xlu0 %1420
          %v1422 = vmul.f32 %v1418, 0.00048828125
          %v1423 = vmul.f32 %v1421, 0.00048828125
          %v1424 = vmul.f32 %v1412, %v1412
          %v1425 = vmul.f32 %v1413, %v1413
          %v1426 = vsub.f32 %v1422, %v1424
          %v1427 = vsub.f32 %v1423, %v1425
          %v1428 = vmax.f32 %v1426, 0.0
          %v1429 = vmax.f32 %v1427, 0.0
          %v1430 = vld [vmem:[%s1] sm:$0xff]
          %v1431 = vld [vmem:[%s1 + $0x8] sm:$0xff]
          %v1432 = vadd.f32 %v1428, 1e-05
          %v1433 = vadd.f32 %v1429, 1e-05
          %v1434 = vrsqrt.pop %v1432
          %v1435 = vrsqrt.pop %v1433
          %v1436 = vmul.f32 %v1430, %v1434
          %v1437 = vmul.f32 %v1431, %v1435
          %vm1438 = vcmask 7168
          %1439 = vst.msk [vmem:[%s3] sm:$0xff] %vm1438, %v1436
          %1440 = vst.msk [vmem:[%s3 + $0x8] sm:$0xff] %vm1438, %v1437
          %v1441 = vld [vmem:[%s2] sm:$0xff]
          %v1442 = vld [vmem:[%s2 + $0x8] sm:$0xff]
          %v1443 = vmul.f32 %v1412, %v1436
          %v1444 = vmul.f32 %v1413, %v1437
          %v1445 = vsub.f32 %v1441, %v1443
          %v1446 = vsub.f32 %v1442, %v1444
          %1447 = vst.msk [vmem:[%s4] sm:$0xff] %vm1438, %v1445
          %1448 = vst.msk [vmem:[%s4 + $0x8] sm:$0xff] %vm1438, %v1446
        $region78: #{transition_forward.2} parent=65 // pred_fallthru
          _
        // Predicated region
        $region79: #{transition_forward.2} parent=65 // pred_check
          %p1449 = pneg %p111
        $region80: #{transition_forward.2} parent=65 // pred_check_branch
          %1451 = sbr.rel (%p1449) target = $region82
        $region81: #{transition_forward.2} parent=65 // pred_region
          _
        $region82: #{transition_forward.2} parent=65 // pred_fallthru
          _
        // Predicated region
        $region83: #{transition_forward.2} parent=65 // pred_check
          %p1452 = pneg %p132
        $region84: #{transition_forward.2} parent=65 // pred_check_branch
          %1454 = sbr.rel (%p1452) target = $region86
        $region85: #{transition_forward.2} parent=65 // pred_region
          _
        $region86: #{transition_forward.2} parent=65 // pred_fallthru
          _
        // Predicated region
        $region87: #{transition_forward.2} parent=65 // pred_check
          %p1455 = pneg %p111
        $region88: #{transition_forward.2} parent=65 // pred_check_branch
          %1457 = sbr.rel (%p1455) target = $region90
        $region89: #{transition_forward.2} parent=65 // pred_region
          _
        $region90: #{transition_forward.2} parent=65 // pred_fallthru
          _
        // Predicated region
        $region91: #{transition_forward.2} parent=65 // pred_check
          %p1458 = pneg %p132
        $region92: #{transition_forward.2} parent=65 // pred_check_branch
          %1460 = sbr.rel (%p1458) target = $region94
        $region93: #{transition_forward.2} parent=65 // pred_region
          _
        $region94: #{transition_forward.2} parent=65 // pred_fallthru
          _
      $region66: #{transition_forward.2} parent=5 // pred_fallthru
        _
      %p1461 = scmp.le.s32.totalorder 2, %s11
      // Predicated region
      $region95: #{transition_forward.2} parent=5 // pred_check
        %p1462 = pneg %p1461
      $region96: #{transition_forward.2} parent=5 // pred_check_branch
        %1464 = sbr.rel (%p1462) target = $region98
      $region97: #{transition_forward.2} parent=5 // pred_region
        %s1465 = ssub.s32 %s11, 2
      $region98: #{transition_forward.2} parent=5 // pred_fallthru
        _
    $region6: #{transition_forward.2} parent=1 // loop_footer
      %s15 = sadd.s32 1, %s11
    $region7: #{transition_forward.2} parent=1 // loop_footer_branch
      %10 = sbr.rel target = $region3
    $region8: #{transition_forward.2} parent=1 // loop_exit
      _

// kernel: transition_forward.3
$region0: #{transition_forward.3}
  #allocation0 [shape = 'u32[]', space=smem, size = 0x4, offset = 0x4, fixed_abs, tag = 'smem constant byte address 0x4 - core index']
  #allocation1 [shape = 'u32[144,128]{1,0:T(1,128)}', space=vmem, size = 0x12000, scoped, tag = 'internal scratch']
  %s0 = inlined_call_operand.vmem [shape: f32[2,16,16,64], index: 0, kind: input, shape index: {}]
  %s1 = inlined_call_operand.vmem [shape: f32[16,1], index: 1, kind: input, shape index: {}]
  %s2 = inlined_call_operand.vmem [shape: f32[16,1], index: 2, kind: input, shape index: {}]
  %s3 = inlined_call_operand.vmem [shape: f32[8,16], index: 3, kind: input, shape index: {}]
  %s4 = inlined_call_operand.vmem [shape: f32[32,16], index: 4, kind: input, shape index: {}]
  %s5 = inlined_call_operand.hbm [shape: f32[2,8,16,16], index: 5, kind: output, shape index: {}]
  %s6 = sld [smem:[#allocation0]]
  $region91: #{transition_forward.3} parent=0
    _
  %s8 = ssub.s32 1, %s6
  %s9 = scalar_select 0, %s8, %s6
  $region1: #{transition_forward.3} parent=0
    #allocation2 [shape = 'u8[131072]{0}', space=vmem, size = 0x20000, scoped, tag = 'input window, operand 0']
    #allocation3 [shape = 'u8[65536]{0}', space=vmem, size = 0x10000, scoped, tag = 'output window, operand 0']
    #allocation4 [shape = 's32[2]{0}', space=sflag, size = 0x8, scoped, tag = 'scoped memory for transition_forward.3']
    %10 = vsyncpa [#allocation4], 0
    %s11 = scalar_lea.sflag [#allocation4], 1
    %12 = vsyncpa %s11, 0
    loop: start=0, step=1, limit=6
    $region2: #{transition_forward.3} parent=1 // loop_pre_header
      _
    $region3: #{transition_forward.3} parent=1 // loop_header
      %s14 = sphi 0, %s18
      %p15 = scmp.ge.s32.totalorder %s14, 6
      %s21 = sphi 0, %s33
      %s22 = sphi 0, %s29
      %s23 = sphi 0, %s21
      %s24 = sphi 0, %s22
      %s25 = sphi 0, %s23
      %s26 = sphi 0, %s24
      %s38 = sphi 0, %s40
      %s41 = sphi 0, %s38
      %s42 = sphi 0, %s41
      %s58 = sphi 0, %s42
      %s62 = sphi 0, %s62
      %s64 = sphi 0, %s62
      %s65 = sphi 0, %s64
      %s79 = sphi 0, %s65
      %s83 = sphi 0, %s83
      %s85 = sphi 0, %s83
      %s86 = sphi 0, %s85
      %s100 = sphi 0, %s86
      %s104 = sphi 0, %s104
      %s106 = sphi 0, %s104
      %s107 = sphi 0, %s106
      %s121 = sphi 0, %s107
      %s125 = sphi 0, %s125
      %s127 = sphi 0, %s125
      %s128 = sphi 0, %s127
      %s142 = sphi 0, %s128
      %s150 = sphi 0, %s152
      %s153 = sphi 0, %s150
      %s154 = sphi 0, %s153
      %s170 = sphi 0, %s154
    $region4: #{transition_forward.3} parent=1 // loop_header_branch
      %17 = sbr.rel (%p15) target = $region8
    $region5: #{transition_forward.3} parent=1 // loop_body
      %s19 = ssub.s32 %s14, 1
      %s20 = ssub.s32 %s14, 2
      %s27 = sadd.s32 1, %s22
      %p28 = scmp.ge.s32.totalorder %s27, 2
      %s29 = scalar_select %p28, 0, %s27
      %s30 = sadd.s32 1, %s21
      %s31 = scalar_select %p28, %s30, %s21
      %p32 = scmp.ge.s32.totalorder %s31, 2
      %s33 = scalar_select %p32, 0, %s31
      %s34 = ssub.s32 %s21, %s33
      %s35 = ssub.s32 %s22, %s29
      %s36 = sor.u32 %s34, %s35
      %p37 = scmp.eq.s32.totalorder %s36, 0
      %s39 = sadd.s32 %s38, 1
      %s40 = scalar_select %p37, %s38, %s39
      %p43 = pneg %p37
      %p44 = scmp.eq.s32.totalorder %s14, 3
      %p45 = por %p43, %p44
      %p46 = scmp.ne.s32.totalorder %s38, %s41
      %p47 = scmp.eq.s32.totalorder %s14, 0
      %p48 = por %p46, %p47
      %p49 = scmp.ne.s32.totalorder %s38, %s41
      %p50 = scmp.eq.s32.totalorder %s19, 3
      %p51 = por %p49, %p50
      %p52 = scmp.ne.s32.totalorder %s41, %s42
      %p53 = scmp.eq.s32.totalorder %s19, 0
      %p54 = por %p52, %p53
      %p55 = scmp.ne.s32.totalorder %s41, %s42
      %p56 = scmp.eq.s32.totalorder %s20, 3
      %p57 = por %p55, %p56
      %p59 = scmp.ne.s32.totalorder %s42, %s58
      %p60 = scmp.eq.s32.totalorder %s20, 0
      %p61 = por %p59, %p60
      %s63 = sadd.s32 %s62, 1
      %p66 = scmp.eq.s32.totalorder %s14, 3
      %p67 = scmp.ne.s32.totalorder %s62, %s64
      %p68 = scmp.eq.s32.totalorder %s14, 0
      %p69 = por %p67, %p68
      %p70 = scmp.ne.s32.totalorder %s62, %s64
      %p71 = scmp.eq.s32.totalorder %s19, 3
      %p72 = por %p70, %p71
      %p73 = scmp.ne.s32.totalorder %s64, %s65
      %p74 = scmp.eq.s32.totalorder %s19, 0
      %p75 = por %p73, %p74
      %p76 = scmp.ne.s32.totalorder %s64, %s65
      %p77 = scmp.eq.s32.totalorder %s20, 3
      %p78 = por %p76, %p77
      %p80 = scmp.ne.s32.totalorder %s65, %s79
      %p81 = scmp.eq.s32.totalorder %s20, 0
      %p82 = por %p80, %p81
      %s84 = sadd.s32 %s83, 1
      %p87 = scmp.eq.s32.totalorder %s14, 3
      %p88 = scmp.ne.s32.totalorder %s83, %s85
      %p89 = scmp.eq.s32.totalorder %s14, 0
      %p90 = por %p88, %p89
      %p91 = scmp.ne.s32.totalorder %s83, %s85
      %p92 = scmp.eq.s32.totalorder %s19, 3
      %p93 = por %p91, %p92
      %p94 = scmp.ne.s32.totalorder %s85, %s86
      %p95 = scmp.eq.s32.totalorder %s19, 0
      %p96 = por %p94, %p95
      %p97 = scmp.ne.s32.totalorder %s85, %s86
      %p98 = scmp.eq.s32.totalorder %s20, 3
      %p99 = por %p97, %p98
      %p101 = scmp.ne.s32.totalorder %s86, %s100
      %p102 = scmp.eq.s32.totalorder %s20, 0
      %p103 = por %p101, %p102
      %s105 = sadd.s32 %s104, 1
      %p108 = scmp.eq.s32.totalorder %s14, 3
      %p109 = scmp.ne.s32.totalorder %s104, %s106
      %p110 = scmp.eq.s32.totalorder %s14, 0
      %p111 = por %p109, %p110
      %p112 = scmp.ne.s32.totalorder %s104, %s106
      %p113 = scmp.eq.s32.totalorder %s19, 3
      %p114 = por %p112, %p113
      %p115 = scmp.ne.s32.totalorder %s106, %s107
      %p116 = scmp.eq.s32.totalorder %s19, 0
      %p117 = por %p115, %p116
      %p118 = scmp.ne.s32.totalorder %s106, %s107
      %p119 = scmp.eq.s32.totalorder %s20, 3
      %p120 = por %p118, %p119
      %p122 = scmp.ne.s32.totalorder %s107, %s121
      %p123 = scmp.eq.s32.totalorder %s20, 0
      %p124 = por %p122, %p123
      %s126 = sadd.s32 %s125, 1
      %p129 = scmp.eq.s32.totalorder %s14, 3
      %p130 = scmp.ne.s32.totalorder %s125, %s127
      %p131 = scmp.eq.s32.totalorder %s14, 0
      %p132 = por %p130, %p131
      %p133 = scmp.ne.s32.totalorder %s125, %s127
      %p134 = scmp.eq.s32.totalorder %s19, 3
      %p135 = por %p133, %p134
      %p136 = scmp.ne.s32.totalorder %s127, %s128
      %p137 = scmp.eq.s32.totalorder %s19, 0
      %p138 = por %p136, %p137
      %p139 = scmp.ne.s32.totalorder %s127, %s128
      %p140 = scmp.eq.s32.totalorder %s20, 3
      %p141 = por %p139, %p140
      %p143 = scmp.ne.s32.totalorder %s128, %s142
      %p144 = scmp.eq.s32.totalorder %s20, 0
      %p145 = por %p143, %p144
      %s146 = ssub.s32 %s21, %s33
      %s147 = ssub.s32 %s22, %s29
      %s148 = sor.u32 %s146, %s147
      %p149 = scmp.eq.s32.totalorder %s148, 0
      %s151 = sadd.s32 %s150, 1
      %s152 = scalar_select %p149, %s150, %s151
      %p155 = pneg %p149
      %p156 = scmp.eq.s32.totalorder %s14, 3
      %p157 = por %p155, %p156
      %p158 = scmp.ne.s32.totalorder %s150, %s153
      %p159 = scmp.eq.s32.totalorder %s14, 0
      %p160 = por %p158, %p159
      %p161 = scmp.ne.s32.totalorder %s150, %s153
      %p162 = scmp.eq.s32.totalorder %s19, 3
      %p163 = por %p161, %p162
      %p164 = scmp.ne.s32.totalorder %s153, %s154
      %p165 = scmp.eq.s32.totalorder %s19, 0
      %p166 = por %p164, %p165
      %p167 = scmp.ne.s32.totalorder %s153, %s154
      %p168 = scmp.eq.s32.totalorder %s20, 3
      %p169 = por %p167, %p168
      %p171 = scmp.ne.s32.totalorder %s154, %s170
      %p172 = scmp.eq.s32.totalorder %s20, 0
      %p173 = por %p171, %p172
      %p174 = scmp.le.s32.totalorder 1, %s14
      %p175 = scmp.lt.s32.totalorder %s14, 5
      %p176 = pnand %p174, %p175
      %p177 = pneg %p176
      // Predicated region
      $region9: #{transition_forward.3} parent=5 // pred_check
        _
      $region10: #{transition_forward.3} parent=5 // pred_check_branch
        %179 = sbr.rel (%p176) target = $region12
      $region11: #{transition_forward.3} parent=5 // pred_region
        %s180 = ssub.s32 %s14, 1
        // Predicated region
        $region13: #{transition_forward.3} parent=11 // pred_check
          %p181 = pneg %p75
        $region14: #{transition_forward.3} parent=11 // pred_check_branch
          %183 = sbr.rel (%p181) target = $region16
        $region15: #{transition_forward.3} parent=11 // pred_region
          _
        $region16: #{transition_forward.3} parent=11 // pred_fallthru
          _
        // Predicated region
        $region17: #{transition_forward.3} parent=11 // pred_check
          %p184 = pneg %p96
        $region18: #{transition_forward.3} parent=11 // pred_check_branch
          %186 = sbr.rel (%p184) target = $region20
        $region19: #{transition_forward.3} parent=11 // pred_region
          _
        $region20: #{transition_forward.3} parent=11 // pred_fallthru
          _
        // Predicated region
        $region21: #{transition_forward.3} parent=11 // pred_check
          %p187 = pneg %p117
        $region22: #{transition_forward.3} parent=11 // pred_check_branch
          %189 = sbr.rel (%p187) target = $region24
        $region23: #{transition_forward.3} parent=11 // pred_region
          _
        $region24: #{transition_forward.3} parent=11 // pred_fallthru
          _
        // Predicated region
        $region25: #{transition_forward.3} parent=11 // pred_check
          %p190 = pneg %p138
        $region26: #{transition_forward.3} parent=11 // pred_check_branch
          %192 = sbr.rel (%p190) target = $region28
        $region27: #{transition_forward.3} parent=11 // pred_region
          _
        $region28: #{transition_forward.3} parent=11 // pred_fallthru
          _
      $region12: #{transition_forward.3} parent=5 // pred_fallthru
        _
      %p193 = scmp.lt.s32.totalorder %s14, 4
      // Predicated region
      $region29: #{transition_forward.3} parent=5 // pred_check
        %p194 = pneg %p193
      $region30: #{transition_forward.3} parent=5 // pred_check_branch
        %196 = sbr.rel (%p194) target = $region32
      $region31: #{transition_forward.3} parent=5 // pred_region
        // Predicated region
        $region33: #{transition_forward.3} parent=31 // pred_check
          %p197 = pneg %p48
        $region34: #{transition_forward.3} parent=31 // pred_check_branch
          %199 = sbr.rel (%p197) target = $region36
        $region35: #{transition_forward.3} parent=31 // pred_region
          %s200 = sand.u32 %s38, 1
          %s201 = sand.u32 %s38, 1
          %s202 = smul.addr %s201, 128
          %s203 = scalar_lea.vmem [#allocation2], %s202
          %s204 = smul.addr %s21, 32
          %s205 = sadd.s32 %s22, %s204
          %s206 = smul.addr %s205, 8
          %s207 = scalar_lea.vmem %s0, %s206
          // Predicated region
          $region37: #{transition_forward.3} parent=35 // pred_check
            _
          $region38: #{transition_forward.3} parent=35 // pred_check_branch
            %209 = sbr.rel (0) target = $region40
          $region39: #{transition_forward.3} parent=35 // pred_region
            // Predicated region
            $region41: #{transition_forward.3} parent=39 // pred_check
              _
            $region42: #{transition_forward.3} parent=39 // pred_check_branch
              %211 = sbr.rel (0) target = $region44
            $region43: #{transition_forward.3} parent=39 // pred_region
              // Predicated region
              $region56: #{transition_forward.3} parent=43 // pred_check
                _
              $region57: #{transition_forward.3} parent=43 // pred_check_branch
                %256 = sbr.rel (0) target = $region59
              $region58: #{transition_forward.3} parent=43 // pred_region
                loop: start=0, step=1, limit=1
                $region60: #{transition_forward.3} parent=58 // loop_pre_header
                  _
                $region61: #{transition_forward.3} parent=58 // loop_header
                  %s258 = sphi 0, %s262
                  %p259 = scmp.ge.s32.totalorder %s258, 1
                  %s263 = sphi %s207, %s207
                  %s264 = sphi %s203, %s203
                $region62: #{transition_forward.3} parent=58 // loop_header_branch
                  %261 = sbr.rel (%p259) target = $region66
                $region63: #{transition_forward.3} parent=58 // loop_body
                  %v265 = vld [vmem:[%s263] sm:$0xff]
                  %266 = vst [vmem:[%s264] sm:$0xff] %v265
                  %v267 = vld [vmem:[%s263 + $0x10] sm:$0xff]
                  %268 = vst [vmem:[%s264 + $0x8] sm:$0xff] %v267
                  %v269 = vld [vmem:[%s263 + $0x20] sm:$0xff]
                  %270 = vst [vmem:[%s264 + $0x10] sm:$0xff] %v269
                  %v271 = vld [vmem:[%s263 + $0x30] sm:$0xff]
                  %272 = vst [vmem:[%s264 + $0x18] sm:$0xff] %v271
                  %v273 = vld [vmem:[%s263 + $0x40] sm:$0xff]
                  %274 = vst [vmem:[%s264 + $0x20] sm:$0xff] %v273
                  %v275 = vld [vmem:[%s263 + $0x50] sm:$0xff]
                  %276 = vst [vmem:[%s264 + $0x28] sm:$0xff] %v275
                  %v277 = vld [vmem:[%s263 + $0x60] sm:$0xff]
                  %278 = vst [vmem:[%s264 + $0x30] sm:$0xff] %v277
                  %v279 = vld [vmem:[%s263 + $0x70] sm:$0xff]
                  %280 = vst [vmem:[%s264 + $0x38] sm:$0xff] %v279
                  %v281 = vld [vmem:[%s263 + $0x80] sm:$0xff]
                  %282 = vst [vmem:[%s264 + $0x40] sm:$0xff] %v281
                  %v283 = vld [vmem:[%s263 + $0x90] sm:$0xff]
                  %284 = vst [vmem:[%s264 + $0x48] sm:$0xff] %v283
                  %v285 = vld [vmem:[%s263 + $0xa0] sm:$0xff]
                  %286 = vst [vmem:[%s264 + $0x50] sm:$0xff] %v285
                  %v287 = vld [vmem:[%s263 + $0xb0] sm:$0xff]
                  %288 = vst [vmem:[%s264 + $0x58] sm:$0xff] %v287
                  %v289 = vld [vmem:[%s263 + $0xc0] sm:$0xff]
                  %290 = vst [vmem:[%s264 + $0x60] sm:$0xff] %v289
                  %v291 = vld [vmem:[%s263 + $0xd0] sm:$0xff]
                  %292 = vst [vmem:[%s264 + $0x68] sm:$0xff] %v291
                  %v293 = vld [vmem:[%s263 + $0xe0] sm:$0xff]
                  %294 = vst [vmem:[%s264 + $0x70] sm:$0xff] %v293
                  %v295 = vld [vmem:[%s263 + $0xf0] sm:$0xff]
                  %296 = vst [vmem:[%s264 + $0x78] sm:$0xff] %v295
                $region64: #{transition_forward.3} parent=58 // loop_footer
                  %s262 = sadd.s32 1, %s258
                $region65: #{transition_forward.3} parent=58 // loop_footer_branch
                  %257 = sbr.rel target = $region61
                $region66: #{transition_forward.3} parent=58 // loop_exit
                  _
              $region59: #{transition_forward.3} parent=43 // pred_fallthru
                _
              // Predicated region
              $region67: #{transition_forward.3} parent=43 // pred_check
                _
              $region68: #{transition_forward.3} parent=43 // pred_check_branch
                %298 = sbr.rel target = $region70
              $region69: #{transition_forward.3} parent=43 // pred_region
                _
              $region70: #{transition_forward.3} parent=43 // pred_fallthru
                _
            $region44: #{transition_forward.3} parent=39 // pred_fallthru
              _
            // Predicated region
            $region45: #{transition_forward.3} parent=39 // pred_check
              _
            $region46: #{transition_forward.3} parent=39 // pred_check_branch
              %213 = sbr.rel target = $region48
            $region47: #{transition_forward.3} parent=39 // pred_region
              loop: start=0, step=1, limit=1
              $region49: #{transition_forward.3} parent=47 // loop_pre_header
                _
              $region50: #{transition_forward.3} parent=47 // loop_header
                %s216 = sphi 0, %s220
                %p217 = scmp.ge.s32.totalorder %s216, 1
                %s221 = sphi %s207, %s207
                %s222 = sphi %s203, %s203
              $region51: #{transition_forward.3} parent=47 // loop_header_branch
                %219 = sbr.rel (%p217) target = $region55
              $region52: #{transition_forward.3} parent=47 // loop_body
                %v223 = vld [vmem:[%s221] sm:$0xff]
                %224 = vst [vmem:[%s222] sm:$0xff] %v223
                %v225 = vld [vmem:[%s221 + $0x10] sm:$0xff]
                %226 = vst [vmem:[%s222 + $0x8] sm:$0xff] %v225
                %v227 = vld [vmem:[%s221 + $0x20] sm:$0xff]
                %228 = vst [vmem:[%s222 + $0x10] sm:$0xff] %v227
                %v229 = vld [vmem:[%s221 + $0x30] sm:$0xff]
                %230 = vst [vmem:[%s222 + $0x18] sm:$0xff] %v229
                %v231 = vld [vmem:[%s221 + $0x40] sm:$0xff]
                %232 = vst [vmem:[%s222 + $0x20] sm:$0xff] %v231
                %v233 = vld [vmem:[%s221 + $0x50] sm:$0xff]
                %234 = vst [vmem:[%s222 + $0x28] sm:$0xff] %v233
                %v235 = vld [vmem:[%s221 + $0x60] sm:$0xff]
                %236 = vst [vmem:[%s222 + $0x30] sm:$0xff] %v235
                %v237 = vld [vmem:[%s221 + $0x70] sm:$0xff]
                %238 = vst [vmem:[%s222 + $0x38] sm:$0xff] %v237
                %v239 = vld [vmem:[%s221 + $0x80] sm:$0xff]
                %240 = vst [vmem:[%s222 + $0x40] sm:$0xff] %v239
                %v241 = vld [vmem:[%s221 + $0x90] sm:$0xff]
                %242 = vst [vmem:[%s222 + $0x48] sm:$0xff] %v241
                %v243 = vld [vmem:[%s221 + $0xa0] sm:$0xff]
                %244 = vst [vmem:[%s222 + $0x50] sm:$0xff] %v243
                %v245 = vld [vmem:[%s221 + $0xb0] sm:$0xff]
                %246 = vst [vmem:[%s222 + $0x58] sm:$0xff] %v245
                %v247 = vld [vmem:[%s221 + $0xc0] sm:$0xff]
                %248 = vst [vmem:[%s222 + $0x60] sm:$0xff] %v247
                %v249 = vld [vmem:[%s221 + $0xd0] sm:$0xff]
                %250 = vst [vmem:[%s222 + $0x68] sm:$0xff] %v249
                %v251 = vld [vmem:[%s221 + $0xe0] sm:$0xff]
                %252 = vst [vmem:[%s222 + $0x70] sm:$0xff] %v251
                %v253 = vld [vmem:[%s221 + $0xf0] sm:$0xff]
                %254 = vst [vmem:[%s222 + $0x78] sm:$0xff] %v253
              $region53: #{transition_forward.3} parent=47 // loop_footer
                %s220 = sadd.s32 1, %s216
              $region54: #{transition_forward.3} parent=47 // loop_footer_branch
                %215 = sbr.rel target = $region50
              $region55: #{transition_forward.3} parent=47 // loop_exit
                _
            $region48: #{transition_forward.3} parent=39 // pred_fallthru
              _
          $region40: #{transition_forward.3} parent=35 // pred_fallthru
            _
          %299 = vnop
        $region36: #{transition_forward.3} parent=31 // pred_fallthru
          _
      $region32: #{transition_forward.3} parent=5 // pred_fallthru
        _
      %p300 = scmp.le.s32.totalorder 1, %s14
      %p301 = scmp.lt.s32.totalorder %s14, 5
      %p302 = pnand %p300, %p301
      %p303 = pneg %p302
      // Predicated region
      $region71: #{transition_forward.3} parent=5 // pred_check
        _
      $region72: #{transition_forward.3} parent=5 // pred_check_branch
        %305 = sbr.rel (%p302) target = $region74
      $region73: #{transition_forward.3} parent=5 // pred_region
        %s306 = ssub.s32 %s14, 1
        %s307 = sand.u32 %s41, 1
        %s308 = sand.u32 %s41, 1
        %s309 = smul.addr %s308, 128
        %s310 = scalar_lea.vmem [#allocation2], %s309
        // Predicated region
        $region75: #{transition_forward.3} parent=73 // pred_check
          %p311 = pneg %p54
        $region76: #{transition_forward.3} parent=73 // pred_check_branch
          %313 = sbr.rel (%p311) target = $region78
        $region77: #{transition_forward.3} parent=73 // pred_region
          _
        $region78: #{transition_forward.3} parent=73 // pred_fallthru
          _
        %s314 = sand.u32 %s41, 1
        %s315 = sand.u32 %s41, 1
        %s316 = smul.addr %s315, 128
        %s317 = scalar_lea.vmem [#allocation2], %s316
        %p318 = pneg %p54
        %p319 = pneg %p51
        %p320 = pneg %p75
        %p321 = pneg %p72
        %p322 = pneg %p96
        %p323 = pneg %p93
        %p324 = pneg %p117
        %p325 = pneg %p114
        %p326 = pneg %p138
        %p327 = pneg %p135
        %p328 = pneg %p166
        %p329 = pneg %p163
        %s330 = sand.u32 %s153, 1
        %s331 = scalar_lea.sflag [#allocation4], %s330
        %s332 = sand.u32 %s153, 1
        %s333 = smul.addr %s332, 64
        %s334 = scalar_lea.vmem [#allocation3], %s333
        %v335 = vld [vmem:[%s1] sm:$0xff]
        %v336 = vld [vmem:[%s1 + $0x8] sm:$0xff]
        %v337 = vld [vmem:[%s2] sm:$0xff]
        %v338 = vld [vmem:[%s2 + $0x8] sm:$0xff]
        %v339 = vld [vmem:[%s3] sm:$0xff]
        %v340 = vld [vmem:[%s4] sm:$0xff]
        %v341 = vld [vmem:[%s4 + $0x8] sm:$0xff]
        %v342 = vld [vmem:[%s4 + $0x10] sm:$0xff]
        %v343 = vld [vmem:[%s4 + $0x18] sm:$0xff]
        %v344 = vld [vmem:[%s310] sm:$0x1]
        %v345 = vld [vmem:[%s310 + $0x8] sm:$0x1]
        %v346 = vld [vmem:[%s310 + $0x10] sm:$0x1]
        %v347 = vld [vmem:[%s310 + $0x18] sm:$0x1]
        %v348 = vld [vmem:[%s310 + $0x20] sm:$0x1]
        %v349 = vld [vmem:[%s310 + $0x28] sm:$0x1]
        %v350 = vld [vmem:[%s310 + $0x30] sm:$0x1]
        %v351 = vld [vmem:[%s310 + $0x38] sm:$0x1]
        %v352 = vld [vmem:[%s310 + $0x40] sm:$0x1]
        %v353 = vld [vmem:[%s310 + $0x48] sm:$0x1]
        %v354 = vld [vmem:[%s310 + $0x50] sm:$0x1]
        %v355 = vld [vmem:[%s310 + $0x58] sm:$0x1]
        %v356 = vld [vmem:[%s310 + $0x60] sm:$0x1]
        %v357 = vld [vmem:[%s310 + $0x68] sm:$0x1]
        %v358 = vld [vmem:[%s310 + $0x70] sm:$0x1]
        %v359 = vld [vmem:[%s310 + $0x78] sm:$0x1]
        %361 = vset.pattern.permute.xlu0 0
        %362 = vperm.xlu0 %361, %v335
        %v363 = vpop.permute.xlu0 %362
        %365 = vset.pattern.permute.xlu0 0
        %366 = vperm.xlu0 %365, %v336
        %v367 = vpop.permute.xlu0 %366
        %v368 = vrot.slane %v363, 1
        %v369 = vrot.slane %v363, 2
        %v370 = vrot.slane %v363, 3
        %v371 = vrot.slane %v363, 4
        %v372 = vrot.slane %v363, 5
        %v373 = vrot.slane %v363, 6
        %v374 = vrot.slane %v363, 7
        %v375 = vrot.slane %v367, 1
        %v376 = vrot.slane %v367, 2
        %v377 = vrot.slane %v367, 3
        %v378 = vrot.slane %v367, 4
        %v379 = vrot.slane %v367, 5
        %v380 = vrot.slane %v367, 6
        %v381 = vrot.slane %v367, 7
        %v398 = vmul.f32 %v344, %v363
        %v399 = vmul.f32 %v345, %v368
        %v400 = vmul.f32 %v346, %v369
        %v401 = vmul.f32 %v347, %v370
        %v402 = vmul.f32 %v348, %v371
        %v403 = vmul.f32 %v349, %v372
        %v404 = vmul.f32 %v350, %v373
        %v405 = vmul.f32 %v351, %v374
        %v406 = vmul.f32 %v352, %v367
        %v407 = vmul.f32 %v353, %v375
        %v408 = vmul.f32 %v354, %v376
        %v409 = vmul.f32 %v355, %v377
        %v410 = vmul.f32 %v356, %v378
        %v411 = vmul.f32 %v357, %v379
        %v412 = vmul.f32 %v358, %v380
        %v413 = vmul.f32 %v359, %v381
        %415 = vset.pattern.permute.xlu0 0
        %416 = vperm.xlu0 %415, %v337
        %v417 = vpop.permute.xlu0 %416
        %419 = vset.pattern.permute.xlu0 0
        %420 = vperm.xlu0 %419, %v338
        %v421 = vpop.permute.xlu0 %420
        %v422 = vrot.slane %v417, 1
        %v423 = vrot.slane %v417, 2
        %v424 = vrot.slane %v417, 3
        %v425 = vrot.slane %v417, 4
        %v426 = vrot.slane %v417, 5
        %v427 = vrot.slane %v417, 6
        %v428 = vrot.slane %v417, 7
        %v429 = vrot.slane %v421, 1
        %v430 = vrot.slane %v421, 2
        %v431 = vrot.slane %v421, 3
        %v432 = vrot.slane %v421, 4
        %v433 = vrot.slane %v421, 5
        %v434 = vrot.slane %v421, 6
        %v435 = vrot.slane %v421, 7
        %v452 = vadd.f32 %v398, %v417
        %v453 = vadd.f32 %v399, %v422
        %v454 = vadd.f32 %v400, %v423
        %v455 = vadd.f32 %v401, %v424
        %v456 = vadd.f32 %v402, %v425
        %v457 = vadd.f32 %v403, %v426
        %v458 = vadd.f32 %v404, %v427
        %v459 = vadd.f32 %v405, %v428
        %v460 = vadd.f32 %v406, %v421
        %v461 = vadd.f32 %v407, %v429
        %v462 = vadd.f32 %v408, %v430
        %v463 = vadd.f32 %v409, %v431
        %v464 = vadd.f32 %v410, %v432
        %v465 = vadd.f32 %v411, %v433
        %v466 = vadd.f32 %v412, %v434
        %v467 = vadd.f32 %v413, %v435
        %v468 = vmax.f32 %v452, 0.0
        %v469 = vmax.f32 %v453, 0.0
        %v470 = vmax.f32 %v454, 0.0
        %v471 = vmax.f32 %v455, 0.0
        %v472 = vmax.f32 %v456, 0.0
        %v473 = vmax.f32 %v457, 0.0
        %v474 = vmax.f32 %v458, 0.0
        %v475 = vmax.f32 %v459, 0.0
        %v476 = vmax.f32 %v460, 0.0
        %v477 = vmax.f32 %v461, 0.0
        %v478 = vmax.f32 %v462, 0.0
        %v479 = vmax.f32 %v463, 0.0
        %v480 = vmax.f32 %v464, 0.0
        %v481 = vmax.f32 %v465, 0.0
        %v482 = vmax.f32 %v466, 0.0
        %v483 = vmax.f32 %v467, 0.0
        %500 = vrot.lane.b32.xlu0 %v468, 96
        %v501 = vpop.permute.xlu0 %500
        %502 = vrot.lane.b32.xlu0 %v469, 96
        %v503 = vpop.permute.xlu0 %502
        %504 = vrot.lane.b32.xlu0 %v470, 96
        %v505 = vpop.permute.xlu0 %504
        %506 = vrot.lane.b32.xlu0 %v471, 96
        %v507 = vpop.permute.xlu0 %506
        %508 = vrot.lane.b32.xlu0 %v472, 96
        %v509 = vpop.permute.xlu0 %508
        %510 = vrot.lane.b32.xlu0 %v473, 96
        %v511 = vpop.permute.xlu0 %510
        %512 = vrot.lane.b32.xlu0 %v474, 96
        %v513 = vpop.permute.xlu0 %512
        %514 = vrot.lane.b32.xlu0 %v475, 96
        %v515 = vpop.permute.xlu0 %514
        %516 = vrot.lane.b32.xlu0 %v476, 96
        %v517 = vpop.permute.xlu0 %516
        %518 = vrot.lane.b32.xlu0 %v477, 96
        %v519 = vpop.permute.xlu0 %518
        %520 = vrot.lane.b32.xlu0 %v478, 96
        %v521 = vpop.permute.xlu0 %520
        %522 = vrot.lane.b32.xlu0 %v479, 96
        %v523 = vpop.permute.xlu0 %522
        %524 = vrot.lane.b32.xlu0 %v480, 96
        %v525 = vpop.permute.xlu0 %524
        %526 = vrot.lane.b32.xlu0 %v481, 96
        %v527 = vpop.permute.xlu0 %526
        %528 = vrot.lane.b32.xlu0 %v482, 96
        %v529 = vpop.permute.xlu0 %528
        %530 = vrot.lane.b32.xlu0 %v483, 96
        %v531 = vpop.permute.xlu0 %530
        %v548 = vadd.f32 %v468, %v501
        %v549 = vadd.f32 %v469, %v503
        %v550 = vadd.f32 %v470, %v505
        %v551 = vadd.f32 %v471, %v507
        %v552 = vadd.f32 %v472, %v509
        %v553 = vadd.f32 %v473, %v511
        %v554 = vadd.f32 %v474, %v513
        %v555 = vadd.f32 %v475, %v515
        %v556 = vadd.f32 %v476, %v517
        %v557 = vadd.f32 %v477, %v519
        %v558 = vadd.f32 %v478, %v521
        %v559 = vadd.f32 %v479, %v523
        %v560 = vadd.f32 %v480, %v525
        %v561 = vadd.f32 %v481, %v527
        %v562 = vadd.f32 %v482, %v529
        %v563 = vadd.f32 %v483, %v531
        %v580 = vrot.slane %v549, 7
        %vm581 = vcmask 1041409
        %v582 = vsel %vm581, %v580, %v548
        %v583 = vrot.slane %v550, 6
        %vm584 = vcmask 1042434
        %v585 = vsel %vm584, %v583, %v582
        %v586 = vrot.slane %v551, 5
        %vm587 = vcmask 1043459
        %v588 = vsel %vm587, %v586, %v585
        %v589 = vrot.slane %v552, 4
        %vm590 = vcmask 1044484
        %v591 = vsel %vm590, %v589, %v588
        %v592 = vrot.slane %v553, 3
        %vm593 = vcmask 1045509
        %v594 = vsel %vm593, %v592, %v591
        %v595 = vrot.slane %v554, 2
        %vm596 = vcmask 1046534
        %v597 = vsel %vm596, %v595, %v594
        %v598 = vrot.slane %v555, 1
        %vm599 = vcmask 1047559
        %v600 = vsel %vm599, %v598, %v597
        %v601 = vrot.slane %v557, 7
        %v602 = vsel %vm581, %v601, %v556
        %v603 = vrot.slane %v558, 6
        %v604 = vsel %vm584, %v603, %v602
        %v605 = vrot.slane %v559, 5
        %v606 = vsel %vm587, %v605, %v604
        %v607 = vrot.slane %v560, 4
        %v608 = vsel %vm590, %v607, %v606
        %v609 = vrot.slane %v561, 3
        %v610 = vsel %vm593, %v609, %v608
        %v611 = vrot.slane %v562, 2
        %v612 = vsel %vm596, %v611, %v610
        %v613 = vrot.slane %v563, 1
        %v614 = vsel %vm599, %v613, %v612
        %vm615 = vcmask 261120
        %v616 = vsel %vm615, %v600, 0
        %v618 = vsel %vm615, %v614, 0
        %620 = vmatprep.subr.mxu0 0.0
        %621 = vmatpush1.msra.mxu0 %v340
        %622 = vmatprep.subr.mxu0 0.0
        %623 = vmatpush1.msra.mxu0 %v341
        %624 = vmatprep.subr.mxu0 0.0
        %625 = vmatpush1.msra.mxu0 %v342
        %626 = vmatprep.subr.mxu0 0.0
        %627 = vmatpush1.msra.mxu0 %v343
        %628 = vmatprep.subr.mxu0 0.0
        %629 = vmatpush1.msra.mxu0 0.0
        %630 = vmatprep.subr.mxu0 0.0
        %631 = vmatpush1.msra.mxu0 0.0
        %632 = vmatprep.subr.mxu0 0.0
        %633 = vmatpush1.msra.mxu0 0.0
        %634 = vmatprep.subr.mxu0 0.0
        %635 = vmatpush1.msra.mxu0 0.0
        %636 = vmatprep.subr.mxu0 0.0
        %637 = vmatpush1.msra.mxu0 0.0
        %638 = vmatprep.subr.mxu0 0.0
        %639 = vmatpush1.msra.mxu0 0.0
        %640 = vmatprep.subr.mxu0 0.0
        %641 = vmatpush1.msra.mxu0 0.0
        %642 = vmatprep.subr.mxu0 0.0
        %643 = vmatpush1.msra.mxu0 0.0
        %644 = vmatprep.subr.mxu0 0.0
        %645 = vmatpush1.msra.mxu0 0.0
        %646 = vmatprep.subr.mxu0 0.0
        %647 = vmatpush1.msra.mxu0 0.0
        %648 = vmatprep.subr.mxu0 0.0
        %649 = vmatpush1.msra.mxu0 0.0
        %650 = vmatprep.subr.mxu0 0.0
        %651 = vmatpush1.msra.mxu0 0.0
        %652 = vmatprep.subr.mxu0 0.0
        %653 = vmatpush1.msra.mxu0 0.0
        %654 = vmatprep.subr.mxu0 0.0
        %655 = vmatpush1.msra.mxu0 0.0
        %656 = vmatprep.subr.mxu0 0.0
        %657 = vmatpush1.msra.mxu0 0.0
        %658 = vmatprep.subr.mxu0 0.0
        %659 = vmatpush1.msra.mxu0 0.0
        %660 = vmatprep.subr.mxu0 0.0
        %661 = vmatpush1.msra.mxu0 0.0
        %662 = vmatprep.subr.mxu0 0.0
        %663 = vmatpush1.msra.mxu0 0.0
        %664 = vmatprep.subr.mxu0 0.0
        %665 = vmatpush1.msra.mxu0 0.0
        %666 = vmatprep.subr.mxu0 0.0
        %667 = vmatpush1.msra.mxu0 0.0
        %668 = vmatprep.subr.mxu0 0.0
        %669 = vmatpush1.msra.mxu0 0.0
        %670 = vmatprep.subr.mxu0 0.0
        %671 = vmatpush1.msra.mxu0 0.0
        %672 = vmatprep.subr.mxu0 0.0
        %673 = vmatpush1.msra.mxu0 0.0
        %674 = vmatprep.subr.mxu0 0.0
        %675 = vmatpush1.msra.mxu0 0.0
        %676 = vmatprep.subr.mxu0 0.0
        %677 = vmatpush1.msra.mxu0 0.0
        %678 = vmatprep.subr.mxu0 0.0
        %679 = vmatpush1.msra.mxu0 0.0
        %680 = vmatprep.subr.mxu0 0.0
        %681 = vmatpush1.msra.mxu0 0.0
        %682 = vmatprep.subr.mxu0 0.0
        %683 = vmatpush1.msra.mxu0 0.0
        %684 = vmatprep.mubr.f32.mxu0 0.0
        %685 = vmatmul.mubr.f32.gmra.mrb[0].mxu0 %v616
        %v686 = vpop.f32.mrb[0].mxu0
        %v687 = vadd.f32 0.0, %v686
        %v688 = vpop.f32.mrb[0].mxu0
        %689 = vmatprep.mubr.f32.mxu0 0.0
        %690 = vmatmul.mubr.f32.gmra.mrb[0].mxu0 %v618
        %v691 = vpop.f32.mrb[0].mxu0
        %v692 = vadd.f32 0.0, %v691
        %v693 = vpop.f32.mrb[0].mxu0
        %694 = vdwg.mxu0
        %vm695 = vcmask 130048
        %v697 = vsel %vm695, %v339, 0
        %699 = vmatprep.subr.mxu0 0.0
        %700 = vmatpush1.msra.mxu0 %v687
        %701 = vmatprep.subr.mxu0 0.0
        %702 = vmatpush1.msra.mxu0 %v692
        %703 = vmatprep.subr.mxu0 0.0
        %704 = vmatpush1.msra.mxu0 0.0
        %705 = vmatprep.subr.mxu0 0.0
        %706 = vmatpush1.msra.mxu0 0.0
        %707 = vmatprep.subr.mxu0 0.0
        %708 = vmatpush1.msra.mxu0 0.0
        %709 = vmatprep.subr.mxu0 0.0
        %710 = vmatpush1.msra.mxu0 0.0
        %711 = vmatprep.subr.mxu0 0.0
        %712 = vmatpush1.msra.mxu0 0.0
        %713 = vmatprep.subr.mxu0 0.0
        %714 = vmatpush1.msra.mxu0 0.0
        %715 = vmatprep.subr.mxu0 0.0
        %716 = vmatpush1.msra.mxu0 0.0
        %717 = vmatprep.subr.mxu0 0.0
        %718 = vmatpush1.msra.mxu0 0.0
        %719 = vmatprep.subr.mxu0 0.0
        %720 = vmatpush1.msra.mxu0 0.0
        %721 = vmatprep.subr.mxu0 0.0
        %722 = vmatpush1.msra.mxu0 0.0
        %723 = vmatprep.subr.mxu0 0.0
        %724 = vmatpush1.msra.mxu0 0.0
        %725 = vmatprep.subr.mxu0 0.0
        %726 = vmatpush1.msra.mxu0 0.0
        %727 = vmatprep.subr.mxu0 0.0
        %728 = vmatpush1.msra.mxu0 0.0
        %729 = vmatprep.subr.mxu0 0.0
        %730 = vmatpush1.msra.mxu0 0.0
        %731 = vmatprep.subr.mxu0 0.0
        %732 = vmatpush1.msra.mxu0 0.0
        %733 = vmatprep.subr.mxu0 0.0
        %734 = vmatpush1.msra.mxu0 0.0
        %735 = vmatprep.subr.mxu0 0.0
        %736 = vmatpush1.msra.mxu0 0.0
        %737 = vmatprep.subr.mxu0 0.0
        %738 = vmatpush1.msra.mxu0 0.0
        %739 = vmatprep.subr.mxu0 0.0
        %740 = vmatpush1.msra.mxu0 0.0
        %741 = vmatprep.subr.mxu0 0.0
        %742 = vmatpush1.msra.mxu0 0.0
        %743 = vmatprep.subr.mxu0 0.0
        %744 = vmatpush1.msra.mxu0 0.0
        %745 = vmatprep.subr.mxu0 0.0
        %746 = vmatpush1.msra.mxu0 0.0
        %747 = vmatprep.subr.mxu0 0.0
        %748 = vmatpush1.msra.mxu0 0.0
        %749 = vmatprep.subr.mxu0 0.0
        %750 = vmatpush1.msra.mxu0 0.0
        %751 = vmatprep.subr.mxu0 0.0
        %752 = vmatpush1.msra.mxu0 0.0
        %753 = vmatprep.subr.mxu0 0.0
        %754 = vmatpush1.msra.mxu0 0.0
        %755 = vmatprep.subr.mxu0 0.0
        %756 = vmatpush1.msra.mxu0 0.0
        %757 = vmatprep.subr.mxu0 0.0
        %758 = vmatpush1.msra.mxu0 0.0
        %759 = vmatprep.subr.mxu0 0.0
        %760 = vmatpush1.msra.mxu0 0.0
        %761 = vmatprep.subr.mxu0 0.0
        %762 = vmatpush1.msra.mxu0 0.0
        %763 = vmatprep.mubr.f32.mxu0 0.0
        %764 = vmatmul.mubr.f32.gmra.mrb[0].mxu0 %v697
        %v765 = vpop.f32.mrb[0].mxu0
        %v766 = vadd.f32 0.0, %v765
        %v767 = vpop.f32.mrb[0].mxu0
        %768 = vdwg.mxu0
        %v770 = vcombine.high %v766, %v766
        %v772 = vunpack.c.l.s4 1966171168
        %v773 = vunpack.c.0.s8 %v772
        %v774 = vlaneseq
        %v775 = vshrl.u32 %v774, 7
        %v776 = vsub.s32 %v773, %v775
        %v777 = vrot.slane %v766, %v776
        %v779 = vunpack.c.l.s4 1966171168
        %v780 = vunpack.c.0.s8 %v779
        %v781 = vlaneseq
        %v782 = vshrl.u32 %v781, 7
        %v783 = vsub.s32 %v780, %v782
        %v784 = vrot.slane %v770, %v783
        %v785 = vcombine.high %v777, %v777
        %v786 = vcombine.high %v784, %v784
        %v788 = vunpack.c.l.s4 1966171168
        %v789 = vunpack.c.0.s8 %v788
        %v790 = vlaneseq
        %v791 = vshrl.u32 %v790, 7
        %v792 = vsub.s32 %v789, %v791
        %v793 = vrot.slane %v777, %v792
        %v795 = vunpack.c.l.s4 1966171168
        %v796 = vunpack.c.0.s8 %v795
        %v797 = vlaneseq
        %v798 = vshrl.u32 %v797, 7
        %v799 = vsub.s32 %v796, %v798
        %v800 = vrot.slane %v784, %v799
        %v802 = vunpack.c.l.s4 1966171168
        %v803 = vunpack.c.0.s8 %v802
        %v804 = vlaneseq
        %v805 = vshrl.u32 %v804, 7
        %v806 = vsub.s32 %v803, %v805
        %v807 = vrot.slane %v785, %v806
        %v809 = vunpack.c.l.s4 1966171168
        %v810 = vunpack.c.0.s8 %v809
        %v811 = vlaneseq
        %v812 = vshrl.u32 %v811, 7
        %v813 = vsub.s32 %v810, %v812
        %v814 = vrot.slane %v786, %v813
        %v815 = vcombine.high %v793, %v793
        %v816 = vcombine.high %v800, %v800
        %v817 = vcombine.high %v807, %v807
        %v818 = vcombine.high %v814, %v814
        %vm827 = vcmask 122880
        %828 = vst.msk [vmem:[%s334] sm:$0x1] %vm827, %v793
        %829 = vst.msk [vmem:[%s334 + $0x8] sm:$0x1] %vm827, %v807
        %830 = vst.msk [vmem:[%s334 + $0x10] sm:$0x1] %vm827, %v815
        %831 = vst.msk [vmem:[%s334 + $0x18] sm:$0x1] %vm827, %v817
        %832 = vst.msk [vmem:[%s334 + $0x20] sm:$0x1] %vm827, %v800
        %833 = vst.msk [vmem:[%s334 + $0x28] sm:$0x1] %vm827, %v814
        %834 = vst.msk [vmem:[%s334 + $0x30] sm:$0x1] %vm827, %v816
        %835 = vst.msk [vmem:[%s334 + $0x38] sm:$0x1] %vm827, %v818
        %v836 = vld [vmem:[%s310 + $0x1] sm:$0x1]
        %v837 = vld [vmem:[%s310 + $0x9] sm:$0x1]
        %v838 = vld [vmem:[%s310 + $0x11] sm:$0x1]
        %v839 = vld [vmem:[%s310 + $0x19] sm:$0x1]
        %v840 = vld [vmem:[%s310 + $0x21] sm:$0x1]
        %v841 = vld [vmem:[%s310 + $0x29] sm:$0x1]
        %v842 = vld [vmem:[%s310 + $0x31] sm:$0x1]
        %v843 = vld [vmem:[%s310 + $0x39] sm:$0x1]
        %v844 = vld [vmem:[%s310 + $0x41] sm:$0x1]
        %v845 = vld [vmem:[%s310 + $0x49] sm:$0x1]
        %v846 = vld [vmem:[%s310 + $0x51] sm:$0x1]
        %v847 = vld [vmem:[%s310 + $0x59] sm:$0x1]
        %v848 = vld [vmem:[%s310 + $0x61] sm:$0x1]
        %v849 = vld [vmem:[%s310 + $0x69] sm:$0x1]
        %v850 = vld [vmem:[%s310 + $0x71] sm:$0x1]
        %v851 = vld [vmem:[%s310 + $0x79] sm:$0x1]
        %v852 = vmul.f32 %v836, %v363
        %v853 = vmul.f32 %v837, %v368
        %v854 = vmul.f32 %v838, %v369
        %v855 = vmul.f32 %v839, %v370
        %v856 = vmul.f32 %v840, %v371
        %v857 = vmul.f32 %v841, %v372
        %v858 = vmul.f32 %v842, %v373
        %v859 = vmul.f32 %v843, %v374
        %v860 = vmul.f32 %v844, %v367
        %v861 = vmul.f32 %v845, %v375
        %v862 = vmul.f32 %v846, %v376
        %v863 = vmul.f32 %v847, %v377
        %v864 = vmul.f32 %v848, %v378
        %v865 = vmul.f32 %v849, %v379
        %v866 = vmul.f32 %v850, %v380
        %v867 = vmul.f32 %v851, %v381
        %v868 = vadd.f32 %v852, %v417
        %v869 = vadd.f32 %v853, %v422
        %v870 = vadd.f32 %v854, %v423
        %v871 = vadd.f32 %v855, %v424
        %v872 = vadd.f32 %v856, %v425
        %v873 = vadd.f32 %v857, %v426
        %v874 = vadd.f32 %v858, %v427
        %v875 = vadd.f32 %v859, %v428
        %v876 = vadd.f32 %v860, %v421
        %v877 = vadd.f32 %v861, %v429
        %v878 = vadd.f32 %v862, %v430
        %v879 = vadd.f32 %v863, %v431
        %v880 = vadd.f32 %v864, %v432
        %v881 = vadd.f32 %v865, %v433
        %v882 = vadd.f32 %v866, %v434
        %v883 = vadd.f32 %v867, %v435
        %v884 = vmax.f32 %v868, 0.0
        %v885 = vmax.f32 %v869, 0.0
        %v886 = vmax.f32 %v870, 0.0
        %v887 = vmax.f32 %v871, 0.0
        %v888 = vmax.f32 %v872, 0.0
        %v889 = vmax.f32 %v873, 0.0
        %v890 = vmax.f32 %v874, 0.0
        %v891 = vmax.f32 %v875, 0.0
        %v892 = vmax.f32 %v876, 0.0
        %v893 = vmax.f32 %v877, 0.0
        %v894 = vmax.f32 %v878, 0.0
        %v895 = vmax.f32 %v879, 0.0
        %v896 = vmax.f32 %v880, 0.0
        %v897 = vmax.f32 %v881, 0.0
        %v898 = vmax.f32 %v882, 0.0
        %v899 = vmax.f32 %v883, 0.0
        %916 = vrot.lane.b32.xlu0 %v884, 96
        %v917 = vpop.permute.xlu0 %916
        %918 = vrot.lane.b32.xlu0 %v885, 96
        %v919 = vpop.permute.xlu0 %918
        %920 = vrot.lane.b32.xlu0 %v886, 96
        %v921 = vpop.permute.xlu0 %920
        %922 = vrot.lane.b32.xlu0 %v887, 96
        %v923 = vpop.permute.xlu0 %922
        %924 = vrot.lane.b32.xlu0 %v888, 96
        %v925 = vpop.permute.xlu0 %924
        %926 = vrot.lane.b32.xlu0 %v889, 96
        %v927 = vpop.permute.xlu0 %926
        %928 = vrot.lane.b32.xlu0 %v890, 96
        %v929 = vpop.permute.xlu0 %928
        %930 = vrot.lane.b32.xlu0 %v891, 96
        %v931 = vpop.permute.xlu0 %930
        %932 = vrot.lane.b32.xlu0 %v892, 96
        %v933 = vpop.permute.xlu0 %932
        %934 = vrot.lane.b32.xlu0 %v893, 96
        %v935 = vpop.permute.xlu0 %934
        %936 = vrot.lane.b32.xlu0 %v894, 96
        %v937 = vpop.permute.xlu0 %936
        %938 = vrot.lane.b32.xlu0 %v895, 96
        %v939 = vpop.permute.xlu0 %938
        %940 = vrot.lane.b32.xlu0 %v896, 96
        %v941 = vpop.permute.xlu0 %940
        %942 = vrot.lane.b32.xlu0 %v897, 96
        %v943 = vpop.permute.xlu0 %942
        %944 = vrot.lane.b32.xlu0 %v898, 96
        %v945 = vpop.permute.xlu0 %944
        %946 = vrot.lane.b32.xlu0 %v899, 96
        %v947 = vpop.permute.xlu0 %946
        %v964 = vadd.f32 %v884, %v917
        %v965 = vadd.f32 %v885, %v919
        %v966 = vadd.f32 %v886, %v921
        %v967 = vadd.f32 %v887, %v923
        %v968 = vadd.f32 %v888, %v925
        %v969 = vadd.f32 %v889, %v927
        %v970 = vadd.f32 %v890, %v929
        %v971 = vadd.f32 %v891, %v931
        %v972 = vadd.f32 %v892, %v933
        %v973 = vadd.f32 %v893, %v935
        %v974 = vadd.f32 %v894, %v937
        %v975 = vadd.f32 %v895, %v939
        %v976 = vadd.f32 %v896, %v941
        %v977 = vadd.f32 %v897, %v943
        %v978 = vadd.f32 %v898, %v945
        %v979 = vadd.f32 %v899, %v947
        %v996 = vrot.slane %v965, 7
        %v997 = vsel %vm581, %v996, %v964
        %v998 = vrot.slane %v966, 6
        %v999 = vsel %vm584, %v998, %v997
        %v1000 = vrot.slane %v967, 5
        %v1001 = vsel %vm587, %v1000, %v999
        %v1002 = vrot.slane %v968, 4
        %v1003 = vsel %vm590, %v1002, %v1001
        %v1004 = vrot.slane %v969, 3
        %v1005 = vsel %vm593, %v1004, %v1003
        %v1006 = vrot.slane %v970, 2
        %v1007 = vsel %vm596, %v1006, %v1005
        %v1008 = vrot.slane %v971, 1
        %v1009 = vsel %vm599, %v1008, %v1007
        %v1010 = vrot.slane %v973, 7
        %v1011 = vsel %vm581, %v1010, %v972
        %v1012 = vrot.slane %v974, 6
        %v1013 = vsel %vm584, %v1012, %v1011
        %v1014 = vrot.slane %v975, 5
        %v1015 = vsel %vm587, %v1014, %v1013
        %v1016 = vrot.slane %v976, 4
        %v1017 = vsel %vm590, %v1016, %v1015
        %v1018 = vrot.slane %v977, 3
        %v1019 = vsel %vm593, %v1018, %v1017
        %v1020 = vrot.slane %v978, 2
        %v1021 = vsel %vm596, %v1020, %v1019
        %v1022 = vrot.slane %v979, 1
        %v1023 = vsel %vm599, %v1022, %v1021
        %v1024 = vsel %vm615, %v1009, 0
        %v1026 = vsel %vm615, %v1023, 0
        %1028 = vmatprep.subr.mxu0 0.0
        %1029 = vmatpush1.msra.mxu0 %v340
        %1030 = vmatprep.subr.mxu0 0.0
        %1031 = vmatpush1.msra.mxu0 %v341
        %1032 = vmatprep.subr.mxu0 0.0
        %1033 = vmatpush1.msra.mxu0 %v342
        %1034 = vmatprep.subr.mxu0 0.0
        %1035 = vmatpush1.msra.mxu0 %v343
        %1036 = vmatprep.subr.mxu0 0.0
        %1037 = vmatpush1.msra.mxu0 0.0
        %1038 = vmatprep.subr.mxu0 0.0
        %1039 = vmatpush1.msra.mxu0 0.0
        %1040 = vmatprep.subr.mxu0 0.0
        %1041 = vmatpush1.msra.mxu0 0.0
        %1042 = vmatprep.subr.mxu0 0.0
        %1043 = vmatpush1.msra.mxu0 0.0
        %1044 = vmatprep.subr.mxu0 0.0
        %1045 = vmatpush1.msra.mxu0 0.0
        %1046 = vmatprep.subr.mxu0 0.0
        %1047 = vmatpush1.msra.mxu0 0.0
        %1048 = vmatprep.subr.mxu0 0.0
        %1049 = vmatpush1.msra.mxu0 0.0
        %1050 = vmatprep.subr.mxu0 0.0
        %1051 = vmatpush1.msra.mxu0 0.0
        %1052 = vmatprep.subr.mxu0 0.0
        %1053 = vmatpush1.msra.mxu0 0.0
        %1054 = vmatprep.subr.mxu0 0.0
        %1055 = vmatpush1.msra.mxu0 0.0
        %1056 = vmatprep.subr.mxu0 0.0
        %1057 = vmatpush1.msra.mxu0 0.0
        %1058 = vmatprep.subr.mxu0 0.0
        %1059 = vmatpush1.msra.mxu0 0.0
        %1060 = vmatprep.subr.mxu0 0.0
        %1061 = vmatpush1.msra.mxu0 0.0
        %1062 = vmatprep.subr.mxu0 0.0
        %1063 = vmatpush1.msra.mxu0 0.0
        %1064 = vmatprep.subr.mxu0 0.0
        %1065 = vmatpush1.msra.mxu0 0.0
        %1066 = vmatprep.subr.mxu0 0.0
        %1067 = vmatpush1.msra.mxu0 0.0
        %1068 = vmatprep.subr.mxu0 0.0
        %1069 = vmatpush1.msra.mxu0 0.0
        %1070 = vmatprep.subr.mxu0 0.0
        %1071 = vmatpush1.msra.mxu0 0.0
        %1072 = vmatprep.subr.mxu0 0.0
        %1073 = vmatpush1.msra.mxu0 0.0
        %1074 = vmatprep.subr.mxu0 0.0
        %1075 = vmatpush1.msra.mxu0 0.0
        %1076 = vmatprep.subr.mxu0 0.0
        %1077 = vmatpush1.msra.mxu0 0.0
        %1078 = vmatprep.subr.mxu0 0.0
        %1079 = vmatpush1.msra.mxu0 0.0
        %1080 = vmatprep.subr.mxu0 0.0
        %1081 = vmatpush1.msra.mxu0 0.0
        %1082 = vmatprep.subr.mxu0 0.0
        %1083 = vmatpush1.msra.mxu0 0.0
        %1084 = vmatprep.subr.mxu0 0.0
        %1085 = vmatpush1.msra.mxu0 0.0
        %1086 = vmatprep.subr.mxu0 0.0
        %1087 = vmatpush1.msra.mxu0 0.0
        %1088 = vmatprep.subr.mxu0 0.0
        %1089 = vmatpush1.msra.mxu0 0.0
        %1090 = vmatprep.subr.mxu0 0.0
        %1091 = vmatpush1.msra.mxu0 0.0
        %1092 = vmatprep.mubr.f32.mxu0 0.0
        %1093 = vmatmul.mubr.f32.gmra.mrb[0].mxu0 %v1024
        %v1094 = vpop.f32.mrb[0].mxu0
        %v1095 = vadd.f32 0.0, %v1094
        %v1096 = vpop.f32.mrb[0].mxu0
        %1097 = vmatprep.mubr.f32.mxu0 0.0
        %1098 = vmatmul.mubr.f32.gmra.mrb[0].mxu0 %v1026
        %v1099 = vpop.f32.mrb[0].mxu0
        %v1100 = vadd.f32 0.0, %v1099
        %v1101 = vpop.f32.mrb[0].mxu0
        %1102 = vdwg.mxu0
        %1103 = vmatprep.subr.mxu0 0.0
        %1104 = vmatpush1.msra.mxu0 %v1095
        %1105 = vmatprep.subr.mxu0 0.0
        %1106 = vmatpush1.msra.mxu0 %v1100
        %1107 = vmatprep.subr.mxu0 0.0
        %1108 = vmatpush1.msra.mxu0 0.0
        %1109 = vmatprep.subr.mxu0 0.0
        %1110 = vmatpush1.msra.mxu0 0.0
        %1111 = vmatprep.subr.mxu0 0.0
        %1112 = vmatpush1.msra.mxu0 0.0
        %1113 = vmatprep.subr.mxu0 0.0
        %1114 = vmatpush1.msra.mxu0 0.0
        %1115 = vmatprep.subr.mxu0 0.0
        %1116 = vmatpush1.msra.mxu0 0.0
        %1117 = vmatprep.subr.mxu0 0.0
        %1118 = vmatpush1.msra.mxu0 0.0
        %1119 = vmatprep.subr.mxu0 0.0
        %1120 = vmatpush1.msra.mxu0 0.0
        %1121 = vmatprep.subr.mxu0 0.0
        %1122 = vmatpush1.msra.mxu0 0.0
        %1123 = vmatprep.subr.mxu0 0.0
        %1124 = vmatpush1.msra.mxu0 0.0
        %1125 = vmatprep.subr.mxu0 0.0
        %1126 = vmatpush1.msra.mxu0 0.0
        %1127 = vmatprep.subr.mxu0 0.0
        %1128 = vmatpush1.msra.mxu0 0.0
        %1129 = vmatprep.subr.mxu0 0.0
        %1130 = vmatpush1.msra.mxu0 0.0
        %1131 = vmatprep.subr.mxu0 0.0
        %1132 = vmatpush1.msra.mxu0 0.0
        %1133 = vmatprep.subr.mxu0 0.0
        %1134 = vmatpush1.msra.mxu0 0.0
        %1135 = vmatprep.subr.mxu0 0.0
        %1136 = vmatpush1.msra.mxu0 0.0
        %1137 = vmatprep.subr.mxu0 0.0
        %1138 = vmatpush1.msra.mxu0 0.0
        %1139 = vmatprep.subr.mxu0 0.0
        %1140 = vmatpush1.msra.mxu0 0.0
        %1141 = vmatprep.subr.mxu0 0.0
        %1142 = vmatpush1.msra.mxu0 0.0
        %1143 = vmatprep.subr.mxu0 0.0
        %1144 = vmatpush1.msra.mxu0 0.0
        %1145 = vmatprep.subr.mxu0 0.0
        %1146 = vmatpush1.msra.mxu0 0.0
        %1147 = vmatprep.subr.mxu0 0.0
        %1148 = vmatpush1.msra.mxu0 0.0
        %1149 = vmatprep.subr.mxu0 0.0
        %1150 = vmatpush1.msra.mxu0 0.0
        %1151 = vmatprep.subr.mxu0 0.0
        %1152 = vmatpush1.msra.mxu0 0.0
        %1153 = vmatprep.subr.mxu0 0.0
        %1154 = vmatpush1.msra.mxu0 0.0
        %1155 = vmatprep.subr.mxu0 0.0
        %1156 = vmatpush1.msra.mxu0 0.0
        %1157 = vmatprep.subr.mxu0 0.0
        %1158 = vmatpush1.msra.mxu0 0.0
        %1159 = vmatprep.subr.mxu0 0.0
        %1160 = vmatpush1.msra.mxu0 0.0
        %1161 = vmatprep.subr.mxu0 0.0
        %1162 = vmatpush1.msra.mxu0 0.0
        %1163 = vmatprep.subr.mxu0 0.0
        %1164 = vmatpush1.msra.mxu0 0.0
        %1165 = vmatprep.subr.mxu0 0.0
        %1166 = vmatpush1.msra.mxu0 0.0
        %1167 = vmatprep.mubr.f32.mxu0 0.0
        %1168 = vmatmul.mubr.f32.gmra.mrb[0].mxu0 %v697
        %v1169 = vpop.f32.mrb[0].mxu0
        %v1170 = vadd.f32 0.0, %v1169
        %v1171 = vpop.f32.mrb[0].mxu0
        %1172 = vdwg.mxu0
        %v1174 = vcombine.high %v1170, %v1170
        %v1176 = vunpack.c.l.s4 1966171168
        %v1177 = vunpack.c.0.s8 %v1176
        %v1178 = vlaneseq
        %v1179 = vshrl.u32 %v1178, 7
        %v1180 = vsub.s32 %v1177, %v1179
        %v1181 = vrot.slane %v1170, %v1180
        %v1183 = vunpack.c.l.s4 1966171168
        %v1184 = vunpack.c.0.s8 %v1183
        %v1185 = vlaneseq
        %v1186 = vshrl.u32 %v1185, 7
        %v1187 = vsub.s32 %v1184, %v1186
        %v1188 = vrot.slane %v1174, %v1187
        %v1189 = vcombine.high %v1181, %v1181
        %v1190 = vcombine.high %v1188, %v1188
        %v1192 = vunpack.c.l.s4 1966171168
        %v1193 = vunpack.c.0.s8 %v1192
        %v1194 = vlaneseq
        %v1195 = vshrl.u32 %v1194, 7
        %v1196 = vsub.s32 %v1193, %v1195
        %v1197 = vrot.slane %v1181, %v1196
        %v1199 = vunpack.c.l.s4 1966171168
        %v1200 = vunpack.c.0.s8 %v1199
        %v1201 = vlaneseq
        %v1202 = vshrl.u32 %v1201, 7
        %v1203 = vsub.s32 %v1200, %v1202
        %v1204 = vrot.slane %v1188, %v1203
        %v1206 = vunpack.c.l.s4 1966171168
        %v1207 = vunpack.c.0.s8 %v1206
        %v1208 = vlaneseq
        %v1209 = vshrl.u32 %v1208, 7
        %v1210 = vsub.s32 %v1207, %v1209
        %v1211 = vrot.slane %v1189, %v1210
        %v1213 = vunpack.c.l.s4 1966171168
        %v1214 = vunpack.c.0.s8 %v1213
        %v1215 = vlaneseq
        %v1216 = vshrl.u32 %v1215, 7
        %v1217 = vsub.s32 %v1214, %v1216
        %v1218 = vrot.slane %v1190, %v1217
        %v1219 = vcombine.high %v1197, %v1197
        %v1220 = vcombine.high %v1204, %v1204
        %v1221 = vcombine.high %v1211, %v1211
        %v1222 = vcombine.high %v1218, %v1218
        %1231 = vst.msk [vmem:[%s334 + $0x1] sm:$0x1] %vm827, %v1197
        %1232 = vst.msk [vmem:[%s334 + $0x9] sm:$0x1] %vm827, %v1211
        %1233 = vst.msk [vmem:[%s334 + $0x11] sm:$0x1] %vm827, %v1219
        %1234 = vst.msk [vmem:[%s334 + $0x19] sm:$0x1] %vm827, %v1221
        %1235 = vst.msk [vmem:[%s334 + $0x21] sm:$0x1] %vm827, %v1204
        %1236 = vst.msk [vmem:[%s334 + $0x29] sm:$0x1] %vm827, %v1218
        %1237 = vst.msk [vmem:[%s334 + $0x31] sm:$0x1] %vm827, %v1220
        %1238 = vst.msk [vmem:[%s334 + $0x39] sm:$0x1] %vm827, %v1222
        %v1239 = vld [vmem:[%s310 + $0x2] sm:$0x1]
        %v1240 = vld [vmem:[%s310 + $0xa] sm:$0x1]
        %v1241 = vld [vmem:[%s310 + $0x12] sm:$0x1]
        %v1242 = vld [vmem:[%s310 + $0x1a] sm:$0x1]
        %v1243 = vld [vmem:[%s310 + $0x22] sm:$0x1]
        %v1244 = vld [vmem:[%s310 + $0x2a] sm:$0x1]
        %v1245 = vld [vmem:[%s310 + $0x32] sm:$0x1]
        %v1246 = vld [vmem:[%s310 + $0x3a] sm:$0x1]
        %v1247 = vld [vmem:[%s310 + $0x42] sm:$0x1]
        %v1248 = vld [vmem:[%s310 + $0x4a] sm:$0x1]
        %v1249 = vld [vmem:[%s310 + $0x52] sm:$0x1]
        %v1250 = vld [vmem:[%s310 + $0x5a] sm:$0x1]
        %v1251 = vld [vmem:[%s310 + $0x62] sm:$0x1]
        %v1252 = vld [vmem:[%s310 + $0x6a] sm:$0x1]
        %v1253 = vld [vmem:[%s310 + $0x72] sm:$0x1]
        %v1254 = vld [vmem:[%s310 + $0x7a] sm:$0x1]
        %v1255 = vmul.f32 %v1239, %v363
        %v1256 = vmul.f32 %v1240, %v368
        %v1257 = vmul.f32 %v1241, %v369
        %v1258 = vmul.f32 %v1242, %v370
        %v1259 = vmul.f32 %v1243, %v371
        %v1260 = vmul.f32 %v1244, %v372
        %v1261 = vmul.f32 %v1245, %v373
        %v1262 = vmul.f32 %v1246, %v374
        %v1263 = vmul.f32 %v1247, %v367
        %v1264 = vmul.f32 %v1248, %v375
        %v1265 = vmul.f32 %v1249, %v376
        %v1266 = vmul.f32 %v1250, %v377
        %v1267 = vmul.f32 %v1251, %v378
        %v1268 = vmul.f32 %v1252, %v379
        %v1269 = vmul.f32 %v1253, %v380
        %v1270 = vmul.f32 %v1254, %v381
        %v1271 = vadd.f32 %v1255, %v417
        %v1272 = vadd.f32 %v1256, %v422
        %v1273 = vadd.f32 %v1257, %v423
        %v1274 = vadd.f32 %v1258, %v424
        %v1275 = vadd.f32 %v1259, %v425
        %v1276 = vadd.f32 %v1260, %v426
        %v1277 = vadd.f32 %v1261, %v427
        %v1278 = vadd.f32 %v1262, %v428
        %v1279 = vadd.f32 %v1263, %v421
        %v1280 = vadd.f32 %v1264, %v429
        %v1281 = vadd.f32 %v1265, %v430
        %v1282 = vadd.f32 %v1266, %v431
        %v1283 = vadd.f32 %v1267, %v432
        %v1284 = vadd.f32 %v1268, %v433
        %v1285 = vadd.f32 %v1269, %v434
        %v1286 = vadd.f32 %v1270, %v435
        %v1287 = vmax.f32 %v1271, 0.0
        %v1288 = vmax.f32 %v1272, 0.0
        %v1289 = vmax.f32 %v1273, 0.0
        %v1290 = vmax.f32 %v1274, 0.0
        %v1291 = vmax.f32 %v1275, 0.0
        %v1292 = vmax.f32 %v1276, 0.0
        %v1293 = vmax.f32 %v1277, 0.0
        %v1294 = vmax.f32 %v1278, 0.0
        %v1295 = vmax.f32 %v1279, 0.0
        %v1296 = vmax.f32 %v1280, 0.0
        %v1297 = vmax.f32 %v1281, 0.0
        %v1298 = vmax.f32 %v1282, 0.0
        %v1299 = vmax.f32 %v1283, 0.0
        %v1300 = vmax.f32 %v1284, 0.0
        %v1301 = vmax.f32 %v1285, 0.0
        %v1302 = vmax.f32 %v1286, 0.0
        %1319 = vrot.lane.b32.xlu0 %v1287, 96
        %v1320 = vpop.permute.xlu0 %1319
        %1321 = vrot.lane.b32.xlu0 %v1288, 96
        %v1322 = vpop.permute.xlu0 %1321
        %1323 = vrot.lane.b32.xlu0 %v1289, 96
        %v1324 = vpop.permute.xlu0 %1323
        %1325 = vrot.lane.b32.xlu0 %v1290, 96
        %v1326 = vpop.permute.xlu0 %1325
        %1327 = vrot.lane.b32.xlu0 %v1291, 96
        %v1328 = vpop.permute.xlu0 %1327
        %1329 = vrot.lane.b32.xlu0 %v1292, 96
        %v1330 = vpop.permute.xlu0 %1329
        %1331 = vrot.lane.b32.xlu0 %v1293, 96
        %v1332 = vpop.permute.xlu0 %1331
        %1333 = vrot.lane.b32.xlu0 %v1294, 96
        %v1334 = vpop.permute.xlu0 %1333
        %1335 = vrot.lane.b32.xlu0 %v1295, 96
        %v1336 = vpop.permute.xlu0 %1335
        %1337 = vrot.lane.b32.xlu0 %v1296, 96
        %v1338 = vpop.permute.xlu0 %1337
        %1339 = vrot.lane.b32.xlu0 %v1297, 96
        %v1340 = vpop.permute.xlu0 %1339
        %1341 = vrot.lane.b32.xlu0 %v1298, 96
        %v1342 = vpop.permute.xlu0 %1341
        %1343 = vrot.lane.b32.xlu0 %v1299, 96
        %v1344 = vpop.permute.xlu0 %1343
        %1345 = vrot.lane.b32.xlu0 %v1300, 96
        %v1346 = vpop.permute.xlu0 %1345
        %1347 = vrot.lane.b32.xlu0 %v1301, 96
        %v1348 = vpop.permute.xlu0 %1347
        %1349 = vrot.lane.b32.xlu0 %v1302, 96
        %v1350 = vpop.permute.xlu0 %1349
        %v1367 = vadd.f32 %v1287, %v1320
        %v1368 = vadd.f32 %v1288, %v1322
        %v1369 = vadd.f32 %v1289, %v1324
        %v1370 = vadd.f32 %v1290, %v1326
        %v1371 = vadd.f32 %v1291, %v1328
        %v1372 = vadd.f32 %v1292, %v1330
        %v1373 = vadd.f32 %v1293, %v1332
        %v1374 = vadd.f32 %v1294, %v1334
        %v1375 = vadd.f32 %v1295, %v1336
        %v1376 = vadd.f32 %v1296, %v1338
        %v1377 = vadd.f32 %v1297, %v1340
        %v1378 = vadd.f32 %v1298, %v1342
        %v1379 = vadd.f32 %v1299, %v1344
        %v1380 = vadd.f32 %v1300, %v1346
        %v1381 = vadd.f32 %v1301, %v1348
        %v1382 = vadd.f32 %v1302, %v1350
        %v1399 = vrot.slane %v1368, 7
        %v1400 = vsel %vm581, %v1399, %v1367
        %v1401 = vrot.slane %v1369, 6
        %v1402 = vsel %vm584, %v1401, %v1400
        %v1403 = vrot.slane %v1370, 5
        %v1404 = vsel %vm587, %v1403, %v1402
        %v1405 = vrot.slane %v1371, 4
        %v1406 = vsel %vm590, %v1405, %v1404
        %v1407 = vrot.slane %v1372, 3
        %v1408 = vsel %vm593, %v1407, %v1406
        %v1409 = vrot.slane %v1373, 2
        %v1410 = vsel %vm596, %v1409, %v1408
        %v1411 = vrot.slane %v1374, 1
        %v1412 = vsel %vm599, %v1411, %v1410
        %v1413 = vrot.slane %v1376, 7
        %v1414 = vsel %vm581, %v1413, %v1375
        %v1415 = vrot.slane %v1377, 6
        %v1416 = vsel %vm584, %v1415, %v1414
        %v1417 = vrot.slane %v1378, 5
        %v1418 = vsel %vm587, %v1417, %v1416
        %v1419 = vrot.slane %v1379, 4
        %v1420 = vsel %vm590, %v1419, %v1418
        %v1421 = vrot.slane %v1380, 3
        %v1422 = vsel %vm593, %v1421, %v1420
        %v1423 = vrot.slane %v1381, 2
        %v1424 = vsel %vm596, %v1423, %v1422
        %v1425 = vrot.slane %v1382, 1
        %v1426 = vsel %vm599, %v1425, %v1424
        %v1427 = vsel %vm615, %v1412, 0
        %v1429 = vsel %vm615, %v1426, 0
        %1431 = vmatprep.subr.mxu0 0.0
        %1432 = vmatpush1.msra.mxu0 %v340
        %1433 = vmatprep.subr.mxu0 0.0
        %1434 = vmatpush1.msra.mxu0 %v341
        %1435 = vmatprep.subr.mxu0 0.0
        %1436 = vmatpush1.msra.mxu0 %v342
        %1437 = vmatprep.subr.mxu0 0.0
        %1438 = vmatpush1.msra.mxu0 %v343
        %1439 = vmatprep.subr.mxu0 0.0
        %1440 = vmatpush1.msra.mxu0 0.0
        %1441 = vmatprep.subr.mxu0 0.0
        %1442 = vmatpush1.msra.mxu0 0.0
        %1443 = vmatprep.subr.mxu0 0.0
        %1444 = vmatpush1.msra.mxu0 0.0
        %1445 = vmatprep.subr.mxu0 0.0
        %1446 = vmatpush1.msra.mxu0 0.0
        %1447 = vmatprep.subr.mxu0 0.0
        %1448 = vmatpush1.msra.mxu0 0.0
        %1449 = vmatprep.subr.mxu0 0.0
        %1450 = vmatpush1.msra.mxu0 0.0
        %1451 = vmatprep.subr.mxu0 0.0
        %1452 = vmatpush1.msra.mxu0 0.0
        %1453 = vmatprep.subr.mxu0 0.0
        %1454 = vmatpush1.msra.mxu0 0.0
        %1455 = vmatprep.subr.mxu0 0.0
        %1456 = vmatpush1.msra.mxu0 0.0
        %1457 = vmatprep.subr.mxu0 0.0
        %1458 = vmatpush1.msra.mxu0 0.0
        %1459 = vmatprep.subr.mxu0 0.0
        %1460 = vmatpush1.msra.mxu0 0.0
        %1461 = vmatprep.subr.mxu0 0.0
        %1462 = vmatpush1.msra.mxu0 0.0
        %1463 = vmatprep.subr.mxu0 0.0
        %1464 = vmatpush1.msra.mxu0 0.0
        %1465 = vmatprep.subr.mxu0 0.0
        %1466 = vmatpush1.msra.mxu0 0.0
        %1467 = vmatprep.subr.mxu0 0.0
        %1468 = vmatpush1.msra.mxu0 0.0
        %1469 = vmatprep.subr.mxu0 0.0
        %1470 = vmatpush1.msra.mxu0 0.0
        %1471 = vmatprep.subr.mxu0 0.0
        %1472 = vmatpush1.msra.mxu0 0.0
        %1473 = vmatprep.subr.mxu0 0.0
        %1474 = vmatpush1.msra.mxu0 0.0
        %1475 = vmatprep.subr.mxu0 0.0
        %1476 = vmatpush1.msra.mxu0 0.0
        %1477 = vmatprep.subr.mxu0 0.0
        %1478 = vmatpush1.msra.mxu0 0.0
        %1479 = vmatprep.subr.mxu0 0.0
        %1480 = vmatpush1.msra.mxu0 0.0
        %1481 = vmatprep.subr.mxu0 0.0
        %1482 = vmatpush1.msra.mxu0 0.0
        %1483 = vmatprep.subr.mxu0 0.0
        %1484 = vmatpush1.msra.mxu0 0.0
        %1485 = vmatprep.subr.mxu0 0.0
        %1486 = vmatpush1.msra.mxu0 0.0
        %1487 = vmatprep.subr.mxu0 0.0
        %1488 = vmatpush1.msra.mxu0 0.0
        %1489 = vmatprep.subr.mxu0 0.0
        %1490 = vmatpush1.msra.mxu0 0.0
        %1491 = vmatprep.subr.mxu0 0.0
        %1492 = vmatpush1.msra.mxu0 0.0
        %1493 = vmatprep.subr.mxu0 0.0
        %1494 = vmatpush1.msra.mxu0 0.0
        %1495 = vmatprep.mubr.f32.mxu0 0.0
        %1496 = vmatmul.mubr.f32.gmra.mrb[0].mxu0 %v1427
        %v1497 = vpop.f32.mrb[0].mxu0
        %v1498 = vadd.f32 0.0, %v1497
        %v1499 = vpop.f32.mrb[0].mxu0
        %1500 = vmatprep.mubr.f32.mxu0 0.0
        %1501 = vmatmul.mubr.f32.gmra.mrb[0].mxu0 %v1429
        %v1502 = vpop.f32.mrb[0].mxu0
        %v1503 = vadd.f32 0.0, %v1502
        %v1504 = vpop.f32.mrb[0].mxu0
        %1505 = vdwg.mxu0
        %1506 = vmatprep.subr.mxu0 0.0
        %1507 = vmatpush1.msra.mxu0 %v1498
        %1508 = vmatprep.subr.mxu0 0.0
        %1509 = vmatpush1.msra.mxu0 %v1503
        %1510 = vmatprep.subr.mxu0 0.0
        %1511 = vmatpush1.msra.mxu0 0.0
        %1512 = vmatprep.subr.mxu0 0.0
        %1513 = vmatpush1.msra.mxu0 0.0
        %1514 = vmatprep.subr.mxu0 0.0
        %1515 = vmatpush1.msra.mxu0 0.0
        %1516 = vmatprep.subr.mxu0 0.0
        %1517 = vmatpush1.msra.mxu0 0.0
        %1518 = vmatprep.subr.mxu0 0.0
        %1519 = vmatpush1.msra.mxu0 0.0
        %1520 = vmatprep.subr.mxu0 0.0
        %1521 = vmatpush1.msra.mxu0 0.0
        %1522 = vmatprep.subr.mxu0 0.0
        %1523 = vmatpush1.msra.mxu0 0.0
        %1524 = vmatprep.subr.mxu0 0.0
        %1525 = vmatpush1.msra.mxu0 0.0
        %1526 = vmatprep.subr.mxu0 0.0
        %1527 = vmatpush1.msra.mxu0 0.0
        %1528 = vmatprep.subr.mxu0 0.0
        %1529 = vmatpush1.msra.mxu0 0.0
        %1530 = vmatprep.subr.mxu0 0.0
        %1531 = vmatpush1.msra.mxu0 0.0
        %1532 = vmatprep.subr.mxu0 0.0
        %1533 = vmatpush1.msra.mxu0 0.0
        %1534 = vmatprep.subr.mxu0 0.0
        %1535 = vmatpush1.msra.mxu0 0.0
        %1536 = vmatprep.subr.mxu0 0.0
        %1537 = vmatpush1.msra.mxu0 0.0
        %1538 = vmatprep.subr.mxu0 0.0
        %1539 = vmatpush1.msra.mxu0 0.0
        %1540 = vmatprep.subr.mxu0 0.0
        %1541 = vmatpush1.msra.mxu0 0.0
        %1542 = vmatprep.subr.mxu0 0.0
        %1543 = vmatpush1.msra.mxu0 0.0
        %1544 = vmatprep.subr.mxu0 0.0
        %1545 = vmatpush1.msra.mxu0 0.0
        %1546 = vmatprep.subr.mxu0 0.0
        %1547 = vmatpush1.msra.mxu0 0.0
        %1548 = vmatprep.subr.mxu0 0.0
        %1549 = vmatpush1.msra.mxu0 0.0
        %1550 = vmatprep.subr.mxu0 0.0
        %1551 = vmatpush1.msra.mxu0 0.0
        %1552 = vmatprep.subr.mxu0 0.0
        %1553 = vmatpush1.msra.mxu0 0.0
        %1554 = vmatprep.subr.mxu0 0.0
        %1555 = vmatpush1.msra.mxu0 0.0
        %1556 = vmatprep.subr.mxu0 0.0
        %1557 = vmatpush1.msra.mxu0 0.0
        %1558 = vmatprep.subr.mxu0 0.0
        %1559 = vmatpush1.msra.mxu0 0.0
        %1560 = vmatprep.subr.mxu0 0.0
        %1561 = vmatpush1.msra.mxu0 0.0
        %1562 = vmatprep.subr.mxu0 0.0
        %1563 = vmatpush1.msra.mxu0 0.0
        %1564 = vmatprep.subr.mxu0 0.0
        %1565 = vmatpush1.msra.mxu0 0.0
        %1566 = vmatprep.subr.mxu0 0.0
        %1567 = vmatpush1.msra.mxu0 0.0
        %1568 = vmatprep.subr.mxu0 0.0
        %1569 = vmatpush1.msra.mxu0 0.0
        %1570 = vmatprep.mubr.f32.mxu0 0.0
        %1571 = vmatmul.mubr.f32.gmra.mrb[0].mxu0 %v697
        %v1572 = vpop.f32.mrb[0].mxu0
        %v1573 = vadd.f32 0.0, %v1572
        %v1574 = vpop.f32.mrb[0].mxu0
        %1575 = vdwg.mxu0
        %v1577 = vcombine.high %v1573, %v1573
        %v1579 = vunpack.c.l.s4 1966171168
        %v1580 = vunpack.c.0.s8 %v1579
        %v1581 = vlaneseq
        %v1582 = vshrl.u32 %v1581, 7
        %v1583 = vsub.s32 %v1580, %v1582
        %v1584 = vrot.slane %v1573, %v1583
        %v1586 = vunpack.c.l.s4 1966171168
        %v1587 = vunpack.c.0.s8 %v1586
        %v1588 = vlaneseq
        %v1589 = vshrl.u32 %v1588, 7
        %v1590 = vsub.s32 %v1587, %v1589
        %v1591 = vrot.slane %v1577, %v1590
        %v1592 = vcombine.high %v1584, %v1584
        %v1593 = vcombine.high %v1591, %v1591
        %v1595 = vunpack.c.l.s4 1966171168
        %v1596 = vunpack.c.0.s8 %v1595
        %v1597 = vlaneseq
        %v1598 = vshrl.u32 %v1597, 7
        %v1599 = vsub.s32 %v1596, %v1598
        %v1600 = vrot.slane %v1584, %v1599
        %v1602 = vunpack.c.l.s4 1966171168
        %v1603 = vunpack.c.0.s8 %v1602
        %v1604 = vlaneseq
        %v1605 = vshrl.u32 %v1604, 7
        %v1606 = vsub.s32 %v1603, %v1605
        %v1607 = vrot.slane %v1591, %v1606
        %v1609 = vunpack.c.l.s4 1966171168
        %v1610 = vunpack.c.0.s8 %v1609
        %v1611 = vlaneseq
        %v1612 = vshrl.u32 %v1611, 7
        %v1613 = vsub.s32 %v1610, %v1612
        %v1614 = vrot.slane %v1592, %v1613
        %v1616 = vunpack.c.l.s4 1966171168
        %v1617 = vunpack.c.0.s8 %v1616
        %v1618 = vlaneseq
        %v1619 = vshrl.u32 %v1618, 7
        %v1620 = vsub.s32 %v1617, %v1619
        %v1621 = vrot.slane %v1593, %v1620
        %v1622 = vcombine.high %v1600, %v1600
        %v1623 = vcombine.high %v1607, %v1607
        %v1624 = vcombine.high %v1614, %v1614
        %v1625 = vcombine.high %v1621, %v1621
        %1634 = vst.msk [vmem:[%s334 + $0x2] sm:$0x1] %vm827, %v1600
        %1635 = vst.msk [vmem:[%s334 + $0xa] sm:$0x1] %vm827, %v1614
        %1636 = vst.msk [vmem:[%s334 + $0x12] sm:$0x1] %vm827, %v1622
        %1637 = vst.msk [vmem:[%s334 + $0x1a] sm:$0x1] %vm827, %v1624
        %1638 = vst.msk [vmem:[%s334 + $0x22] sm:$0x1] %vm827, %v1607
        %1639 = vst.msk [vmem:[%s334 + $0x2a] sm:$0x1] %vm827, %v1621
        %1640 = vst.msk [vmem:[%s334 + $0x32] sm:$0x1] %vm827, %v1623
        %1641 = vst.msk [vmem:[%s334 + $0x3a] sm:$0x1] %vm827, %v1625
        %v1642 = vld [vmem:[%s310 + $0x3] sm:$0x1]
        %v1643 = vld [vmem:[%s310 + $0xb] sm:$0x1]
        %v1644 = vld [vmem:[%s310 + $0x13] sm:$0x1]
        %v1645 = vld [vmem:[%s310 + $0x1b] sm:$0x1]
        %v1646 = vld [vmem:[%s310 + $0x23] sm:$0x1]
        %v1647 = vld [vmem:[%s310 + $0x2b] sm:$0x1]
        %v1648 = vld [vmem:[%s310 + $0x33] sm:$0x1]
        %v1649 = vld [vmem:[%s310 + $0x3b] sm:$0x1]
        %v1650 = vld [vmem:[%s310 + $0x43] sm:$0x1]
        %v1651 = vld [vmem:[%s310 + $0x4b] sm:$0x1]
        %v1652 = vld [vmem:[%s310 + $0x53] sm:$0x1]
        %v1653 = vld [vmem:[%s310 + $0x5b] sm:$0x1]
        %v1654 = vld [vmem:[%s310 + $0x63] sm:$0x1]
        %v1655 = vld [vmem:[%s310 + $0x6b] sm:$0x1]
        %v1656 = vld [vmem:[%s310 + $0x73] sm:$0x1]
        %v1657 = vld [vmem:[%s310 + $0x7b] sm:$0x1]
        %v1658 = vmul.f32 %v1642, %v363
        %v1659 = vmul.f32 %v1643, %v368
        %v1660 = vmul.f32 %v1644, %v369
        %v1661 = vmul.f32 %v1645, %v370
        %v1662 = vmul.f32 %v1646, %v371
        %v1663 = vmul.f32 %v1647, %v372
        %v1664 = vmul.f32 %v1648, %v373
        %v1665 = vmul.f32 %v1649, %v374
        %v1666 = vmul.f32 %v1650, %v367
        %v1667 = vmul.f32 %v1651, %v375
        %v1668 = vmul.f32 %v1652, %v376
        %v1669 = vmul.f32 %v1653, %v377
        %v1670 = vmul.f32 %v1654, %v378
        %v1671 = vmul.f32 %v1655, %v379
        %v1672 = vmul.f32 %v1656, %v380
        %v1673 = vmul.f32 %v1657, %v381
        %v1674 = vadd.f32 %v1658, %v417
        %v1675 = vadd.f32 %v1659, %v422
        %v1676 = vadd.f32 %v1660, %v423
        %v1677 = vadd.f32 %v1661, %v424
        %v1678 = vadd.f32 %v1662, %v425
        %v1679 = vadd.f32 %v1663, %v426
        %v1680 = vadd.f32 %v1664, %v427
        %v1681 = vadd.f32 %v1665, %v428
        %v1682 = vadd.f32 %v1666, %v421
        %v1683 = vadd.f32 %v1667, %v429
        %v1684 = vadd.f32 %v1668, %v430
        %v1685 = vadd.f32 %v1669, %v431
        %v1686 = vadd.f32 %v1670, %v432
        %v1687 = vadd.f32 %v1671, %v433
        %v1688 = vadd.f32 %v1672, %v434
        %v1689 = vadd.f32 %v1673, %v435
        %v1690 = vmax.f32 %v1674, 0.0
        %v1691 = vmax.f32 %v1675, 0.0
        %v1692 = vmax.f32 %v1676, 0.0
        %v1693 = vmax.f32 %v1677, 0.0
        %v1694 = vmax.f32 %v1678, 0.0
        %v1695 = vmax.f32 %v1679, 0.0
        %v1696 = vmax.f32 %v1680, 0.0
        %v1697 = vmax.f32 %v1681, 0.0
        %v1698 = vmax.f32 %v1682, 0.0
        %v1699 = vmax.f32 %v1683, 0.0
        %v1700 = vmax.f32 %v1684, 0.0
        %v1701 = vmax.f32 %v1685, 0.0
        %v1702 = vmax.f32 %v1686, 0.0
        %v1703 = vmax.f32 %v1687, 0.0
        %v1704 = vmax.f32 %v1688, 0.0
        %v1705 = vmax.f32 %v1689, 0.0
        %1722 = vrot.lane.b32.xlu0 %v1690, 96
        %v1723 = vpop.permute.xlu0 %1722
        %1724 = vrot.lane.b32.xlu0 %v1691, 96
        %v1725 = vpop.permute.xlu0 %1724
        %1726 = vrot.lane.b32.xlu0 %v1692, 96
        %v1727 = vpop.permute.xlu0 %1726
        %1728 = vrot.lane.b32.xlu0 %v1693, 96
        %v1729 = vpop.permute.xlu0 %1728
        %1730 = vrot.lane.b32.xlu0 %v1694, 96
        %v1731 = vpop.permute.xlu0 %1730
        %1732 = vrot.lane.b32.xlu0 %v1695, 96
        %v1733 = vpop.permute.xlu0 %1732
        %1734 = vrot.lane.b32.xlu0 %v1696, 96
        %v1735 = vpop.permute.xlu0 %1734
        %1736 = vrot.lane.b32.xlu0 %v1697, 96
        %v1737 = vpop.permute.xlu0 %1736
        %1738 = vrot.lane.b32.xlu0 %v1698, 96
        %v1739 = vpop.permute.xlu0 %1738
        %1740 = vrot.lane.b32.xlu0 %v1699, 96
        %v1741 = vpop.permute.xlu0 %1740
        %1742 = vrot.lane.b32.xlu0 %v1700, 96
        %v1743 = vpop.permute.xlu0 %1742
        %1744 = vrot.lane.b32.xlu0 %v1701, 96
        %v1745 = vpop.permute.xlu0 %1744
        %1746 = vrot.lane.b32.xlu0 %v1702, 96
        %v1747 = vpop.permute.xlu0 %1746
        %1748 = vrot.lane.b32.xlu0 %v1703, 96
        %v1749 = vpop.permute.xlu0 %1748
        %1750 = vrot.lane.b32.xlu0 %v1704, 96
        %v1751 = vpop.permute.xlu0 %1750
        %1752 = vrot.lane.b32.xlu0 %v1705, 96
        %v1753 = vpop.permute.xlu0 %1752
        %v1770 = vadd.f32 %v1690, %v1723
        %v1771 = vadd.f32 %v1691, %v1725
        %v1772 = vadd.f32 %v1692, %v1727
        %v1773 = vadd.f32 %v1693, %v1729
        %v1774 = vadd.f32 %v1694, %v1731
        %v1775 = vadd.f32 %v1695, %v1733
        %v1776 = vadd.f32 %v1696, %v1735
        %v1777 = vadd.f32 %v1697, %v1737
        %v1778 = vadd.f32 %v1698, %v1739
        %v1779 = vadd.f32 %v1699, %v1741
        %v1780 = vadd.f32 %v1700, %v1743
        %v1781 = vadd.f32 %v1701, %v1745
        %v1782 = vadd.f32 %v1702, %v1747
        %v1783 = vadd.f32 %v1703, %v1749
        %v1784 = vadd.f32 %v1704, %v1751
        %v1785 = vadd.f32 %v1705, %v1753
        %v1802 = vrot.slane %v1771, 7
        %v1803 = vsel %vm581, %v1802, %v1770
        %v1804 = vrot.slane %v1772, 6
        %v1805 = vsel %vm584, %v1804, %v1803
        %v1806 = vrot.slane %v1773, 5
        %v1807 = vsel %vm587, %v1806, %v1805
        %v1808 = vrot.slane %v1774, 4
        %v1809 = vsel %vm590, %v1808, %v1807
        %v1810 = vrot.slane %v1775, 3
        %v1811 = vsel %vm593, %v1810, %v1809
        %v1812 = vrot.slane %v1776, 2
        %v1813 = vsel %vm596, %v1812, %v1811
        %v1814 = vrot.slane %v1777, 1
        %v1815 = vsel %vm599, %v1814, %v1813
        %v1816 = vrot.slane %v1779, 7
        %v1817 = vsel %vm581, %v1816, %v1778
        %v1818 = vrot.slane %v1780, 6
        %v1819 = vsel %vm584, %v1818, %v1817
        %v1820 = vrot.slane %v1781, 5
        %v1821 = vsel %vm587, %v1820, %v1819
        %v1822 = vrot.slane %v1782, 4
        %v1823 = vsel %vm590, %v1822, %v1821
        %v1824 = vrot.slane %v1783, 3
        %v1825 = vsel %vm593, %v1824, %v1823
        %v1826 = vrot.slane %v1784, 2
        %v1827 = vsel %vm596, %v1826, %v1825
        %v1828 = vrot.slane %v1785, 1
        %v1829 = vsel %vm599, %v1828, %v1827
        %v1830 = vsel %vm615, %v1815, 0
        %v1832 = vsel %vm615, %v1829, 0
        %1834 = vmatprep.subr.mxu0 0.0
        %1835 = vmatpush1.msra.mxu0 %v340
        %1836 = vmatprep.subr.mxu0 0.0
        %1837 = vmatpush1.msra.mxu0 %v341
        %1838 = vmatprep.subr.mxu0 0.0
        %1839 = vmatpush1.msra.mxu0 %v342
        %1840 = vmatprep.subr.mxu0 0.0
        %1841 = vmatpush1.msra.mxu0 %v343
        %1842 = vmatprep.subr.mxu0 0.0
        %1843 = vmatpush1.msra.mxu0 0.0
        %1844 = vmatprep.subr.mxu0 0.0
        %1845 = vmatpush1.msra.mxu0 0.0
        %1846 = vmatprep.subr.mxu0 0.0
        %1847 = vmatpush1.msra.mxu0 0.0
        %1848 = vmatprep.subr.mxu0 0.0
        %1849 = vmatpush1.msra.mxu0 0.0
        %1850 = vmatprep.subr.mxu0 0.0
        %1851 = vmatpush1.msra.mxu0 0.0
        %1852 = vmatprep.subr.mxu0 0.0
        %1853 = vmatpush1.msra.mxu0 0.0
        %1854 = vmatprep.subr.mxu0 0.0
        %1855 = vmatpush1.msra.mxu0 0.0
        %1856 = vmatprep.subr.mxu0 0.0
        %1857 = vmatpush1.msra.mxu0 0.0
        %1858 = vmatprep.subr.mxu0 0.0
        %1859 = vmatpush1.msra.mxu0 0.0
        %1860 = vmatprep.subr.mxu0 0.0
        %1861 = vmatpush1.msra.mxu0 0.0
        %1862 = vmatprep.subr.mxu0 0.0
        %1863 = vmatpush1.msra.mxu0 0.0
        %1864 = vmatprep.subr.mxu0 0.0
        %1865 = vmatpush1.msra.mxu0 0.0
        %1866 = vmatprep.subr.mxu0 0.0
        %1867 = vmatpush1.msra.mxu0 0.0
        %1868 = vmatprep.subr.mxu0 0.0
        %1869 = vmatpush1.msra.mxu0 0.0
        %1870 = vmatprep.subr.mxu0 0.0
        %1871 = vmatpush1.msra.mxu0 0.0
        %1872 = vmatprep.subr.mxu0 0.0
        %1873 = vmatpush1.msra.mxu0 0.0
        %1874 = vmatprep.subr.mxu0 0.0
        %1875 = vmatpush1.msra.mxu0 0.0
        %1876 = vmatprep.subr.mxu0 0.0
        %1877 = vmatpush1.msra.mxu0 0.0
        %1878 = vmatprep.subr.mxu0 0.0
        %1879 = vmatpush1.msra.mxu0 0.0
        %1880 = vmatprep.subr.mxu0 0.0
        %1881 = vmatpush1.msra.mxu0 0.0
        %1882 = vmatprep.subr.mxu0 0.0
        %1883 = vmatpush1.msra.mxu0 0.0
        %1884 = vmatprep.subr.mxu0 0.0
        %1885 = vmatpush1.msra.mxu0 0.0
        %1886 = vmatprep.subr.mxu0 0.0
        %1887 = vmatpush1.msra.mxu0 0.0
        %1888 = vmatprep.subr.mxu0 0.0
        %1889 = vmatpush1.msra.mxu0 0.0
        %1890 = vmatprep.subr.mxu0 0.0
        %1891 = vmatpush1.msra.mxu0 0.0
        %1892 = vmatprep.subr.mxu0 0.0
        %1893 = vmatpush1.msra.mxu0 0.0
        %1894 = vmatprep.subr.mxu0 0.0
        %1895 = vmatpush1.msra.mxu0 0.0
        %1896 = vmatprep.subr.mxu0 0.0
        %1897 = vmatpush1.msra.mxu0 0.0
        %1898 = vmatprep.mubr.f32.mxu0 0.0
        %1899 = vmatmul.mubr.f32.gmra.mrb[0].mxu0 %v1830
        %v1900 = vpop.f32.mrb[0].mxu0
        %v1901 = vadd.f32 0.0, %v1900
        %v1902 = vpop.f32.mrb[0].mxu0
        %1903 = vmatprep.mubr.f32.mxu0 0.0
        %1904 = vmatmul.mubr.f32.gmra.mrb[0].mxu0 %v1832
        %v1905 = vpop.f32.mrb[0].mxu0
        %v1906 = vadd.f32 0.0, %v1905
        %v1907 = vpop.f32.mrb[0].mxu0
        %1908 = vdwg.mxu0
        %1909 = vmatprep.subr.mxu0 0.0
        %1910 = vmatpush1.msra.mxu0 %v1901
        %1911 = vmatprep.subr.mxu0 0.0
        %1912 = vmatpush1.msra.mxu0 %v1906
        %1913 = vmatprep.subr.mxu0 0.0
        %1914 = vmatpush1.msra.mxu0 0.0
        %1915 = vmatprep.subr.mxu0 0.0
        %1916 = vmatpush1.msra.mxu0 0.0
        %1917 = vmatprep.subr.mxu0 0.0
        %1918 = vmatpush1.msra.mxu0 0.0
        %1919 = vmatprep.subr.mxu0 0.0
        %1920 = vmatpush1.msra.mxu0 0.0
        %1921 = vmatprep.subr.mxu0 0.0
        %1922 = vmatpush1.msra.mxu0 0.0
        %1923 = vmatprep.subr.mxu0 0.0
        %1924 = vmatpush1.msra.mxu0 0.0
        %1925 = vmatprep.subr.mxu0 0.0
        %1926 = vmatpush1.msra.mxu0 0.0
        %1927 = vmatprep.subr.mxu0 0.0
        %1928 = vmatpush1.msra.mxu0 0.0
        %1929 = vmatprep.subr.mxu0 0.0
        %1930 = vmatpush1.msra.mxu0 0.0
        %1931 = vmatprep.subr.mxu0 0.0
        %1932 = vmatpush1.msra.mxu0 0.0
        %1933 = vmatprep.subr.mxu0 0.0
        %1934 = vmatpush1.msra.mxu0 0.0
        %1935 = vmatprep.subr.mxu0 0.0
        %1936 = vmatpush1.msra.mxu0 0.0
        %1937 = vmatprep.subr.mxu0 0.0
        %1938 = vmatpush1.msra.mxu0 0.0
        %1939 = vmatprep.subr.mxu0 0.0
        %1940 = vmatpush1.msra.mxu0 0.0
        %1941 = vmatprep.subr.mxu0 0.0
        %1942 = vmatpush1.msra.mxu0 0.0
        %1943 = vmatprep.subr.mxu0 0.0
        %1944 = vmatpush1.msra.mxu0 0.0
        %1945 = vmatprep.subr.mxu0 0.0
        %1946 = vmatpush1.msra.mxu0 0.0
        %1947 = vmatprep.subr.mxu0 0.0
        %1948 = vmatpush1.msra.mxu0 0.0
        %1949 = vmatprep.subr.mxu0 0.0
        %1950 = vmatpush1.msra.mxu0 0.0
        %1951 = vmatprep.subr.mxu0 0.0
        %1952 = vmatpush1.msra.mxu0 0.0
        %1953 = vmatprep.subr.mxu0 0.0
        %1954 = vmatpush1.msra.mxu0 0.0
        %1955 = vmatprep.subr.mxu0 0.0
        %1956 = vmatpush1.msra.mxu0 0.0
        %1957 = vmatprep.subr.mxu0 0.0
        %1958 = vmatpush1.msra.mxu0 0.0
        %1959 = vmatprep.subr.mxu0 0.0
        %1960 = vmatpush1.msra.mxu0 0.0
        %1961 = vmatprep.subr.mxu0 0.0
        %1962 = vmatpush1.msra.mxu0 0.0
        %1963 = vmatprep.subr.mxu0 0.0
        %1964 = vmatpush1.msra.mxu0 0.0
        %1965 = vmatprep.subr.mxu0 0.0
        %1966 = vmatpush1.msra.mxu0 0.0
        %1967 = vmatprep.subr.mxu0 0.0
        %1968 = vmatpush1.msra.mxu0 0.0
        %1969 = vmatprep.subr.mxu0 0.0
        %1970 = vmatpush1.msra.mxu0 0.0
        %1971 = vmatprep.subr.mxu0 0.0
        %1972 = vmatpush1.msra.mxu0 0.0
        %1973 = vmatprep.mubr.f32.mxu0 0.0
        %1974 = vmatmul.mubr.f32.gmra.mrb[0].mxu0 %v697
        %v1975 = vpop.f32.mrb[0].mxu0
        %v1976 = vadd.f32 0.0, %v1975
        %v1977 = vpop.f32.mrb[0].mxu0
        %1978 = vdwg.mxu0
        %v1980 = vcombine.high %v1976, %v1976
        %v1982 = vunpack.c.l.s4 1966171168
        %v1983 = vunpack.c.0.s8 %v1982
        %v1984 = vlaneseq
        %v1985 = vshrl.u32 %v1984, 7
        %v1986 = vsub.s32 %v1983, %v1985
        %v1987 = vrot.slane %v1976, %v1986
        %v1989 = vunpack.c.l.s4 1966171168
        %v1990 = vunpack.c.0.s8 %v1989
        %v1991 = vlaneseq
        %v1992 = vshrl.u32 %v1991, 7
        %v1993 = vsub.s32 %v1990, %v1992
        %v1994 = vrot.slane %v1980, %v1993
        %v1995 = vcombine.high %v1987, %v1987
        %v1996 = vcombine.high %v1994, %v1994
        %v1998 = vunpack.c.l.s4 1966171168
        %v1999 = vunpack.c.0.s8 %v1998
        %v2000 = vlaneseq
        %v2001 = vshrl.u32 %v2000, 7
        %v2002 = vsub.s32 %v1999, %v2001
        %v2003 = vrot.slane %v1987, %v2002
        %v2005 = vunpack.c.l.s4 1966171168
        %v2006 = vunpack.c.0.s8 %v2005
        %v2007 = vlaneseq
        %v2008 = vshrl.u32 %v2007, 7
        %v2009 = vsub.s32 %v2006, %v2008
        %v2010 = vrot.slane %v1994, %v2009
        %v2012 = vunpack.c.l.s4 1966171168
        %v2013 = vunpack.c.0.s8 %v2012
        %v2014 = vlaneseq
        %v2015 = vshrl.u32 %v2014, 7
        %v2016 = vsub.s32 %v2013, %v2015
        %v2017 = vrot.slane %v1995, %v2016
        %v2019 = vunpack.c.l.s4 1966171168
        %v2020 = vunpack.c.0.s8 %v2019
        %v2021 = vlaneseq
        %v2022 = vshrl.u32 %v2021, 7
        %v2023 = vsub.s32 %v2020, %v2022
        %v2024 = vrot.slane %v1996, %v2023
        %v2025 = vcombine.high %v2003, %v2003
        %v2026 = vcombine.high %v2010, %v2010
        %v2027 = vcombine.high %v2017, %v2017
        %v2028 = vcombine.high %v2024, %v2024
        %2037 = vst.msk [vmem:[%s334 + $0x3] sm:$0x1] %vm827, %v2003
        %2038 = vst.msk [vmem:[%s334 + $0xb] sm:$0x1] %vm827, %v2017
        %2039 = vst.msk [vmem:[%s334 + $0x13] sm:$0x1] %vm827, %v2025
        %2040 = vst.msk [vmem:[%s334 + $0x1b] sm:$0x1] %vm827, %v2027
        %2041 = vst.msk [vmem:[%s334 + $0x23] sm:$0x1] %vm827, %v2010
        %2042 = vst.msk [vmem:[%s334 + $0x2b] sm:$0x1] %vm827, %v2024
        %2043 = vst.msk [vmem:[%s334 + $0x33] sm:$0x1] %vm827, %v2026
        %2044 = vst.msk [vmem:[%s334 + $0x3b] sm:$0x1] %vm827, %v2028
        %v2045 = vld [vmem:[%s310 + $0x4] sm:$0x1]
        %v2046 = vld [vmem:[%s310 + $0xc] sm:$0x1]
        %v2047 = vld [vmem:[%s310 + $0x14] sm:$0x1]
        %v2048 = vld [vmem:[%s310 + $0x1c] sm:$0x1]
        %v2049 = vld [vmem:[%s310 + $0x24] sm:$0x1]
        %v2050 = vld [vmem:[%s310 + $0x2c] sm:$0x1]
        %v2051 = vld [vmem:[%s310 + $0x34] sm:$0x1]
        %v2052 = vld [vmem:[%s310 + $0x3c] sm:$0x1]
        %v2053 = vld [vmem:[%s310 + $0x44] sm:$0x1]
        %v2054 = vld [vmem:[%s310 + $0x4c] sm:$0x1]
        %v2055 = vld [vmem:[%s310 + $0x54] sm:$0x1]
        %v2056 = vld [vmem:[%s310 + $0x5c] sm:$0x1]
        %v2057 = vld [vmem:[%s310 + $0x64] sm:$0x1]
        %v2058 = vld [vmem:[%s310 + $0x6c] sm:$0x1]
        %v2059 = vld [vmem:[%s310 + $0x74] sm:$0x1]
        %v2060 = vld [vmem:[%s310 + $0x7c] sm:$0x1]
        %v2061 = vmul.f32 %v2045, %v363
        %v2062 = vmul.f32 %v2046, %v368
        %v2063 = vmul.f32 %v2047, %v369
        %v2064 = vmul.f32 %v2048, %v370
        %v2065 = vmul.f32 %v2049, %v371
        %v2066 = vmul.f32 %v2050, %v372
        %v2067 = vmul.f32 %v2051, %v373
        %v2068 = vmul.f32 %v2052, %v374
        %v2069 = vmul.f32 %v2053, %v367
        %v2070 = vmul.f32 %v2054, %v375
        %v2071 = vmul.f32 %v2055, %v376
        %v2072 = vmul.f32 %v2056, %v377
        %v2073 = vmul.f32 %v2057, %v378
        %v2074 = vmul.f32 %v2058, %v379
        %v2075 = vmul.f32 %v2059, %v380
        %v2076 = vmul.f32 %v2060, %v381
        %v2077 = vadd.f32 %v2061, %v417
        %v2078 = vadd.f32 %v2062, %v422
        %v2079 = vadd.f32 %v2063, %v423
        %v2080 = vadd.f32 %v2064, %v424
        %v2081 = vadd.f32 %v2065, %v425
        %v2082 = vadd.f32 %v2066, %v426
        %v2083 = vadd.f32 %v2067, %v427
        %v2084 = vadd.f32 %v2068, %v428
        %v2085 = vadd.f32 %v2069, %v421
        %v2086 = vadd.f32 %v2070, %v429
        %v2087 = vadd.f32 %v2071, %v430
        %v2088 = vadd.f32 %v2072, %v431
        %v2089 = vadd.f32 %v2073, %v432
        %v2090 = vadd.f32 %v2074, %v433
        %v2091 = vadd.f32 %v2075, %v434
        %v2092 = vadd.f32 %v2076, %v435
        %v2093 = vmax.f32 %v2077, 0.0
        %v2094 = vmax.f32 %v2078, 0.0
        %v2095 = vmax.f32 %v2079, 0.0
        %v2096 = vmax.f32 %v2080, 0.0
        %v2097 = vmax.f32 %v2081, 0.0
        %v2098 = vmax.f32 %v2082, 0.0
        %v2099 = vmax.f32 %v2083, 0.0
        %v2100 = vmax.f32 %v2084, 0.0
        %v2101 = vmax.f32 %v2085, 0.0
        %v2102 = vmax.f32 %v2086, 0.0
        %v2103 = vmax.f32 %v2087, 0.0
        %v2104 = vmax.f32 %v2088, 0.0
        %v2105 = vmax.f32 %v2089, 0.0
        %v2106 = vmax.f32 %v2090, 0.0
        %v2107 = vmax.f32 %v2091, 0.0
        %v2108 = vmax.f32 %v2092, 0.0
        %2125 = vrot.lane.b32.xlu0 %v2093, 96
        %v2126 = vpop.permute.xlu0 %2125
        %2127 = vrot.lane.b32.xlu0 %v2094, 96
        %v2128 = vpop.permute.xlu0 %2127
        %2129 = vrot.lane.b32.xlu0 %v2095, 96
        %v2130 = vpop.permute.xlu0 %2129
        %2131 = vrot.lane.b32.xlu0 %v2096, 96
        %v2132 = vpop.permute.xlu0 %2131
        %2133 = vrot.lane.b32.xlu0 %v2097, 96
        %v2134 = vpop.permute.xlu0 %2133
        %2135 = vrot.lane.b32.xlu0 %v2098, 96
        %v2136 = vpop.permute.xlu0 %2135
        %2137 = vrot.lane.b32.xlu0 %v2099, 96
        %v2138 = vpop.permute.xlu0 %2137
        %2139 = vrot.lane.b32.xlu0 %v2100, 96
        %v2140 = vpop.permute.xlu0 %2139
        %2141 = vrot.lane.b32.xlu0 %v2101, 96
        %v2142 = vpop.permute.xlu0 %2141
        %2143 = vrot.lane.b32.xlu0 %v2102, 96
        %v2144 = vpop.permute.xlu0 %2143
        %2145 = vrot.lane.b32.xlu0 %v2103, 96
        %v2146 = vpop.permute.xlu0 %2145
        %2147 = vrot.lane.b32.xlu0 %v2104, 96
        %v2148 = vpop.permute.xlu0 %2147
        %2149 = vrot.lane.b32.xlu0 %v2105, 96
        %v2150 = vpop.permute.xlu0 %2149
        %2151 = vrot.lane.b32.xlu0 %v2106, 96
        %v2152 = vpop.permute.xlu0 %2151
        %2153 = vrot.lane.b32.xlu0 %v2107, 96
        %v2154 = vpop.permute.xlu0 %2153
        %2155 = vrot.lane.b32.xlu0 %v2108, 96
        %v2156 = vpop.permute.xlu0 %2155
        %v2173 = vadd.f32 %v2093, %v2126
        %v2174 = vadd.f32 %v2094, %v2128
        %v2175 = vadd.f32 %v2095, %v2130
        %v2176 = vadd.f32 %v2096, %v2132
        %v2177 = vadd.f32 %v2097, %v2134
        %v2178 = vadd.f32 %v2098, %v2136
        %v2179 = vadd.f32 %v2099, %v2138
        %v2180 = vadd.f32 %v2100, %v2140
        %v2181 = vadd.f32 %v2101, %v2142
        %v2182 = vadd.f32 %v2102, %v2144
        %v2183 = vadd.f32 %v2103, %v2146
        %v2184 = vadd.f32 %v2104, %v2148
        %v2185 = vadd.f32 %v2105, %v2150
        %v2186 = vadd.f32 %v2106, %v2152
        %v2187 = vadd.f32 %v2107, %v2154
        %v2188 = vadd.f32 %v2108, %v2156
        %v2205 = vrot.slane %v2174, 7
        %v2206 = vsel %vm581, %v2205, %v2173
        %v2207 = vrot.slane %v2175, 6
        %v2208 = vsel %vm584, %v2207, %v2206
        %v2209 = vrot.slane %v2176, 5
        %v2210 = vsel %vm587, %v2209, %v2208
        %v2211 = vrot.slane %v2177, 4
        %v2212 = vsel %vm590, %v2211, %v2210
        %v2213 = vrot.slane %v2178, 3
        %v2214 = vsel %vm593, %v2213, %v2212
        %v2215 = vrot.slane %v2179, 2
        %v2216 = vsel %vm596, %v2215, %v2214
        %v2217 = vrot.slane %v2180, 1
        %v2218 = vsel %vm599, %v2217, %v2216
        %v2219 = vrot.slane %v2182, 7
        %v2220 = vsel %vm581, %v2219, %v2181
        %v2221 = vrot.slane %v2183, 6
        %v2222 = vsel %vm584, %v2221, %v2220
        %v2223 = vrot.slane %v2184, 5
        %v2224 = vsel %vm587, %v2223, %v2222
        %v2225 = vrot.slane %v2185, 4
        %v2226 = vsel %vm590, %v2225, %v2224
        %v2227 = vrot.slane %v2186, 3
        %v2228 = vsel %vm593, %v2227, %v2226
        %v2229 = vrot.slane %v2187, 2
        %v2230 = vsel %vm596, %v2229, %v2228
        %v2231 = vrot.slane %v2188, 1
        %v2232 = vsel %vm599, %v2231, %v2230
        %v2233 = vsel %vm615, %v2218, 0
        %v2235 = vsel %vm615, %v2232, 0
        %2237 = vmatprep.subr.mxu0 0.0
        %2238 = vmatpush1.msra.mxu0 %v340
        %2239 = vmatprep.subr.mxu0 0.0
        %2240 = vmatpush1.msra.mxu0 %v341
        %2241 = vmatprep.subr.mxu0 0.0
        %2242 = vmatpush1.msra.mxu0 %v342
        %2243 = vmatprep.subr.mxu0 0.0
        %2244 = vmatpush1.msra.mxu0 %v343
        %2245 = vmatprep.subr.mxu0 0.0
        %2246 = vmatpush1.msra.mxu0 0.0
        %2247 = vmatprep.subr.mxu0 0.0
        %2248 = vmatpush1.msra.mxu0 0.0
        %2249 = vmatprep.subr.mxu0 0.0
        %2250 = vmatpush1.msra.mxu0 0.0
        %2251 = vmatprep.subr.mxu0 0.0
        %2252 = vmatpush1.msra.mxu0 0.0
        %2253 = vmatprep.subr.mxu0 0.0
        %2254 = vmatpush1.msra.mxu0 0.0
        %2255 = vmatprep.subr.mxu0 0.0
        %2256 = vmatpush1.msra.mxu0 0.0
        %2257 = vmatprep.subr.mxu0 0.0
        %2258 = vmatpush1.msra.mxu0 0.0
        %2259 = vmatprep.subr.mxu0 0.0
        %2260 = vmatpush1.msra.mxu0 0.0
        %2261 = vmatprep.subr.mxu0 0.0
        %2262 = vmatpush1.msra.mxu0 0.0
        %2263 = vmatprep.subr.mxu0 0.0
        %2264 = vmatpush1.msra.mxu0 0.0
        %2265 = vmatprep.subr.mxu0 0.0
        %2266 = vmatpush1.msra.mxu0 0.0
        %2267 = vmatprep.subr.mxu0 0.0
        %2268 = vmatpush1.msra.mxu0 0.0
        %2269 = vmatprep.subr.mxu0 0.0
        %2270 = vmatpush1.msra.mxu0 0.0
        %2271 = vmatprep.subr.mxu0 0.0
        %2272 = vmatpush1.msra.mxu0 0.0
        %2273 = vmatprep.subr.mxu0 0.0
        %2274 = vmatpush1.msra.mxu0 0.0
        %2275 = vmatprep.subr.mxu0 0.0
        %2276 = vmatpush1.msra.mxu0 0.0
        %2277 = vmatprep.subr.mxu0 0.0
        %2278 = vmatpush1.msra.mxu0 0.0
        %2279 = vmatprep.subr.mxu0 0.0
        %2280 = vmatpush1.msra.mxu0 0.0
        %2281 = vmatprep.subr.mxu0 0.0
        %2282 = vmatpush1.msra.mxu0 0.0
        %2283 = vmatprep.subr.mxu0 0.0
        %2284 = vmatpush1.msra.mxu0 0.0
        %2285 = vmatprep.subr.mxu0 0.0
        %2286 = vmatpush1.msra.mxu0 0.0
        %2287 = vmatprep.subr.mxu0 0.0
        %2288 = vmatpush1.msra.mxu0 0.0
        %2289 = vmatprep.subr.mxu0 0.0
        %2290 = vmatpush1.msra.mxu0 0.0
        %2291 = vmatprep.subr.mxu0 0.0
        %2292 = vmatpush1.msra.mxu0 0.0
        %2293 = vmatprep.subr.mxu0 0.0
        %2294 = vmatpush1.msra.mxu0 0.0
        %2295 = vmatprep.subr.mxu0 0.0
        %2296 = vmatpush1.msra.mxu0 0.0
        %2297 = vmatprep.subr.mxu0 0.0
        %2298 = vmatpush1.msra.mxu0 0.0
        %2299 = vmatprep.subr.mxu0 0.0
        %2300 = vmatpush1.msra.mxu0 0.0
        %2301 = vmatprep.mubr.f32.mxu0 0.0
        %2302 = vmatmul.mubr.f32.gmra.mrb[0].mxu0 %v2233
        %v2303 = vpop.f32.mrb[0].mxu0
        %v2304 = vadd.f32 0.0, %v2303
        %v2305 = vpop.f32.mrb[0].mxu0
        %2306 = vmatprep.mubr.f32.mxu0 0.0
        %2307 = vmatmul.mubr.f32.gmra.mrb[0].mxu0 %v2235
        %v2308 = vpop.f32.mrb[0].mxu0
        %v2309 = vadd.f32 0.0, %v2308
        %v2310 = vpop.f32.mrb[0].mxu0
        %2311 = vdwg.mxu0
        %2312 = vmatprep.subr.mxu0 0.0
        %2313 = vmatpush1.msra.mxu0 %v2304
        %2314 = vmatprep.subr.mxu0 0.0
        %2315 = vmatpush1.msra.mxu0 %v2309
        %2316 = vmatprep.subr.mxu0 0.0
        %2317 = vmatpush1.msra.mxu0 0.0
        %2318 = vmatprep.subr.mxu0 0.0
        %2319 = vmatpush1.msra.mxu0 0.0
        %2320 = vmatprep.subr.mxu0 0.0
        %2321 = vmatpush1.msra.mxu0 0.0
        %2322 = vmatprep.subr.mxu0 0.0
        %2323 = vmatpush1.msra.mxu0 0.0
        %2324 = vmatprep.subr.mxu0 0.0
        %2325 = vmatpush1.msra.mxu0 0.0
        %2326 = vmatprep.subr.mxu0 0.0
        %2327 = vmatpush1.msra.mxu0 0.0
        %2328 = vmatprep.subr.mxu0 0.0
        %2329 = vmatpush1.msra.mxu0 0.0
        %2330 = vmatprep.subr.mxu0 0.0
        %2331 = vmatpush1.msra.mxu0 0.0
        %2332 = vmatprep.subr.mxu0 0.0
        %2333 = vmatpush1.msra.mxu0 0.0
        %2334 = vmatprep.subr.mxu0 0.0
        %2335 = vmatpush1.msra.mxu0 0.0
        %2336 = vmatprep.subr.mxu0 0.0
        %2337 = vmatpush1.msra.mxu0 0.0
        %2338 = vmatprep.subr.mxu0 0.0
        %2339 = vmatpush1.msra.mxu0 0.0
        %2340 = vmatprep.subr.mxu0 0.0
        %2341 = vmatpush1.msra.mxu0 0.0
        %2342 = vmatprep.subr.mxu0 0.0
        %2343 = vmatpush1.msra.mxu0 0.0
        %2344 = vmatprep.subr.mxu0 0.0
        %2345 = vmatpush1.msra.mxu0 0.0
        %2346 = vmatprep.subr.mxu0 0.0
        %2347 = vmatpush1.msra.mxu0 0.0
        %2348 = vmatprep.subr.mxu0 0.0
        %2349 = vmatpush1.msra.mxu0 0.0
        %2350 = vmatprep.subr.mxu0 0.0
        %2351 = vmatpush1.msra.mxu0 0.0
        %2352 = vmatprep.subr.mxu0 0.0
        %2353 = vmatpush1.msra.mxu0 0.0
        %2354 = vmatprep.subr.mxu0 0.0
        %2355 = vmatpush1.msra.mxu0 0.0
        %2356 = vmatprep.subr.mxu0 0.0
        %2357 = vmatpush1.msra.mxu0 0.0
        %2358 = vmatprep.subr.mxu0 0.0
        %2359 = vmatpush1.msra.mxu0 0.0
        %2360 = vmatprep.subr.mxu0 0.0
        %2361 = vmatpush1.msra.mxu0 0.0
        %2362 = vmatprep.subr.mxu0 0.0
        %2363 = vmatpush1.msra.mxu0 0.0
        %2364 = vmatprep.subr.mxu0 0.0
        %2365 = vmatpush1.msra.mxu0 0.0
        %2366 = vmatprep.subr.mxu0 0.0
        %2367 = vmatpush1.msra.mxu0 0.0
        %2368 = vmatprep.subr.mxu0 0.0
        %2369 = vmatpush1.msra.mxu0 0.0
        %2370 = vmatprep.subr.mxu0 0.0
        %2371 = vmatpush1.msra.mxu0 0.0
        %2372 = vmatprep.subr.mxu0 0.0
        %2373 = vmatpush1.msra.mxu0 0.0
        %2374 = vmatprep.subr.mxu0 0.0
        %2375 = vmatpush1.msra.mxu0 0.0
        %2376 = vmatprep.mubr.f32.mxu0 0.0
        %2377 = vmatmul.mubr.f32.gmra.mrb[0].mxu0 %v697
        %v2378 = vpop.f32.mrb[0].mxu0
        %v2379 = vadd.f32 0.0, %v2378
        %v2380 = vpop.f32.mrb[0].mxu0
        %2381 = vdwg.mxu0
        %v2383 = vcombine.high %v2379, %v2379
        %v2385 = vunpack.c.l.s4 1966171168
        %v2386 = vunpack.c.0.s8 %v2385
        %v2387 = vlaneseq
        %v2388 = vshrl.u32 %v2387, 7
        %v2389 = vsub.s32 %v2386, %v2388
        %v2390 = vrot.slane %v2379, %v2389
        %v2392 = vunpack.c.l.s4 1966171168
        %v2393 = vunpack.c.0.s8 %v2392
        %v2394 = vlaneseq
        %v2395 = vshrl.u32 %v2394, 7
        %v2396 = vsub.s32 %v2393, %v2395
        %v2397 = vrot.slane %v2383, %v2396
        %v2398 = vcombine.high %v2390, %v2390
        %v2399 = vcombine.high %v2397, %v2397
        %v2401 = vunpack.c.l.s4 1966171168
        %v2402 = vunpack.c.0.s8 %v2401
        %v2403 = vlaneseq
        %v2404 = vshrl.u32 %v2403, 7
        %v2405 = vsub.s32 %v2402, %v2404
        %v2406 = vrot.slane %v2390, %v2405
        %v2408 = vunpack.c.l.s4 1966171168
        %v2409 = vunpack.c.0.s8 %v2408
        %v2410 = vlaneseq
        %v2411 = vshrl.u32 %v2410, 7
        %v2412 = vsub.s32 %v2409, %v2411
        %v2413 = vrot.slane %v2397, %v2412
        %v2415 = vunpack.c.l.s4 1966171168
        %v2416 = vunpack.c.0.s8 %v2415
        %v2417 = vlaneseq
        %v2418 = vshrl.u32 %v2417, 7
        %v2419 = vsub.s32 %v2416, %v2418
        %v2420 = vrot.slane %v2398, %v2419
        %v2422 = vunpack.c.l.s4 1966171168
        %v2423 = vunpack.c.0.s8 %v2422
        %v2424 = vlaneseq
        %v2425 = vshrl.u32 %v2424, 7
        %v2426 = vsub.s32 %v2423, %v2425
        %v2427 = vrot.slane %v2399, %v2426
        %v2428 = vcombine.high %v2406, %v2406
        %v2429 = vcombine.high %v2413, %v2413
        %v2430 = vcombine.high %v2420, %v2420
        %v2431 = vcombine.high %v2427, %v2427
        %2440 = vst.msk [vmem:[%s334 + $0x4] sm:$0x1] %vm827, %v2406
        %2441 = vst.msk [vmem:[%s334 + $0xc] sm:$0x1] %vm827, %v2420
        %2442 = vst.msk [vmem:[%s334 + $0x14] sm:$0x1] %vm827, %v2428
        %2443 = vst.msk [vmem:[%s334 + $0x1c] sm:$0x1] %vm827, %v2430
        %2444 = vst.msk [vmem:[%s334 + $0x24] sm:$0x1] %vm827, %v2413
        %2445 = vst.msk [vmem:[%s334 + $0x2c] sm:$0x1] %vm827, %v2427
        %2446 = vst.msk [vmem:[%s334 + $0x34] sm:$0x1] %vm827, %v2429
        %2447 = vst.msk [vmem:[%s334 + $0x3c] sm:$0x1] %vm827, %v2431
        %v2448 = vld [vmem:[%s310 + $0x5] sm:$0x1]
        %v2449 = vld [vmem:[%s310 + $0xd] sm:$0x1]
        %v2450 = vld [vmem:[%s310 + $0x15] sm:$0x1]
        %v2451 = vld [vmem:[%s310 + $0x1d] sm:$0x1]
        %v2452 = vld [vmem:[%s310 + $0x25] sm:$0x1]
        %v2453 = vld [vmem:[%s310 + $0x2d] sm:$0x1]
        %v2454 = vld [vmem:[%s310 + $0x35] sm:$0x1]
        %v2455 = vld [vmem:[%s310 + $0x3d] sm:$0x1]
        %v2456 = vld [vmem:[%s310 + $0x45] sm:$0x1]
        %v2457 = vld [vmem:[%s310 + $0x4d] sm:$0x1]
        %v2458 = vld [vmem:[%s310 + $0x55] sm:$0x1]
        %v2459 = vld [vmem:[%s310 + $0x5d] sm:$0x1]
        %v2460 = vld [vmem:[%s310 + $0x65] sm:$0x1]
        %v2461 = vld [vmem:[%s310 + $0x6d] sm:$0x1]
        %v2462 = vld [vmem:[%s310 + $0x75] sm:$0x1]
        %v2463 = vld [vmem:[%s310 + $0x7d] sm:$0x1]
        %v2464 = vmul.f32 %v2448, %v363
        %v2465 = vmul.f32 %v2449, %v368
        %v2466 = vmul.f32 %v2450, %v369
        %v2467 = vmul.f32 %v2451, %v370
        %v2468 = vmul.f32 %v2452, %v371
        %v2469 = vmul.f32 %v2453, %v372
        %v2470 = vmul.f32 %v2454, %v373
        %v2471 = vmul.f32 %v2455, %v374
        %v2472 = vmul.f32 %v2456, %v367
        %v2473 = vmul.f32 %v2457, %v375
        %v2474 = vmul.f32 %v2458, %v376
        %v2475 = vmul.f32 %v2459, %v377
        %v2476 = vmul.f32 %v2460, %v378
        %v2477 = vmul.f32 %v2461, %v379
        %v2478 = vmul.f32 %v2462, %v380
        %v2479 = vmul.f32 %v2463, %v381
        %v2480 = vadd.f32 %v2464, %v417
        %v2481 = vadd.f32 %v2465, %v422
        %v2482 = vadd.f32 %v2466, %v423
        %v2483 = vadd.f32 %v2467, %v424
        %v2484 = vadd.f32 %v2468, %v425
        %v2485 = vadd.f32 %v2469, %v426
        %v2486 = vadd.f32 %v2470, %v427
        %v2487 = vadd.f32 %v2471, %v428
        %v2488 = vadd.f32 %v2472, %v421
        %v2489 = vadd.f32 %v2473, %v429
        %v2490 = vadd.f32 %v2474, %v430
        %v2491 = vadd.f32 %v2475, %v431
        %v2492 = vadd.f32 %v2476, %v432
        %v2493 = vadd.f32 %v2477, %v433
        %v2494 = vadd.f32 %v2478, %v434
        %v2495 = vadd.f32 %v2479, %v435
        %v2496 = vmax.f32 %v2480, 0.0
        %v2497 = vmax.f32 %v2481, 0.0
        %v2498 = vmax.f32 %v2482, 0.0
        %v2499 = vmax.f32 %v2483, 0.0
        %v2500 = vmax.f32 %v2484, 0.0
        %v2501 = vmax.f32 %v2485, 0.0
        %v2502 = vmax.f32 %v2486, 0.0
        %v2503 = vmax.f32 %v2487, 0.0
        %v2504 = vmax.f32 %v2488, 0.0
        %v2505 = vmax.f32 %v2489, 0.0
        %v2506 = vmax.f32 %v2490, 0.0
        %v2507 = vmax.f32 %v2491, 0.0
        %v2508 = vmax.f32 %v2492, 0.0
        %v2509 = vmax.f32 %v2493, 0.0
        %v2510 = vmax.f32 %v2494, 0.0
        %v2511 = vmax.f32 %v2495, 0.0
        %2528 = vrot.lane.b32.xlu0 %v2496, 96
        %v2529 = vpop.permute.xlu0 %2528
        %2530 = vrot.lane.b32.xlu0 %v2497, 96
        %v2531 = vpop.permute.xlu0 %2530
        %2532 = vrot.lane.b32.xlu0 %v2498, 96
        %v2533 = vpop.permute.xlu0 %2532
        %2534 = vrot.lane.b32.xlu0 %v2499, 96
        %v2535 = vpop.permute.xlu0 %2534
        %2536 = vrot.lane.b32.xlu0 %v2500, 96
        %v2537 = vpop.permute.xlu0 %2536
        %2538 = vrot.lane.b32.xlu0 %v2501, 96
        %v2539 = vpop.permute.xlu0 %2538
        %2540 = vrot.lane.b32.xlu0 %v2502, 96
        %v2541 = vpop.permute.xlu0 %2540
        %2542 = vrot.lane.b32.xlu0 %v2503, 96
        %v2543 = vpop.permute.xlu0 %2542
        %2544 = vrot.lane.b32.xlu0 %v2504, 96
        %v2545 = vpop.permute.xlu0 %2544
        %2546 = vrot.lane.b32.xlu0 %v2505, 96
        %v2547 = vpop.permute.xlu0 %2546
        %2548 = vrot.lane.b32.xlu0 %v2506, 96
        %v2549 = vpop.permute.xlu0 %2548
        %2550 = vrot.lane.b32.xlu0 %v2507, 96
        %v2551 = vpop.permute.xlu0 %2550
        %2552 = vrot.lane.b32.xlu0 %v2508, 96
        %v2553 = vpop.permute.xlu0 %2552
        %2554 = vrot.lane.b32.xlu0 %v2509, 96
        %v2555 = vpop.permute.xlu0 %2554
        %2556 = vrot.lane.b32.xlu0 %v2510, 96
        %v2557 = vpop.permute.xlu0 %2556
        %2558 = vrot.lane.b32.xlu0 %v2511, 96
        %v2559 = vpop.permute.xlu0 %2558
        %v2576 = vadd.f32 %v2496, %v2529
        %v2577 = vadd.f32 %v2497, %v2531
        %v2578 = vadd.f32 %v2498, %v2533
        %v2579 = vadd.f32 %v2499, %v2535
        %v2580 = vadd.f32 %v2500, %v2537
        %v2581 = vadd.f32 %v2501, %v2539
        %v2582 = vadd.f32 %v2502, %v2541
        %v2583 = vadd.f32 %v2503, %v2543
        %v2584 = vadd.f32 %v2504, %v2545
        %v2585 = vadd.f32 %v2505, %v2547
        %v2586 = vadd.f32 %v2506, %v2549
        %v2587 = vadd.f32 %v2507, %v2551
        %v2588 = vadd.f32 %v2508, %v2553
        %v2589 = vadd.f32 %v2509, %v2555
        %v2590 = vadd.f32 %v2510, %v2557
        %v2591 = vadd.f32 %v2511, %v2559
        %v2608 = vrot.slane %v2577, 7
        %v2609 = vsel %vm581, %v2608, %v2576
        %v2610 = vrot.slane %v2578, 6
        %v2611 = vsel %vm584, %v2610, %v2609
        %v2612 = vrot.slane %v2579, 5
        %v2613 = vsel %vm587, %v2612, %v2611
        %v2614 = vrot.slane %v2580, 4
        %v2615 = vsel %vm590, %v2614, %v2613
        %v2616 = vrot.slane %v2581, 3
        %v2617 = vsel %vm593, %v2616, %v2615
        %v2618 = vrot.slane %v2582, 2
        %v2619 = vsel %vm596, %v2618, %v2617
        %v2620 = vrot.slane %v2583, 1
        %v2621 = vsel %vm599, %v2620, %v2619
        %v2622 = vrot.slane %v2585, 7
        %v2623 = vsel %vm581, %v2622, %v2584
        %v2624 = vrot.slane %v2586, 6
        %v2625 = vsel %vm584, %v2624, %v2623
        %v2626 = vrot.slane %v2587, 5
        %v2627 = vsel %vm587, %v2626, %v2625
        %v2628 = vrot.slane %v2588, 4
        %v2629 = vsel %vm590, %v2628, %v2627
        %v2630 = vrot.slane %v2589, 3
        %v2631 = vsel %vm593, %v2630, %v2629
        %v2632 = vrot.slane %v2590, 2
        %v2633 = vsel %vm596, %v2632, %v2631
        %v2634 = vrot.slane %v2591, 1
        %v2635 = vsel %vm599, %v2634, %v2633
        %v2636 = vsel %vm615, %v2621, 0
        %v2638 = vsel %vm615, %v2635, 0
        %2640 = vmatprep.subr.mxu0 0.0
        %2641 = vmatpush1.msra.mxu0 %v340
        %2642 = vmatprep.subr.mxu0 0.0
        %2643 = vmatpush1.msra.mxu0 %v341
        %2644 = vmatprep.subr.mxu0 0.0
        %2645 = vmatpush1.msra.mxu0 %v342
        %2646 = vmatprep.subr.mxu0 0.0
        %2647 = vmatpush1.msra.mxu0 %v343
        %2648 = vmatprep.subr.mxu0 0.0
        %2649 = vmatpush1.msra.mxu0 0.0
        %2650 = vmatprep.subr.mxu0 0.0
        %2651 = vmatpush1.msra.mxu0 0.0
        %2652 = vmatprep.subr.mxu0 0.0
        %2653 = vmatpush1.msra.mxu0 0.0
        %2654 = vmatprep.subr.mxu0 0.0
        %2655 = vmatpush1.msra.mxu0 0.0
        %2656 = vmatprep.subr.mxu0 0.0
        %2657 = vmatpush1.msra.mxu0 0.0
        %2658 = vmatprep.subr.mxu0 0.0
        %2659 = vmatpush1.msra.mxu0 0.0
        %2660 = vmatprep.subr.mxu0 0.0
        %2661 = vmatpush1.msra.mxu0 0.0
        %2662 = vmatprep.subr.mxu0 0.0
        %2663 = vmatpush1.msra.mxu0 0.0
        %2664 = vmatprep.subr.mxu0 0.0
        %2665 = vmatpush1.msra.mxu0 0.0
        %2666 = vmatprep.subr.mxu0 0.0
        %2667 = vmatpush1.msra.mxu0 0.0
        %2668 = vmatprep.subr.mxu0 0.0
        %2669 = vmatpush1.msra.mxu0 0.0
        %2670 = vmatprep.subr.mxu0 0.0
        %2671 = vmatpush1.msra.mxu0 0.0
        %2672 = vmatprep.subr.mxu0 0.0
        %2673 = vmatpush1.msra.mxu0 0.0
        %2674 = vmatprep.subr.mxu0 0.0
        %2675 = vmatpush1.msra.mxu0 0.0
        %2676 = vmatprep.subr.mxu0 0.0
        %2677 = vmatpush1.msra.mxu0 0.0
        %2678 = vmatprep.subr.mxu0 0.0
        %2679 = vmatpush1.msra.mxu0 0.0
        %2680 = vmatprep.subr.mxu0 0.0
        %2681 = vmatpush1.msra.mxu0 0.0
        %2682 = vmatprep.subr.mxu0 0.0
        %2683 = vmatpush1.msra.mxu0 0.0
        %2684 = vmatprep.subr.mxu0 0.0
        %2685 = vmatpush1.msra.mxu0 0.0
        %2686 = vmatprep.subr.mxu0 0.0
        %2687 = vmatpush1.msra.mxu0 0.0
        %2688 = vmatprep.subr.mxu0 0.0
        %2689 = vmatpush1.msra.mxu0 0.0
        %2690 = vmatprep.subr.mxu0 0.0
        %2691 = vmatpush1.msra.mxu0 0.0
        %2692 = vmatprep.subr.mxu0 0.0
        %2693 = vmatpush1.msra.mxu0 0.0
        %2694 = vmatprep.subr.mxu0 0.0
        %2695 = vmatpush1.msra.mxu0 0.0
        %2696 = vmatprep.subr.mxu0 0.0
        %2697 = vmatpush1.msra.mxu0 0.0
        %2698 = vmatprep.subr.mxu0 0.0
        %2699 = vmatpush1.msra.mxu0 0.0
        %2700 = vmatprep.subr.mxu0 0.0
        %2701 = vmatpush1.msra.mxu0 0.0
        %2702 = vmatprep.subr.mxu0 0.0
        %2703 = vmatpush1.msra.mxu0 0.0
        %2704 = vmatprep.mubr.f32.mxu0 0.0
        %2705 = vmatmul.mubr.f32.gmra.mrb[0].mxu0 %v2636
        %v2706 = vpop.f32.mrb[0].mxu0
        %v2707 = vadd.f32 0.0, %v2706
        %v2708 = vpop.f32.mrb[0].mxu0
        %2709 = vmatprep.mubr.f32.mxu0 0.0
        %2710 = vmatmul.mubr.f32.gmra.mrb[0].mxu0 %v2638
        %v2711 = vpop.f32.mrb[0].mxu0
        %v2712 = vadd.f32 0.0, %v2711
        %v2713 = vpop.f32.mrb[0].mxu0
        %2714 = vdwg.mxu0
        %2715 = vmatprep.subr.mxu0 0.0
        %2716 = vmatpush1.msra.mxu0 %v2707
        %2717 = vmatprep.subr.mxu0 0.0
        %2718 = vmatpush1.msra.mxu0 %v2712
        %2719 = vmatprep.subr.mxu0 0.0
        %2720 = vmatpush1.msra.mxu0 0.0
        %2721 = vmatprep.subr.mxu0 0.0
        %2722 = vmatpush1.msra.mxu0 0.0
        %2723 = vmatprep.subr.mxu0 0.0
        %2724 = vmatpush1.msra.mxu0 0.0
        %2725 = vmatprep.subr.mxu0 0.0
        %2726 = vmatpush1.msra.mxu0 0.0
        %2727 = vmatprep.subr.mxu0 0.0
        %2728 = vmatpush1.msra.mxu0 0.0
        %2729 = vmatprep.subr.mxu0 0.0
        %2730 = vmatpush1.msra.mxu0 0.0
        %2731 = vmatprep.subr.mxu0 0.0
        %2732 = vmatpush1.msra.mxu0 0.0
        %2733 = vmatprep.subr.mxu0 0.0
        %2734 = vmatpush1.msra.mxu0 0.0
        %2735 = vmatprep.subr.mxu0 0.0
        %2736 = vmatpush1.msra.mxu0 0.0
        %2737 = vmatprep.subr.mxu0 0.0
        %2738 = vmatpush1.msra.mxu0 0.0
        %2739 = vmatprep.subr.mxu0 0.0
        %2740 = vmatpush1.msra.mxu0 0.0
        %2741 = vmatprep.subr.mxu0 0.0
        %2742 = vmatpush1.msra.mxu0 0.0
        %2743 = vmatprep.subr.mxu0 0.0
        %2744 = vmatpush1.msra.mxu0 0.0
        %2745 = vmatprep.subr.mxu0 0.0
        %2746 = vmatpush1.msra.mxu0 0.0
        %2747 = vmatprep.subr.mxu0 0.0
        %2748 = vmatpush1.msra.mxu0 0.0
        %2749 = vmatprep.subr.mxu0 0.0
        %2750 = vmatpush1.msra.mxu0 0.0
        %2751 = vmatprep.subr.mxu0 0.0
        %2752 = vmatpush1.msra.mxu0 0.0
        %2753 = vmatprep.subr.mxu0 0.0
        %2754 = vmatpush1.msra.mxu0 0.0
        %2755 = vmatprep.subr.mxu0 0.0
        %2756 = vmatpush1.msra.mxu0 0.0
        %2757 = vmatprep.subr.mxu0 0.0
        %2758 = vmatpush1.msra.mxu0 0.0
        %2759 = vmatprep.subr.mxu0 0.0
        %2760 = vmatpush1.msra.mxu0 0.0
        %2761 = vmatprep.subr.mxu0 0.0
        %2762 = vmatpush1.msra.mxu0 0.0
        %2763 = vmatprep.subr.mxu0 0.0
        %2764 = vmatpush1.msra.mxu0 0.0
        %2765 = vmatprep.subr.mxu0 0.0
        %2766 = vmatpush1.msra.mxu0 0.0
        %2767 = vmatprep.subr.mxu0 0.0
        %2768 = vmatpush1.msra.mxu0 0.0
        %2769 = vmatprep.subr.mxu0 0.0
        %2770 = vmatpush1.msra.mxu0 0.0
        %2771 = vmatprep.subr.mxu0 0.0
        %2772 = vmatpush1.msra.mxu0 0.0
        %2773 = vmatprep.subr.mxu0 0.0
        %2774 = vmatpush1.msra.mxu0 0.0
        %2775 = vmatprep.subr.mxu0 0.0
        %2776 = vmatpush1.msra.mxu0 0.0
        %2777 = vmatprep.subr.mxu0 0.0
        %2778 = vmatpush1.msra.mxu0 0.0
        %2779 = vmatprep.mubr.f32.mxu0 0.0
        %2780 = vmatmul.mubr.f32.gmra.mrb[0].mxu0 %v697
        %v2781 = vpop.f32.mrb[0].mxu0
        %v2782 = vadd.f32 0.0, %v2781
        %v2783 = vpop.f32.mrb[0].mxu0
        %2784 = vdwg.mxu0
        %v2786 = vcombine.high %v2782, %v2782
        %v2788 = vunpack.c.l.s4 1966171168
        %v2789 = vunpack.c.0.s8 %v2788
        %v2790 = vlaneseq
        %v2791 = vshrl.u32 %v2790, 7
        %v2792 = vsub.s32 %v2789, %v2791
        %v2793 = vrot.slane %v2782, %v2792
        %v2795 = vunpack.c.l.s4 1966171168
        %v2796 = vunpack.c.0.s8 %v2795
        %v2797 = vlaneseq
        %v2798 = vshrl.u32 %v2797, 7
        %v2799 = vsub.s32 %v2796, %v2798
        %v2800 = vrot.slane %v2786, %v2799
        %v2801 = vcombine.high %v2793, %v2793
        %v2802 = vcombine.high %v2800, %v2800
        %v2804 = vunpack.c.l.s4 1966171168
        %v2805 = vunpack.c.0.s8 %v2804
        %v2806 = vlaneseq
        %v2807 = vshrl.u32 %v2806, 7
        %v2808 = vsub.s32 %v2805, %v2807
        %v2809 = vrot.slane %v2793, %v2808
        %v2811 = vunpack.c.l.s4 1966171168
        %v2812 = vunpack.c.0.s8 %v2811
        %v2813 = vlaneseq
        %v2814 = vshrl.u32 %v2813, 7
        %v2815 = vsub.s32 %v2812, %v2814
        %v2816 = vrot.slane %v2800, %v2815
        %v2818 = vunpack.c.l.s4 1966171168
        %v2819 = vunpack.c.0.s8 %v2818
        %v2820 = vlaneseq
        %v2821 = vshrl.u32 %v2820, 7
        %v2822 = vsub.s32 %v2819, %v2821
        %v2823 = vrot.slane %v2801, %v2822
        %v2825 = vunpack.c.l.s4 1966171168
        %v2826 = vunpack.c.0.s8 %v2825
        %v2827 = vlaneseq
        %v2828 = vshrl.u32 %v2827, 7
        %v2829 = vsub.s32 %v2826, %v2828
        %v2830 = vrot.slane %v2802, %v2829
        %v2831 = vcombine.high %v2809, %v2809
        %v2832 = vcombine.high %v2816, %v2816
        %v2833 = vcombine.high %v2823, %v2823
        %v2834 = vcombine.high %v2830, %v2830
        %2843 = vst.msk [vmem:[%s334 + $0x5] sm:$0x1] %vm827, %v2809
        %2844 = vst.msk [vmem:[%s334 + $0xd] sm:$0x1] %vm827, %v2823
        %2845 = vst.msk [vmem:[%s334 + $0x15] sm:$0x1] %vm827, %v2831
        %2846 = vst.msk [vmem:[%s334 + $0x1d] sm:$0x1] %vm827, %v2833
        %2847 = vst.msk [vmem:[%s334 + $0x25] sm:$0x1] %vm827, %v2816
        %2848 = vst.msk [vmem:[%s334 + $0x2d] sm:$0x1] %vm827, %v2830
        %2849 = vst.msk [vmem:[%s334 + $0x35] sm:$0x1] %vm827, %v2832
        %2850 = vst.msk [vmem:[%s334 + $0x3d] sm:$0x1] %vm827, %v2834
        %v2851 = vld [vmem:[%s310 + $0x6] sm:$0x1]
        %v2852 = vld [vmem:[%s310 + $0xe] sm:$0x1]
        %v2853 = vld [vmem:[%s310 + $0x16] sm:$0x1]
        %v2854 = vld [vmem:[%s310 + $0x1e] sm:$0x1]
        %v2855 = vld [vmem:[%s310 + $0x26] sm:$0x1]
        %v2856 = vld [vmem:[%s310 + $0x2e] sm:$0x1]
        %v2857 = vld [vmem:[%s310 + $0x36] sm:$0x1]
        %v2858 = vld [vmem:[%s310 + $0x3e] sm:$0x1]
        %v2859 = vld [vmem:[%s310 + $0x46] sm:$0x1]
        %v2860 = vld [vmem:[%s310 + $0x4e] sm:$0x1]
        %v2861 = vld [vmem:[%s310 + $0x56] sm:$0x1]
        %v2862 = vld [vmem:[%s310 + $0x5e] sm:$0x1]
        %v2863 = vld [vmem:[%s310 + $0x66] sm:$0x1]
        %v2864 = vld [vmem:[%s310 + $0x6e] sm:$0x1]
        %v2865 = vld [vmem:[%s310 + $0x76] sm:$0x1]
        %v2866 = vld [vmem:[%s310 + $0x7e] sm:$0x1]
        %v2867 = vmul.f32 %v2851, %v363
        %v2868 = vmul.f32 %v2852, %v368
        %v2869 = vmul.f32 %v2853, %v369
        %v2870 = vmul.f32 %v2854, %v370
        %v2871 = vmul.f32 %v2855, %v371
        %v2872 = vmul.f32 %v2856, %v372
        %v2873 = vmul.f32 %v2857, %v373
        %v2874 = vmul.f32 %v2858, %v374
        %v2875 = vmul.f32 %v2859, %v367
        %v2876 = vmul.f32 %v2860, %v375
        %v2877 = vmul.f32 %v2861, %v376
        %v2878 = vmul.f32 %v2862, %v377
        %v2879 = vmul.f32 %v2863, %v378
        %v2880 = vmul.f32 %v2864, %v379
        %v2881 = vmul.f32 %v2865, %v380
        %v2882 = vmul.f32 %v2866, %v381
        %v2883 = vadd.f32 %v2867, %v417
        %v2884 = vadd.f32 %v2868, %v422
        %v2885 = vadd.f32 %v2869, %v423
        %v2886 = vadd.f32 %v2870, %v424
        %v2887 = vadd.f32 %v2871, %v425
        %v2888 = vadd.f32 %v2872, %v426
        %v2889 = vadd.f32 %v2873, %v427
        %v2890 = vadd.f32 %v2874, %v428
        %v2891 = vadd.f32 %v2875, %v421
        %v2892 = vadd.f32 %v2876, %v429
        %v2893 = vadd.f32 %v2877, %v430
        %v2894 = vadd.f32 %v2878, %v431
        %v2895 = vadd.f32 %v2879, %v432
        %v2896 = vadd.f32 %v2880, %v433
        %v2897 = vadd.f32 %v2881, %v434
        %v2898 = vadd.f32 %v2882, %v435
        %v2899 = vmax.f32 %v2883, 0.0
        %v2900 = vmax.f32 %v2884, 0.0
        %v2901 = vmax.f32 %v2885, 0.0
        %v2902 = vmax.f32 %v2886, 0.0
        %v2903 = vmax.f32 %v2887, 0.0
        %v2904 = vmax.f32 %v2888, 0.0
        %v2905 = vmax.f32 %v2889, 0.0
        %v2906 = vmax.f32 %v2890, 0.0
        %v2907 = vmax.f32 %v2891, 0.0
        %v2908 = vmax.f32 %v2892, 0.0
        %v2909 = vmax.f32 %v2893, 0.0
        %v2910 = vmax.f32 %v2894, 0.0
        %v2911 = vmax.f32 %v2895, 0.0
        %v2912 = vmax.f32 %v2896, 0.0
        %v2913 = vmax.f32 %v2897, 0.0
        %v2914 = vmax.f32 %v2898, 0.0
        %2931 = vrot.lane.b32.xlu0 %v2899, 96
        %v2932 = vpop.permute.xlu0 %2931
        %2933 = vrot.lane.b32.xlu0 %v2900, 96
        %v2934 = vpop.permute.xlu0 %2933
        %2935 = vrot.lane.b32.xlu0 %v2901, 96
        %v2936 = vpop.permute.xlu0 %2935
        %2937 = vrot.lane.b32.xlu0 %v2902, 96
        %v2938 = vpop.permute.xlu0 %2937
        %2939 = vrot.lane.b32.xlu0 %v2903, 96
        %v2940 = vpop.permute.xlu0 %2939
        %2941 = vrot.lane.b32.xlu0 %v2904, 96
        %v2942 = vpop.permute.xlu0 %2941
        %2943 = vrot.lane.b32.xlu0 %v2905, 96
        %v2944 = vpop.permute.xlu0 %2943
        %2945 = vrot.lane.b32.xlu0 %v2906, 96
        %v2946 = vpop.permute.xlu0 %2945
        %2947 = vrot.lane.b32.xlu0 %v2907, 96
        %v2948 = vpop.permute.xlu0 %2947
        %2949 = vrot.lane.b32.xlu0 %v2908, 96
        %v2950 = vpop.permute.xlu0 %2949
        %2951 = vrot.lane.b32.xlu0 %v2909, 96
        %v2952 = vpop.permute.xlu0 %2951
        %2953 = vrot.lane.b32.xlu0 %v2910, 96
        %v2954 = vpop.permute.xlu0 %2953
        %2955 = vrot.lane.b32.xlu0 %v2911, 96
        %v2956 = vpop.permute.xlu0 %2955
        %2957 = vrot.lane.b32.xlu0 %v2912, 96
        %v2958 = vpop.permute.xlu0 %2957
        %2959 = vrot.lane.b32.xlu0 %v2913, 96
        %v2960 = vpop.permute.xlu0 %2959
        %2961 = vrot.lane.b32.xlu0 %v2914, 96
        %v2962 = vpop.permute.xlu0 %2961
        %v2979 = vadd.f32 %v2899, %v2932
        %v2980 = vadd.f32 %v2900, %v2934
        %v2981 = vadd.f32 %v2901, %v2936
        %v2982 = vadd.f32 %v2902, %v2938
        %v2983 = vadd.f32 %v2903, %v2940
        %v2984 = vadd.f32 %v2904, %v2942
        %v2985 = vadd.f32 %v2905, %v2944
        %v2986 = vadd.f32 %v2906, %v2946
        %v2987 = vadd.f32 %v2907, %v2948
        %v2988 = vadd.f32 %v2908, %v2950
        %v2989 = vadd.f32 %v2909, %v2952
        %v2990 = vadd.f32 %v2910, %v2954
        %v2991 = vadd.f32 %v2911, %v2956
        %v2992 = vadd.f32 %v2912, %v2958
        %v2993 = vadd.f32 %v2913, %v2960
        %v2994 = vadd.f32 %v2914, %v2962
        %v3011 = vrot.slane %v2980, 7
        %v3012 = vsel %vm581, %v3011, %v2979
        %v3013 = vrot.slane %v2981, 6
        %v3014 = vsel %vm584, %v3013, %v3012
        %v3015 = vrot.slane %v2982, 5
        %v3016 = vsel %vm587, %v3015, %v3014
        %v3017 = vrot.slane %v2983, 4
        %v3018 = vsel %vm590, %v3017, %v3016
        %v3019 = vrot.slane %v2984, 3
        %v3020 = vsel %vm593, %v3019, %v3018
        %v3021 = vrot.slane %v2985, 2
        %v3022 = vsel %vm596, %v3021, %v3020
        %v3023 = vrot.slane %v2986, 1
        %v3024 = vsel %vm599, %v3023, %v3022
        %v3025 = vrot.slane %v2988, 7
        %v3026 = vsel %vm581, %v3025, %v2987
        %v3027 = vrot.slane %v2989, 6
        %v3028 = vsel %vm584, %v3027, %v3026
        %v3029 = vrot.slane %v2990, 5
        %v3030 = vsel %vm587, %v3029, %v3028
        %v3031 = vrot.slane %v2991, 4
        %v3032 = vsel %vm590, %v3031, %v3030
        %v3033 = vrot.slane %v2992, 3
        %v3034 = vsel %vm593, %v3033, %v3032
        %v3035 = vrot.slane %v2993, 2
        %v3036 = vsel %vm596, %v3035, %v3034
        %v3037 = vrot.slane %v2994, 1
        %v3038 = vsel %vm599, %v3037, %v3036
        %v3039 = vsel %vm615, %v3024, 0
        %v3041 = vsel %vm615, %v3038, 0
        %3043 = vmatprep.subr.mxu0 0.0
        %3044 = vmatpush1.msra.mxu0 %v340
        %3045 = vmatprep.subr.mxu0 0.0
        %3046 = vmatpush1.msra.mxu0 %v341
        %3047 = vmatprep.subr.mxu0 0.0
        %3048 = vmatpush1.msra.mxu0 %v342
        %3049 = vmatprep.subr.mxu0 0.0
        %3050 = vmatpush1.msra.mxu0 %v343
        %3051 = vmatprep.subr.mxu0 0.0
        %3052 = vmatpush1.msra.mxu0 0.0
        %3053 = vmatprep.subr.mxu0 0.0
        %3054 = vmatpush1.msra.mxu0 0.0
        %3055 = vmatprep.subr.mxu0 0.0
        %3056 = vmatpush1.msra.mxu0 0.0
        %3057 = vmatprep.subr.mxu0 0.0
        %3058 = vmatpush1.msra.mxu0 0.0
        %3059 = vmatprep.subr.mxu0 0.0
        %3060 = vmatpush1.msra.mxu0 0.0
        %3061 = vmatprep.subr.mxu0 0.0
        %3062 = vmatpush1.msra.mxu0 0.0
        %3063 = vmatprep.subr.mxu0 0.0
        %3064 = vmatpush1.msra.mxu0 0.0
        %3065 = vmatprep.subr.mxu0 0.0
        %3066 = vmatpush1.msra.mxu0 0.0
        %3067 = vmatprep.subr.mxu0 0.0
        %3068 = vmatpush1.msra.mxu0 0.0
        %3069 = vmatprep.subr.mxu0 0.0
        %3070 = vmatpush1.msra.mxu0 0.0
        %3071 = vmatprep.subr.mxu0 0.0
        %3072 = vmatpush1.msra.mxu0 0.0
        %3073 = vmatprep.subr.mxu0 0.0
        %3074 = vmatpush1.msra.mxu0 0.0
        %3075 = vmatprep.subr.mxu0 0.0
        %3076 = vmatpush1.msra.mxu0 0.0
        %3077 = vmatprep.subr.mxu0 0.0
        %3078 = vmatpush1.msra.mxu0 0.0
        %3079 = vmatprep.subr.mxu0 0.0
        %3080 = vmatpush1.msra.mxu0 0.0
        %3081 = vmatprep.subr.mxu0 0.0
        %3082 = vmatpush1.msra.mxu0 0.0
        %3083 = vmatprep.subr.mxu0 0.0
        %3084 = vmatpush1.msra.mxu0 0.0
        %3085 = vmatprep.subr.mxu0 0.0
        %3086 = vmatpush1.msra.mxu0 0.0
        %3087 = vmatprep.subr.mxu0 0.0
        %3088 = vmatpush1.msra.mxu0 0.0
        %3089 = vmatprep.subr.mxu0 0.0
        %3090 = vmatpush1.msra.mxu0 0.0
        %3091 = vmatprep.subr.mxu0 0.0
        %3092 = vmatpush1.msra.mxu0 0.0
        %3093 = vmatprep.subr.mxu0 0.0
        %3094 = vmatpush1.msra.mxu0 0.0
        %3095 = vmatprep.subr.mxu0 0.0
        %3096 = vmatpush1.msra.mxu0 0.0
        %3097 = vmatprep.subr.mxu0 0.0
        %3098 = vmatpush1.msra.mxu0 0.0
        %3099 = vmatprep.subr.mxu0 0.0
        %3100 = vmatpush1.msra.mxu0 0.0
        %3101 = vmatprep.subr.mxu0 0.0
        %3102 = vmatpush1.msra.mxu0 0.0
        %3103 = vmatprep.subr.mxu0 0.0
        %3104 = vmatpush1.msra.mxu0 0.0
        %3105 = vmatprep.subr.mxu0 0.0
        %3106 = vmatpush1.msra.mxu0 0.0
        %3107 = vmatprep.mubr.f32.mxu0 0.0
        %3108 = vmatmul.mubr.f32.gmra.mrb[0].mxu0 %v3039
        %v3109 = vpop.f32.mrb[0].mxu0
        %v3110 = vadd.f32 0.0, %v3109
        %v3111 = vpop.f32.mrb[0].mxu0
        %3112 = vmatprep.mubr.f32.mxu0 0.0
        %3113 = vmatmul.mubr.f32.gmra.mrb[0].mxu0 %v3041
        %v3114 = vpop.f32.mrb[0].mxu0
        %v3115 = vadd.f32 0.0, %v3114
        %v3116 = vpop.f32.mrb[0].mxu0
        %3117 = vdwg.mxu0
        %3118 = vmatprep.subr.mxu0 0.0
        %3119 = vmatpush1.msra.mxu0 %v3110
        %3120 = vmatprep.subr.mxu0 0.0
        %3121 = vmatpush1.msra.mxu0 %v3115
        %3122 = vmatprep.subr.mxu0 0.0
        %3123 = vmatpush1.msra.mxu0 0.0
        %3124 = vmatprep.subr.mxu0 0.0
        %3125 = vmatpush1.msra.mxu0 0.0
        %3126 = vmatprep.subr.mxu0 0.0
        %3127 = vmatpush1.msra.mxu0 0.0
        %3128 = vmatprep.subr.mxu0 0.0
        %3129 = vmatpush1.msra.mxu0 0.0
        %3130 = vmatprep.subr.mxu0 0.0
        %3131 = vmatpush1.msra.mxu0 0.0
        %3132 = vmatprep.subr.mxu0 0.0
        %3133 = vmatpush1.msra.mxu0 0.0
        %3134 = vmatprep.subr.mxu0 0.0
        %3135 = vmatpush1.msra.mxu0 0.0
        %3136 = vmatprep.subr.mxu0 0.0
        %3137 = vmatpush1.msra.mxu0 0.0
        %3138 = vmatprep.subr.mxu0 0.0
        %3139 = vmatpush1.msra.mxu0 0.0
        %3140 = vmatprep.subr.mxu0 0.0
        %3141 = vmatpush1.msra.mxu0 0.0
        %3142 = vmatprep.subr.mxu0 0.0
        %3143 = vmatpush1.msra.mxu0 0.0
        %3144 = vmatprep.subr.mxu0 0.0
        %3145 = vmatpush1.msra.mxu0 0.0
        %3146 = vmatprep.subr.mxu0 0.0
        %3147 = vmatpush1.msra.mxu0 0.0
        %3148 = vmatprep.subr.mxu0 0.0
        %3149 = vmatpush1.msra.mxu0 0.0
        %3150 = vmatprep.subr.mxu0 0.0
        %3151 = vmatpush1.msra.mxu0 0.0
        %3152 = vmatprep.subr.mxu0 0.0
        %3153 = vmatpush1.msra.mxu0 0.0
        %3154 = vmatprep.subr.mxu0 0.0
        %3155 = vmatpush1.msra.mxu0 0.0
        %3156 = vmatprep.subr.mxu0 0.0
        %3157 = vmatpush1.msra.mxu0 0.0
        %3158 = vmatprep.subr.mxu0 0.0
        %3159 = vmatpush1.msra.mxu0 0.0
        %3160 = vmatprep.subr.mxu0 0.0
        %3161 = vmatpush1.msra.mxu0 0.0
        %3162 = vmatprep.subr.mxu0 0.0
        %3163 = vmatpush1.msra.mxu0 0.0
        %3164 = vmatprep.subr.mxu0 0.0
        %3165 = vmatpush1.msra.mxu0 0.0
        %3166 = vmatprep.subr.mxu0 0.0
        %3167 = vmatpush1.msra.mxu0 0.0
        %3168 = vmatprep.subr.mxu0 0.0
        %3169 = vmatpush1.msra.mxu0 0.0
        %3170 = vmatprep.subr.mxu0 0.0
        %3171 = vmatpush1.msra.mxu0 0.0
        %3172 = vmatprep.subr.mxu0 0.0
        %3173 = vmatpush1.msra.mxu0 0.0
        %3174 = vmatprep.subr.mxu0 0.0
        %3175 = vmatpush1.msra.mxu0 0.0
        %3176 = vmatprep.subr.mxu0 0.0
        %3177 = vmatpush1.msra.mxu0 0.0
        %3178 = vmatprep.subr.mxu0 0.0
        %3179 = vmatpush1.msra.mxu0 0.0
        %3180 = vmatprep.subr.mxu0 0.0
        %3181 = vmatpush1.msra.mxu0 0.0
        %3182 = vmatprep.mubr.f32.mxu0 0.0
        %3183 = vmatmul.mubr.f32.gmra.mrb[0].mxu0 %v697
        %v3184 = vpop.f32.mrb[0].mxu0
        %v3185 = vadd.f32 0.0, %v3184
        %v3186 = vpop.f32.mrb[0].mxu0
        %3187 = vdwg.mxu0
        %v3189 = vcombine.high %v3185, %v3185
        %v3191 = vunpack.c.l.s4 1966171168
        %v3192 = vunpack.c.0.s8 %v3191
        %v3193 = vlaneseq
        %v3194 = vshrl.u32 %v3193, 7
        %v3195 = vsub.s32 %v3192, %v3194
        %v3196 = vrot.slane %v3185, %v3195
        %v3198 = vunpack.c.l.s4 1966171168
        %v3199 = vunpack.c.0.s8 %v3198
        %v3200 = vlaneseq
        %v3201 = vshrl.u32 %v3200, 7
        %v3202 = vsub.s32 %v3199, %v3201
        %v3203 = vrot.slane %v3189, %v3202
        %v3204 = vcombine.high %v3196, %v3196
        %v3205 = vcombine.high %v3203, %v3203
        %v3207 = vunpack.c.l.s4 1966171168
        %v3208 = vunpack.c.0.s8 %v3207
        %v3209 = vlaneseq
        %v3210 = vshrl.u32 %v3209, 7
        %v3211 = vsub.s32 %v3208, %v3210
        %v3212 = vrot.slane %v3196, %v3211
        %v3214 = vunpack.c.l.s4 1966171168
        %v3215 = vunpack.c.0.s8 %v3214
        %v3216 = vlaneseq
        %v3217 = vshrl.u32 %v3216, 7
        %v3218 = vsub.s32 %v3215, %v3217
        %v3219 = vrot.slane %v3203, %v3218
        %v3221 = vunpack.c.l.s4 1966171168
        %v3222 = vunpack.c.0.s8 %v3221
        %v3223 = vlaneseq
        %v3224 = vshrl.u32 %v3223, 7
        %v3225 = vsub.s32 %v3222, %v3224
        %v3226 = vrot.slane %v3204, %v3225
        %v3228 = vunpack.c.l.s4 1966171168
        %v3229 = vunpack.c.0.s8 %v3228
        %v3230 = vlaneseq
        %v3231 = vshrl.u32 %v3230, 7
        %v3232 = vsub.s32 %v3229, %v3231
        %v3233 = vrot.slane %v3205, %v3232
        %v3234 = vcombine.high %v3212, %v3212
        %v3235 = vcombine.high %v3219, %v3219
        %v3236 = vcombine.high %v3226, %v3226
        %v3237 = vcombine.high %v3233, %v3233
        %3246 = vst.msk [vmem:[%s334 + $0x6] sm:$0x1] %vm827, %v3212
        %3247 = vst.msk [vmem:[%s334 + $0xe] sm:$0x1] %vm827, %v3226
        %3248 = vst.msk [vmem:[%s334 + $0x16] sm:$0x1] %vm827, %v3234
        %3249 = vst.msk [vmem:[%s334 + $0x1e] sm:$0x1] %vm827, %v3236
        %3250 = vst.msk [vmem:[%s334 + $0x26] sm:$0x1] %vm827, %v3219
        %3251 = vst.msk [vmem:[%s334 + $0x2e] sm:$0x1] %vm827, %v3233
        %3252 = vst.msk [vmem:[%s334 + $0x36] sm:$0x1] %vm827, %v3235
        %3253 = vst.msk [vmem:[%s334 + $0x3e] sm:$0x1] %vm827, %v3237
        %v3254 = vld [vmem:[%s310 + $0x7] sm:$0x1]
        %v3255 = vld [vmem:[%s310 + $0xf] sm:$0x1]
        %v3256 = vld [vmem:[%s310 + $0x17] sm:$0x1]
        %v3257 = vld [vmem:[%s310 + $0x1f] sm:$0x1]
        %v3258 = vld [vmem:[%s310 + $0x27] sm:$0x1]
        %v3259 = vld [vmem:[%s310 + $0x2f] sm:$0x1]
        %v3260 = vld [vmem:[%s310 + $0x37] sm:$0x1]
        %v3261 = vld [vmem:[%s310 + $0x3f] sm:$0x1]
        %v3262 = vld [vmem:[%s310 + $0x47] sm:$0x1]
        %v3263 = vld [vmem:[%s310 + $0x4f] sm:$0x1]
        %v3264 = vld [vmem:[%s310 + $0x57] sm:$0x1]
        %v3265 = vld [vmem:[%s310 + $0x5f] sm:$0x1]
        %v3266 = vld [vmem:[%s310 + $0x67] sm:$0x1]
        %v3267 = vld [vmem:[%s310 + $0x6f] sm:$0x1]
        %v3268 = vld [vmem:[%s310 + $0x77] sm:$0x1]
        %v3269 = vld [vmem:[%s310 + $0x7f] sm:$0x1]
        %v3270 = vmul.f32 %v3254, %v363
        %v3271 = vmul.f32 %v3255, %v368
        %v3272 = vmul.f32 %v3256, %v369
        %v3273 = vmul.f32 %v3257, %v370
        %v3274 = vmul.f32 %v3258, %v371
        %v3275 = vmul.f32 %v3259, %v372
        %v3276 = vmul.f32 %v3260, %v373
        %v3277 = vmul.f32 %v3261, %v374
        %v3278 = vmul.f32 %v3262, %v367
        %v3279 = vmul.f32 %v3263, %v375
        %v3280 = vmul.f32 %v3264, %v376
        %v3281 = vmul.f32 %v3265, %v377
        %v3282 = vmul.f32 %v3266, %v378
        %v3283 = vmul.f32 %v3267, %v379
        %v3284 = vmul.f32 %v3268, %v380
        %v3285 = vmul.f32 %v3269, %v381
        %v3286 = vadd.f32 %v3270, %v417
        %v3287 = vadd.f32 %v3271, %v422
        %v3288 = vadd.f32 %v3272, %v423
        %v3289 = vadd.f32 %v3273, %v424
        %v3290 = vadd.f32 %v3274, %v425
        %v3291 = vadd.f32 %v3275, %v426
        %v3292 = vadd.f32 %v3276, %v427
        %v3293 = vadd.f32 %v3277, %v428
        %v3294 = vadd.f32 %v3278, %v421
        %v3295 = vadd.f32 %v3279, %v429
        %v3296 = vadd.f32 %v3280, %v430
        %v3297 = vadd.f32 %v3281, %v431
        %v3298 = vadd.f32 %v3282, %v432
        %v3299 = vadd.f32 %v3283, %v433
        %v3300 = vadd.f32 %v3284, %v434
        %v3301 = vadd.f32 %v3285, %v435
        %v3302 = vmax.f32 %v3286, 0.0
        %v3303 = vmax.f32 %v3287, 0.0
        %v3304 = vmax.f32 %v3288, 0.0
        %v3305 = vmax.f32 %v3289, 0.0
        %v3306 = vmax.f32 %v3290, 0.0
        %v3307 = vmax.f32 %v3291, 0.0
        %v3308 = vmax.f32 %v3292, 0.0
        %v3309 = vmax.f32 %v3293, 0.0
        %v3310 = vmax.f32 %v3294, 0.0
        %v3311 = vmax.f32 %v3295, 0.0
        %v3312 = vmax.f32 %v3296, 0.0
        %v3313 = vmax.f32 %v3297, 0.0
        %v3314 = vmax.f32 %v3298, 0.0
        %v3315 = vmax.f32 %v3299, 0.0
        %v3316 = vmax.f32 %v3300, 0.0
        %v3317 = vmax.f32 %v3301, 0.0
        %3334 = vrot.lane.b32.xlu0 %v3302, 96
        %v3335 = vpop.permute.xlu0 %3334
        %3336 = vrot.lane.b32.xlu0 %v3303, 96
        %v3337 = vpop.permute.xlu0 %3336
        %3338 = vrot.lane.b32.xlu0 %v3304, 96
        %v3339 = vpop.permute.xlu0 %3338
        %3340 = vrot.lane.b32.xlu0 %v3305, 96
        %v3341 = vpop.permute.xlu0 %3340
        %3342 = vrot.lane.b32.xlu0 %v3306, 96
        %v3343 = vpop.permute.xlu0 %3342
        %3344 = vrot.lane.b32.xlu0 %v3307, 96
        %v3345 = vpop.permute.xlu0 %3344
        %3346 = vrot.lane.b32.xlu0 %v3308, 96
        %v3347 = vpop.permute.xlu0 %3346
        %3348 = vrot.lane.b32.xlu0 %v3309, 96
        %v3349 = vpop.permute.xlu0 %3348
        %3350 = vrot.lane.b32.xlu0 %v3310, 96
        %v3351 = vpop.permute.xlu0 %3350
        %3352 = vrot.lane.b32.xlu0 %v3311, 96
        %v3353 = vpop.permute.xlu0 %3352
        %3354 = vrot.lane.b32.xlu0 %v3312, 96
        %v3355 = vpop.permute.xlu0 %3354
        %3356 = vrot.lane.b32.xlu0 %v3313, 96
        %v3357 = vpop.permute.xlu0 %3356
        %3358 = vrot.lane.b32.xlu0 %v3314, 96
        %v3359 = vpop.permute.xlu0 %3358
        %3360 = vrot.lane.b32.xlu0 %v3315, 96
        %v3361 = vpop.permute.xlu0 %3360
        %3362 = vrot.lane.b32.xlu0 %v3316, 96
        %v3363 = vpop.permute.xlu0 %3362
        %3364 = vrot.lane.b32.xlu0 %v3317, 96
        %v3365 = vpop.permute.xlu0 %3364
        %v3382 = vadd.f32 %v3302, %v3335
        %v3383 = vadd.f32 %v3303, %v3337
        %v3384 = vadd.f32 %v3304, %v3339
        %v3385 = vadd.f32 %v3305, %v3341
        %v3386 = vadd.f32 %v3306, %v3343
        %v3387 = vadd.f32 %v3307, %v3345
        %v3388 = vadd.f32 %v3308, %v3347
        %v3389 = vadd.f32 %v3309, %v3349
        %v3390 = vadd.f32 %v3310, %v3351
        %v3391 = vadd.f32 %v3311, %v3353
        %v3392 = vadd.f32 %v3312, %v3355
        %v3393 = vadd.f32 %v3313, %v3357
        %v3394 = vadd.f32 %v3314, %v3359
        %v3395 = vadd.f32 %v3315, %v3361
        %v3396 = vadd.f32 %v3316, %v3363
        %v3397 = vadd.f32 %v3317, %v3365
        %v3414 = vrot.slane %v3383, 7
        %v3415 = vsel %vm581, %v3414, %v3382
        %v3416 = vrot.slane %v3384, 6
        %v3417 = vsel %vm584, %v3416, %v3415
        %v3418 = vrot.slane %v3385, 5
        %v3419 = vsel %vm587, %v3418, %v3417
        %v3420 = vrot.slane %v3386, 4
        %v3421 = vsel %vm590, %v3420, %v3419
        %v3422 = vrot.slane %v3387, 3
        %v3423 = vsel %vm593, %v3422, %v3421
        %v3424 = vrot.slane %v3388, 2
        %v3425 = vsel %vm596, %v3424, %v3423
        %v3426 = vrot.slane %v3389, 1
        %v3427 = vsel %vm599, %v3426, %v3425
        %v3428 = vrot.slane %v3391, 7
        %v3429 = vsel %vm581, %v3428, %v3390
        %v3430 = vrot.slane %v3392, 6
        %v3431 = vsel %vm584, %v3430, %v3429
        %v3432 = vrot.slane %v3393, 5
        %v3433 = vsel %vm587, %v3432, %v3431
        %v3434 = vrot.slane %v3394, 4
        %v3435 = vsel %vm590, %v3434, %v3433
        %v3436 = vrot.slane %v3395, 3
        %v3437 = vsel %vm593, %v3436, %v3435
        %v3438 = vrot.slane %v3396, 2
        %v3439 = vsel %vm596, %v3438, %v3437
        %v3440 = vrot.slane %v3397, 1
        %v3441 = vsel %vm599, %v3440, %v3439
        %v3442 = vsel %vm615, %v3427, 0
        %v3444 = vsel %vm615, %v3441, 0
        %3446 = vmatprep.subr.mxu0 0.0
        %3447 = vmatpush1.msra.mxu0 %v340
        %3448 = vmatprep.subr.mxu0 0.0
        %3449 = vmatpush1.msra.mxu0 %v341
        %3450 = vmatprep.subr.mxu0 0.0
        %3451 = vmatpush1.msra.mxu0 %v342
        %3452 = vmatprep.subr.mxu0 0.0
        %3453 = vmatpush1.msra.mxu0 %v343
        %3454 = vmatprep.subr.mxu0 0.0
        %3455 = vmatpush1.msra.mxu0 0.0
        %3456 = vmatprep.subr.mxu0 0.0
        %3457 = vmatpush1.msra.mxu0 0.0
        %3458 = vmatprep.subr.mxu0 0.0
        %3459 = vmatpush1.msra.mxu0 0.0
        %3460 = vmatprep.subr.mxu0 0.0
        %3461 = vmatpush1.msra.mxu0 0.0
        %3462 = vmatprep.subr.mxu0 0.0
        %3463 = vmatpush1.msra.mxu0 0.0
        %3464 = vmatprep.subr.mxu0 0.0
        %3465 = vmatpush1.msra.mxu0 0.0
        %3466 = vmatprep.subr.mxu0 0.0
        %3467 = vmatpush1.msra.mxu0 0.0
        %3468 = vmatprep.subr.mxu0 0.0
        %3469 = vmatpush1.msra.mxu0 0.0
        %3470 = vmatprep.subr.mxu0 0.0
        %3471 = vmatpush1.msra.mxu0 0.0
        %3472 = vmatprep.subr.mxu0 0.0
        %3473 = vmatpush1.msra.mxu0 0.0
        %3474 = vmatprep.subr.mxu0 0.0
        %3475 = vmatpush1.msra.mxu0 0.0
        %3476 = vmatprep.subr.mxu0 0.0
        %3477 = vmatpush1.msra.mxu0 0.0
        %3478 = vmatprep.subr.mxu0 0.0
        %3479 = vmatpush1.msra.mxu0 0.0
        %3480 = vmatprep.subr.mxu0 0.0
        %3481 = vmatpush1.msra.mxu0 0.0
        %3482 = vmatprep.subr.mxu0 0.0
        %3483 = vmatpush1.msra.mxu0 0.0
        %3484 = vmatprep.subr.mxu0 0.0
        %3485 = vmatpush1.msra.mxu0 0.0
        %3486 = vmatprep.subr.mxu0 0.0
        %3487 = vmatpush1.msra.mxu0 0.0
        %3488 = vmatprep.subr.mxu0 0.0
        %3489 = vmatpush1.msra.mxu0 0.0
        %3490 = vmatprep.subr.mxu0 0.0
        %3491 = vmatpush1.msra.mxu0 0.0
        %3492 = vmatprep.subr.mxu0 0.0
        %3493 = vmatpush1.msra.mxu0 0.0
        %3494 = vmatprep.subr.mxu0 0.0
        %3495 = vmatpush1.msra.mxu0 0.0
        %3496 = vmatprep.subr.mxu0 0.0
        %3497 = vmatpush1.msra.mxu0 0.0
        %3498 = vmatprep.subr.mxu0 0.0
        %3499 = vmatpush1.msra.mxu0 0.0
        %3500 = vmatprep.subr.mxu0 0.0
        %3501 = vmatpush1.msra.mxu0 0.0
        %3502 = vmatprep.subr.mxu0 0.0
        %3503 = vmatpush1.msra.mxu0 0.0
        %3504 = vmatprep.subr.mxu0 0.0
        %3505 = vmatpush1.msra.mxu0 0.0
        %3506 = vmatprep.subr.mxu0 0.0
        %3507 = vmatpush1.msra.mxu0 0.0
        %3508 = vmatprep.subr.mxu0 0.0
        %3509 = vmatpush1.msra.mxu0 0.0
        %3510 = vmatprep.mubr.f32.mxu0 0.0
        %3511 = vmatmul.mubr.f32.gmra.mrb[0].mxu0 %v3442
        %v3512 = vpop.f32.mrb[0].mxu0
        %v3513 = vadd.f32 0.0, %v3512
        %v3514 = vpop.f32.mrb[0].mxu0
        %3515 = vmatprep.mubr.f32.mxu0 0.0
        %3516 = vmatmul.mubr.f32.gmra.mrb[0].mxu0 %v3444
        %v3517 = vpop.f32.mrb[0].mxu0
        %v3518 = vadd.f32 0.0, %v3517
        %v3519 = vpop.f32.mrb[0].mxu0
        %3520 = vdwg.mxu0
        %3521 = vmatprep.subr.mxu0 0.0
        %3522 = vmatpush1.msra.mxu0 %v3513
        %3523 = vmatprep.subr.mxu0 0.0
        %3524 = vmatpush1.msra.mxu0 %v3518
        %3525 = vmatprep.subr.mxu0 0.0
        %3526 = vmatpush1.msra.mxu0 0.0
        %3527 = vmatprep.subr.mxu0 0.0
        %3528 = vmatpush1.msra.mxu0 0.0
        %3529 = vmatprep.subr.mxu0 0.0
        %3530 = vmatpush1.msra.mxu0 0.0
        %3531 = vmatprep.subr.mxu0 0.0
        %3532 = vmatpush1.msra.mxu0 0.0
        %3533 = vmatprep.subr.mxu0 0.0
        %3534 = vmatpush1.msra.mxu0 0.0
        %3535 = vmatprep.subr.mxu0 0.0
        %3536 = vmatpush1.msra.mxu0 0.0
        %3537 = vmatprep.subr.mxu0 0.0
        %3538 = vmatpush1.msra.mxu0 0.0
        %3539 = vmatprep.subr.mxu0 0.0
        %3540 = vmatpush1.msra.mxu0 0.0
        %3541 = vmatprep.subr.mxu0 0.0
        %3542 = vmatpush1.msra.mxu0 0.0
        %3543 = vmatprep.subr.mxu0 0.0
        %3544 = vmatpush1.msra.mxu0 0.0
        %3545 = vmatprep.subr.mxu0 0.0
        %3546 = vmatpush1.msra.mxu0 0.0
        %3547 = vmatprep.subr.mxu0 0.0
        %3548 = vmatpush1.msra.mxu0 0.0
        %3549 = vmatprep.subr.mxu0 0.0
        %3550 = vmatpush1.msra.mxu0 0.0
        %3551 = vmatprep.subr.mxu0 0.0
        %3552 = vmatpush1.msra.mxu0 0.0
        %3553 = vmatprep.subr.mxu0 0.0
        %3554 = vmatpush1.msra.mxu0 0.0
        %3555 = vmatprep.subr.mxu0 0.0
        %3556 = vmatpush1.msra.mxu0 0.0
        %3557 = vmatprep.subr.mxu0 0.0
        %3558 = vmatpush1.msra.mxu0 0.0
        %3559 = vmatprep.subr.mxu0 0.0
        %3560 = vmatpush1.msra.mxu0 0.0
        %3561 = vmatprep.subr.mxu0 0.0
        %3562 = vmatpush1.msra.mxu0 0.0
        %3563 = vmatprep.subr.mxu0 0.0
        %3564 = vmatpush1.msra.mxu0 0.0
        %3565 = vmatprep.subr.mxu0 0.0
        %3566 = vmatpush1.msra.mxu0 0.0
        %3567 = vmatprep.subr.mxu0 0.0
        %3568 = vmatpush1.msra.mxu0 0.0
        %3569 = vmatprep.subr.mxu0 0.0
        %3570 = vmatpush1.msra.mxu0 0.0
        %3571 = vmatprep.subr.mxu0 0.0
        %3572 = vmatpush1.msra.mxu0 0.0
        %3573 = vmatprep.subr.mxu0 0.0
        %3574 = vmatpush1.msra.mxu0 0.0
        %3575 = vmatprep.subr.mxu0 0.0
        %3576 = vmatpush1.msra.mxu0 0.0
        %3577 = vmatprep.subr.mxu0 0.0
        %3578 = vmatpush1.msra.mxu0 0.0
        %3579 = vmatprep.subr.mxu0 0.0
        %3580 = vmatpush1.msra.mxu0 0.0
        %3581 = vmatprep.subr.mxu0 0.0
        %3582 = vmatpush1.msra.mxu0 0.0
        %3583 = vmatprep.subr.mxu0 0.0
        %3584 = vmatpush1.msra.mxu0 0.0
        %3585 = vmatprep.mubr.f32.mxu0 0.0
        %3586 = vmatmul.mubr.f32.gmra.mrb[0].mxu0 %v697
        %v3587 = vpop.f32.mrb[0].mxu0
        %v3588 = vadd.f32 0.0, %v3587
        %v3589 = vpop.f32.mrb[0].mxu0
        %3590 = vdwg.mxu0
        %v3592 = vcombine.high %v3588, %v3588
        %v3594 = vunpack.c.l.s4 1966171168
        %v3595 = vunpack.c.0.s8 %v3594
        %v3596 = vlaneseq
        %v3597 = vshrl.u32 %v3596, 7
        %v3598 = vsub.s32 %v3595, %v3597
        %v3599 = vrot.slane %v3588, %v3598
        %v3601 = vunpack.c.l.s4 1966171168
        %v3602 = vunpack.c.0.s8 %v3601
        %v3603 = vlaneseq
        %v3604 = vshrl.u32 %v3603, 7
        %v3605 = vsub.s32 %v3602, %v3604
        %v3606 = vrot.slane %v3592, %v3605
        %v3607 = vcombine.high %v3599, %v3599
        %v3608 = vcombine.high %v3606, %v3606
        %v3610 = vunpack.c.l.s4 1966171168
        %v3611 = vunpack.c.0.s8 %v3610
        %v3612 = vlaneseq
        %v3613 = vshrl.u32 %v3612, 7
        %v3614 = vsub.s32 %v3611, %v3613
        %v3615 = vrot.slane %v3599, %v3614
        %v3617 = vunpack.c.l.s4 1966171168
        %v3618 = vunpack.c.0.s8 %v3617
        %v3619 = vlaneseq
        %v3620 = vshrl.u32 %v3619, 7
        %v3621 = vsub.s32 %v3618, %v3620
        %v3622 = vrot.slane %v3606, %v3621
        %v3624 = vunpack.c.l.s4 1966171168
        %v3625 = vunpack.c.0.s8 %v3624
        %v3626 = vlaneseq
        %v3627 = vshrl.u32 %v3626, 7
        %v3628 = vsub.s32 %v3625, %v3627
        %v3629 = vrot.slane %v3607, %v3628
        %v3631 = vunpack.c.l.s4 1966171168
        %v3632 = vunpack.c.0.s8 %v3631
        %v3633 = vlaneseq
        %v3634 = vshrl.u32 %v3633, 7
        %v3635 = vsub.s32 %v3632, %v3634
        %v3636 = vrot.slane %v3608, %v3635
        %v3637 = vcombine.high %v3615, %v3615
        %v3638 = vcombine.high %v3622, %v3622
        %v3639 = vcombine.high %v3629, %v3629
        %v3640 = vcombine.high %v3636, %v3636
        %3649 = vst.msk [vmem:[%s334 + $0x7] sm:$0x1] %vm827, %v3615
        %3650 = vst.msk [vmem:[%s334 + $0xf] sm:$0x1] %vm827, %v3629
        %3651 = vst.msk [vmem:[%s334 + $0x17] sm:$0x1] %vm827, %v3637
        %3652 = vst.msk [vmem:[%s334 + $0x1f] sm:$0x1] %vm827, %v3639
        %3653 = vst.msk [vmem:[%s334 + $0x27] sm:$0x1] %vm827, %v3622
        %3654 = vst.msk [vmem:[%s334 + $0x2f] sm:$0x1] %vm827, %v3636
        %3655 = vst.msk [vmem:[%s334 + $0x37] sm:$0x1] %vm827, %v3638
        %3656 = vst.msk [vmem:[%s334 + $0x3f] sm:$0x1] %vm827, %v3640
        %s3657 = sand.u32 %s153, 1
        %s3658 = scalar_lea.sflag [#allocation4], %s3657
        %s3659 = sand.u32 %s153, 1
        %s3660 = smul.addr %s3659, 64
        %s3661 = scalar_lea.vmem [#allocation3], %s3660
        // Predicated region
        $region79: #{transition_forward.3} parent=73 // pred_check
          %p3662 = pneg %p163
        $region80: #{transition_forward.3} parent=73 // pred_check_branch
          %3664 = sbr.rel (%p3662) target = $region82
        $region81: #{transition_forward.3} parent=73 // pred_region
          %s3666 = ssub.s32 1024, 1024
          %3667 = vsyncadd %s3658, %s3666
          %s3668 = smul.addr %s23, 16
          %s3669 = sadd.s32 %s24, %s3668
          %s3670 = smul.addr %s3669, 128
          %s3671 = scalar_lea.hbm %s5, %s3670
          %s3672 = sshll.u32 %s3661, 4
          %s3673 = int_to_ptr.vmem [resolvable:$true] %s3672
          %3678 = dma.vmem_to_hbm [thread:$0]  %s3673, 1024, %s3671, %s3658, 128, 256, 8
        $region82: #{transition_forward.3} parent=73 // pred_fallthru
          _
      $region74: #{transition_forward.3} parent=5 // pred_fallthru
        _
      %p3679 = scmp.le.s32.totalorder 2, %s14
      // Predicated region
      $region83: #{transition_forward.3} parent=5 // pred_check
        %p3680 = pneg %p3679
      $region84: #{transition_forward.3} parent=5 // pred_check_branch
        %3682 = sbr.rel (%p3680) target = $region86
      $region85: #{transition_forward.3} parent=5 // pred_region
        %s3683 = ssub.s32 %s14, 2
        // Predicated region
        $region87: #{transition_forward.3} parent=85 // pred_check
          %p3684 = pneg %p169
        $region88: #{transition_forward.3} parent=85 // pred_check_branch
          %3686 = sbr.rel (%p3684) target = $region90
        $region89: #{transition_forward.3} parent=85 // pred_region
          %s3687 = sand.u32 %s154, 1
          %s3688 = scalar_lea.sflag [#allocation4], %s3687
          %s3689 = sand.u32 %s154, 1
          %s3690 = smul.addr %s3689, 64
          %s3691 = scalar_lea.vmem [#allocation3], %s3690
          %3692 = dma.done %s3688, 1024
        $region90: #{transition_forward.3} parent=85 // pred_fallthru
          _
      $region86: #{transition_forward.3} parent=5 // pred_fallthru
        _
    $region6: #{transition_forward.3} parent=1 // loop_footer
      %s18 = sadd.s32 1, %s14
    $region7: #{transition_forward.3} parent=1 // loop_footer_branch
      %13 = sbr.rel target = $region3
    $region8: #{transition_forward.3} parent=1 // loop_exit
      _
    %3693 = vsyncpa [#allocation4], 1
    %s3694 = scalar_lea.sflag [#allocation4], 1
    %3695 = vsyncpa %s3694, 1

</llo_original>
